<compile_context>
chip_gen: v7x
topology: tpu7x:2x2x1
jax: 0.10.0
libtpu: 0.0.40
codegen_flags: <defaults>
</compile_context>

<pallas_src>
import functools

import jax
import jax.numpy as jnp
import numpy as np
from jax.experimental import pallas as pl
from jax.experimental.pallas import tpu as pltpu

EPS_GEN = 1e-7   # GENConv eps added to messages
EPS_LN = 1e-5    # torch.nn.LayerNorm default eps


def _round_up(v, m):
    return (v + m - 1) // m * m


def _pad_to(a, shape):
    pads = [(0, t - s) for s, t in zip(a.shape, shape)]
    if all(p == (0, 0) for p in pads):
        return a
    return jnp.pad(a, pads)


def _deeper_gcn_kernel(h_real, h2_real, e_real,
                       x_ref, ea_ref, src_ref, dst_ref, pb_ref,
                       wn_ref, bn_ref, we_ref, be_ref,
                       t_ref, ln1g_ref, ln1b_ref, w1_ref, b1_ref,
                       ln2g_ref, ln2b_ref, w2_ref, b2_ref,
                       z_out_ref, g_out_ref,
                       z_scr, h_scr, den_scr, num_scr, c_scr):
    f32 = jnp.float32
    bf16 = jnp.bfloat16
    dot = functools.partial(jnp.dot, preferred_element_type=f32)

    l = pl.program_id(0)          # layer axis (arbitrary: z carried in scratch)
    ke = pl.program_id(1)         # edge-tile axis (arbitrary: accumulation)
    n_ke = pl.num_programs(1)

    Np = x_ref.shape[0]           # padded node count (gather contraction width)
    TE = src_ref.shape[0]         # edge tile (scatter contraction width)
    Hp = wn_ref.shape[1]          # lane-padded hidden width

    def layer_norm(v, gamma, beta, d_real):
        # padded lanes of v are exactly 0 and gamma/beta are zero-padded, so
        # sums divided by the *real* feature count reproduce torch LayerNorm.
        inv_d = 1.0 / float(d_real)
        mu = jnp.sum(v, axis=-1, keepdims=True) * inv_d
        var = jnp.sum(v * v, axis=-1, keepdims=True) * inv_d - mu * mu
        var = jnp.maximum(var, 0.0)
        return (v - mu) * jax.lax.rsqrt(var + EPS_LN) * gamma + beta

    # ---- node encoder: once, at the very first grid step; z lives in scratch.
    @pl.when(jnp.logical_and(l == 0, ke == 0))
    def _():
        z_scr[...] = dot(x_ref[...], wn_ref[...]) + bn_ref[...]      # bf16 MXU

    # ---- per-layer prologue at the first edge tile: DeepGCNLayer 'res+'
    #      pre-conv (LayerNorm -> ReLU -> Dropout(identity)) + aggr init.
    @pl.when(ke == 0)
    def _():
        h = layer_norm(z_scr[...], ln1g_ref[0], ln1b_ref[0], h_real)
        h_scr[...] = jnp.maximum(h, 0.0)
        den_scr[...] = jnp.zeros_like(den_scr)
        num_scr[...] = jnp.zeros_like(num_scr)
        c_scr[...] = jnp.full(c_scr.shape, -1e30, f32)

    # ---- every (l, ke): edge-tile gather, GENConv message, online-softmax scatter
    h = h_scr[...]                                                    # [Np, Hp]
    ea = dot(ea_ref[...], we_ref[...]) + be_ref[...]                  # edge encoder [TE, Hp]

    # in-kernel one-hot operators (bf16, exact 0/1) for this edge tile
    lane_cols = jax.lax.broadcasted_iota(jnp.int32, (TE, Np), 1)
    node_rows = jax.lax.broadcasted_iota(jnp.int32, (Np, TE), 0)
    s_src = jnp.where(lane_cols == src_ref[...], 1.0, 0.0).astype(bf16)   # [TE, Np]
    a_dst = jnp.where(node_rows == dst_ref[...], 1.0, 0.0).astype(bf16)   # [Np, TE]

    x_j = dot(s_src, h.astype(bf16))                                  # gather h[src]  [TE, Hp]
    msg = jnp.maximum(x_j + ea, 0.0) + EPS_GEN                        # strictly > 0
    tm = t_ref[0] * msg                                               # [TE, Hp]
    if e_real % TE != 0:                                              # mask padded edges (static)
        eidx = jax.lax.broadcasted_iota(jnp.int32, (TE, 1), 0) + ke * TE
        tm = jnp.where(eidx < e_real, tm, -1e30)

    # online per-channel max + rescale of the node-level accumulators
    c_old = c_scr[...]                                                # [1, Hp]
    c_new = jnp.maximum(c_old, jnp.max(tm, axis=0, keepdims=True))
    alpha = jnp.exp(c_old - c_new)                                    # ==0 on the first tile
    p = jnp.exp(tm - c_new)                                           # [TE, Hp], in (0, 1]
    # fused scatter: one bf16 MXU pass yields denom += sum p, numer += sum msg*p
    qp = jnp.concatenate([p.astype(bf16), (msg * p).astype(bf16)], axis=1)   # [TE, 2Hp]
    sc = dot(a_dst, qp)                                               # [Np, 2Hp]
    den_scr[...] = alpha * den_scr[...] + sc[:, :Hp]
    num_scr[...] = alpha * num_scr[...] + sc[:, Hp:]
    c_scr[...] = c_new

    # ---- per-layer epilogue at the last edge tile: softmax-mean, MLP, residual
    @pl.when(ke == n_ke - 1)
    def _():
        den = den_scr[...]
        inv = pl.reciprocal(jnp.where(den > 0.0, den, 1.0), approx=True)
        out = num_scr[...] * inv + h                                  # aggr + x_dst (GENConv root)
        u = dot(out.astype(bf16), w1_ref[0]) + b1_ref[0]              # Linear(H, 2H)
        u = jnp.maximum(layer_norm(u, ln2g_ref[0], ln2b_ref[0], h2_real), 0.0)
        z = z_scr[...] + dot(u.astype(bf16), w2_ref[0]) + b2_ref[0]   # Linear(2H, H) + res+
        z_scr[...] = z
        z_out_ref[...] = z                                            # per-layer snapshot block
        g_out_ref[...] = dot(pb_ref[...], z)                          # global_add_pool block (f32)


def _vmem_bytes_estimate(Np, TE, C, Hp, H2p, B):
    f32b, b16, i32 = 4, 2, 4
    resident = Np * C * b16 + B * Np * f32b + 2 * (C * Hp * b16 + Hp * f32b)
    streamed = 2 * (TE * C * b16 + 2 * TE * i32)                       # double-buffered edge tiles
    layer_w = 2 * (Hp * H2p * b16 + H2p * Hp * b16 + 4 * Hp * f32b + 3 * H2p * f32b)
    outs = 2 * (Np * Hp * f32b + B * Hp * f32b)
    scratch = 4 * Np * Hp * f32b + Hp * f32b
    transient = (2 * Np * TE * b16 + 6 * TE * Hp * f32b + TE * 2 * Hp * b16
                 + Np * 2 * Hp * f32b + 2 * Np * H2p * f32b)
    return resident + streamed + layer_w + outs + scratch + transient


def deeper_gcn_forward(x, edge_attr, edge_index, batch, params, num_graphs, *, edge_tile=256):
    f32, bf16 = jnp.float32, jnp.bfloat16
    N, C = x.shape
    E = edge_attr.shape[0]
    H = params['Wn'].shape[1]
    H2 = 2 * H
    L = params['W1'].shape[0]            # = num_layers - 1 applied layers
    B = num_graphs
    Hp = _round_up(H, 128)               # lane-dense hidden widths
    H2p = _round_up(H2, 128)
    Np = _round_up(N, 128)               # MXU-friendly gather-contraction width
    TE = int(edge_tile)                  # edge tile = scatter-contraction width
    Ep = _round_up(E, TE)
    KE = Ep // TE

    src = edge_index[0].astype(jnp.int32)
    dst = edge_index[1].astype(jnp.int32)
    # padded edges: src=0 (harmless, masked via tm), dst=Np (out of range ->
    # all-zero scatter column); padded nodes: batch id = B -> zero pool column.
    src_p = jnp.pad(src, (0, Ep - E))[:, None]                                 # [Ep, 1]
    dst_p = jnp.pad(dst, (0, Ep - E), constant_values=Np)[None, :]             # [1, Ep]
    batch_p = jnp.pad(batch.astype(jnp.int32), (0, Np - N), constant_values=B)
    p_batch = (jnp.arange(B, dtype=jnp.int32)[:, None] == batch_p[None, :]).astype(f32)  # [B, Np]

    x_p = _pad_to(x, (Np, C)).astype(bf16)
    ea_p = _pad_to(edge_attr, (Ep, C)).astype(bf16)

    # zero-pad hidden dims to 128-lane multiples; weights shipped in bf16.
    pp = dict(
        Wn=_pad_to(params['Wn'], (C, Hp)).astype(bf16),
        bn=_pad_to(params['bn'], (1, Hp)),
        We=_pad_to(params['We'], (C, Hp)).astype(bf16),
        be=_pad_to(params['be'], (1, Hp)),
        t=jnp.broadcast_to(params['t'].astype(f32)[:, None, None], (L, 1, Hp)),
        ln1_g=_pad_to(params['ln1_g'], (L, 1, Hp)),
        ln1_b=_pad_to(params['ln1_b'], (L, 1, Hp)),
        W1=_pad_to(params['W1'], (L, Hp, H2p)).astype(bf16),
        b1=_pad_to(params['b1'], (L, 1, H2p)),
        ln2_g=_pad_to(params['ln2_g'], (L, 1, H2p)),
        ln2_b=_pad_to(params['ln2_b'], (L, 1, H2p)),
        W2=_pad_to(params['W2'], (L, H2p, Hp)).astype(bf16),
        b2=_pad_to(params['b2'], (L, 1, Hp)),
    )

    def full2(shape):                                   # resident across the whole grid
        return pl.BlockSpec(shape, lambda l, ke: (0, 0))

    def per_layer(shape):                               # streamed / double-buffered per layer
        return pl.BlockSpec(shape, lambda l, ke: (l, 0, 0))

    in_specs = [
        full2((Np, C)),                                       # x
        pl.BlockSpec((TE, C), lambda l, ke: (ke, 0)),         # edge_attr tile
        pl.BlockSpec((TE, 1), lambda l, ke: (ke, 0)),         # src tile
        pl.BlockSpec((1, TE), lambda l, ke: (0, ke)),         # dst tile
        full2((B, Np)),                                       # p_batch (pool one-hot)
        full2((C, Hp)), full2((1, Hp)),                       # Wn, bn
        full2((C, Hp)), full2((1, Hp)),                       # We, be
        per_layer((1, 1, Hp)),                                # t (broadcast per channel)
        per_layer((1, 1, Hp)), per_layer((1, 1, Hp)),         # ln1 gamma / beta
        per_layer((1, Hp, H2p)), per_layer((1, 1, H2p)),      # W1, b1
        per_layer((1, 1, H2p)), per_layer((1, 1, H2p)),       # ln2 gamma / beta
        per_layer((1, H2p, Hp)), per_layer((1, 1, Hp)),       # W2, b2
    ]
    out_specs = [pl.BlockSpec((Np, Hp), lambda l, ke: (0, l)),     # per-layer z snapshot
                 pl.BlockSpec((B, Hp), lambda l, ke: (0, l))]      # per-layer pooled g
    out_shape = (jax.ShapeDtypeStruct((Np, L * Hp), f32),
                 jax.ShapeDtypeStruct((B, L * Hp), f32))
    scratch = [pltpu.VMEM((Np, Hp), f32),     # z carry
               pltpu.VMEM((Np, Hp), f32),     # h (pre-conv activations)
               pltpu.VMEM((Np, Hp), f32),     # softmax denominator accumulator
               pltpu.VMEM((Np, Hp), f32),     # softmax numerator accumulator
               pltpu.VMEM((1, Hp), f32)]      # running per-channel max

    inputs = (x_p, ea_p, src_p, dst_p, p_batch,
              pp['Wn'], pp['bn'], pp['We'], pp['be'],
              pp['t'], pp['ln1_g'], pp['ln1_b'],
              pp['W1'], pp['b1'], pp['ln2_g'], pp['ln2_b'],
              pp['W2'], pp['b2'])

    # chip-aware scoped-VMEM sizing (never exceed physical; generous for the working set)
    est = _vmem_bytes_estimate(Np, TE, C, Hp, H2p, B)
    try:
        cap = int(pltpu.get_tpu_info().vmem_capacity_bytes)
    except Exception:
        cap = 64 << 20            # v7x per-TensorCore VMEM = most restrictive
    vmem_limit = int(min(int(cap * 0.85), max(2 * est, 24 << 20)))

    kernel = functools.partial(_deeper_gcn_kernel, H, H2, E)
    z_slab, g_slab = pl.pallas_call(
        kernel,
        out_shape=out_shape,
        grid_spec=pltpu.PrefetchScalarGridSpec(
            num_scalar_prefetch=0,
            grid=(L, KE),
            in_specs=in_specs,
            out_specs=out_specs,
            scratch_shapes=scratch),
        compiler_params=pltpu.CompilerParams(
            dimension_semantics=("arbitrary", "arbitrary"),
            vmem_limit_bytes=vmem_limit),
    )(*inputs)

    # strip node / lane padding and re-concatenate per-layer features
    z_cat = jnp.concatenate([z_slab[:N, l * Hp:l * Hp + H] for l in range(L)], axis=1)
    g_cat = jnp.concatenate([g_slab[:, l * Hp:l * Hp + H] for l in range(L)], axis=1)
    return z_cat, g_cat


def init_params(key, in_channels, hidden, num_layers):
    """Deterministic synthetic parameters matching the module's shapes."""
    L = num_layers - 1          # DeeperGCN.forward iterates self.layers[1:]
    H = hidden
    keys = jax.random.split(key, 2 + L)

    def lin(k, fi, fo):
        k1, k2 = jax.random.split(k)
        lim = 1.0 / np.sqrt(fi)
        W = jax.random.uniform(k1, (fi, fo), jnp.float32, -lim, lim)
        b = jax.random.uniform(k2, (fo,), jnp.float32, -lim, lim)
        return W, b

    Wn, bn = lin(keys[0], in_channels, H)
    We, be = lin(keys[1], in_channels, H)
    W1s, b1s, W2s, b2s = [], [], [], []
    for l in range(L):
        ka, kb = jax.random.split(keys[2 + l])
        W1, b1 = lin(ka, H, 2 * H)       # GENConv MLP: Linear(H, 2H)
        W2, b2 = lin(kb, 2 * H, H)       #              Linear(2H, H)
        W1s.append(W1); b1s.append(b1[None, :])
        W2s.append(W2); b2s.append(b2[None, :])

    return dict(
        Wn=Wn, bn=bn[None, :], We=We, be=be[None, :],
        t=jnp.ones((L,), jnp.float32),                                   # learn_t=True, init t=1.0
        ln1_g=jnp.ones((L, 1, H), jnp.float32),                          # DeepGCNLayer LayerNorm
        ln1_b=jnp.zeros((L, 1, H), jnp.float32),
        W1=jnp.stack(W1s), b1=jnp.stack(b1s),
        ln2_g=jnp.ones((L, 1, 2 * H), jnp.float32),                      # GENConv MLP LayerNorm
        ln2_b=jnp.zeros((L, 1, 2 * H), jnp.float32),
        W2=jnp.stack(W2s), b2=jnp.stack(b2s),
    )


def reference_forward(x, edge_attr, edge_index, batch, params, num_graphs):
    """Pure-JAX reference mirroring the PyTorch forward (eval mode, f32 HIGHEST)."""
    HI = jax.lax.Precision.HIGHEST
    src, dst = edge_index[0], edge_index[1]
    N = x.shape[0]
    L = params['W1'].shape[0]

    def ln(v, g, b):
        mu = v.mean(-1, keepdims=True)
        var = ((v - mu) ** 2).mean(-1, keepdims=True)
        return (v - mu) / jnp.sqrt(var + EPS_LN) * g + b

    z = jnp.dot(x, params['Wn'], precision=HI) + params['bn'][0]
    ea = jnp.dot(edge_attr, params['We'], precision=HI) + params['be'][0]
    zs, gs = [], []
    for l in range(L):
        h = jax.nn.relu(ln(z, params['ln1_g'][l, 0], params['ln1_b'][l, 0]))
        msg = jax.nn.relu(h[src] + ea) + EPS_GEN
        tm = params['t'][l] * msg
        mmax = jax.ops.segment_max(tm, dst, num_segments=N)
        p = jnp.exp(tm - mmax[dst])
        denom = jax.ops.segment_sum(p, dst, num_segments=N)
        w = p / denom[dst]
        aggr = jax.ops.segment_sum(msg * w, dst, num_segments=N)
        out = aggr + h
        u = jax.nn.relu(ln(jnp.dot(out, params['W1'][l], precision=HI) + params['b1'][l, 0],
                           params['ln2_g'][l, 0], params['ln2_b'][l, 0]))
        z = z + jnp.dot(u, params['W2'][l], precision=HI) + params['b2'][l, 0]
        zs.append(z)
        gs.append(jax.ops.segment_sum(z, batch, num_segments=num_graphs))
    return jnp.concatenate(zs, axis=1), jnp.concatenate(gs, axis=1)


if __name__ == "__main__":
    in_channels, hidden, num_layers = 16, 32, 3   # -> 2 applied DeepGCN layers
    N, E, B = 64, 512, 2                          # 2 edge tiles of 256 -> exercises online max

    key = jax.random.PRNGKey(0)
    k_x, k_ea, k_s, k_d, k_p = jax.random.split(key, 5)
    x = jax.random.normal(k_x, (N, in_channels), jnp.float32)
    edge_attr = jax.random.normal(k_ea, (E, in_channels), jnp.float32)
    # edges stay inside their graph (nodes [0,32) = graph 0, [32,64) = graph 1)
    src = jnp.concatenate([jax.random.randint(k_s, (E // 2,), 0, N // 2),
                           jax.random.randint(jax.random.fold_in(k_s, 1), (E // 2,), N // 2, N)])
    dst = jnp.concatenate([jax.random.randint(k_d, (E // 2,), 0, N // 2),
                           jax.random.randint(jax.random.fold_in(k_d, 1), (E // 2,), N // 2, N)])
    edge_index = jnp.stack([src, dst]).astype(jnp.int32)
    batch = jnp.concatenate([jnp.zeros((N // 2,), jnp.int32),
                             jnp.ones((N // 2,), jnp.int32)])

    params = init_params(k_p, in_channels, hidden, num_layers)

    z_cat, g_cat = deeper_gcn_forward(x, edge_attr, edge_index, batch, params, B, edge_tile=256)
    jax.block_until_ready((z_cat, g_cat))

    z_ref, g_ref = reference_forward(x, edge_attr, edge_index, batch, params, B)
    assert z_cat.shape == (N, hidden * (num_layers - 1))
    assert g_cat.shape == (B, hidden * (num_layers - 1))
    # Intentional inference-level tolerances: the gather/scatter one-hots, the
    # softmax weights and all parameter matmuls run on the bf16 MXU path (with
    # f32 accumulation) and the softmax denominator uses the EUP approximate
    # reciprocal, compared against an f32 HIGHEST-precision reference.
    np.testing.assert_allclose(np.asarray(z_cat), np.asarray(z_ref), rtol=3e-2, atol=6e-2)
    # pooled graph sums accumulate the per-node rounding of ~N/B nodes
    np.testing.assert_allclose(np.asarray(g_cat), np.asarray(g_ref), rtol=4e-2, atol=3e-1)
    print("KERNEL_OK")
</pallas_src>

<mosaic_0001>
module attributes {stable_mosaic.version = 11 : i64} {
  func.func @_deeper_gcn_kernel(%arg0: i32, %arg1: i32, %arg2: memref<128x16xbf16, #tpu.memory_space<vmem>>, %arg3: memref<256x16xbf16, #tpu.memory_space<vmem>>, %arg4: memref<256x1xi32, #tpu.memory_space<vmem>>, %arg5: memref<1x256xi32, #tpu.memory_space<vmem>>, %arg6: memref<2x128xf32, #tpu.memory_space<vmem>>, %arg7: memref<16x128xbf16, #tpu.memory_space<vmem>>, %arg8: memref<1x128xf32, #tpu.memory_space<vmem>>, %arg9: memref<16x128xbf16, #tpu.memory_space<vmem>>, %arg10: memref<1x128xf32, #tpu.memory_space<vmem>>, %arg11: memref<1x1x128xf32, #tpu.memory_space<vmem>>, %arg12: memref<1x1x128xf32, #tpu.memory_space<vmem>>, %arg13: memref<1x1x128xf32, #tpu.memory_space<vmem>>, %arg14: memref<1x128x128xbf16, #tpu.memory_space<vmem>>, %arg15: memref<1x1x128xf32, #tpu.memory_space<vmem>>, %arg16: memref<1x1x128xf32, #tpu.memory_space<vmem>>, %arg17: memref<1x1x128xf32, #tpu.memory_space<vmem>>, %arg18: memref<1x128x128xbf16, #tpu.memory_space<vmem>>, %arg19: memref<1x1x128xf32, #tpu.memory_space<vmem>>, %arg20: memref<128x128xf32, #tpu.memory_space<vmem>>, %arg21: memref<2x128xf32, #tpu.memory_space<vmem>>, %arg22: memref<128x128xf32, #tpu.memory_space<vmem>>, %arg23: memref<128x128xf32, #tpu.memory_space<vmem>>, %arg24: memref<128x128xf32, #tpu.memory_space<vmem>>, %arg25: memref<128x128xf32, #tpu.memory_space<vmem>>, %arg26: memref<1x128xf32, #tpu.memory_space<vmem>>) attributes {dimension_semantics = [#tpu.dimension_semantics<arbitrary>, #tpu.dimension_semantics<arbitrary>], iteration_bounds = array<i64: 2, 2>, scalar_prefetch = 0 : i64, scratch_operands = 5 : i64, tpu.core_type = #tpu.core_type<tc>, window_params = [{pipeline_mode = #tpu.pipeline_mode<synchronous>, transform_indices = @transform_0, window_bounds = array<i64: 128, 16>}, {transform_indices = @transform_1, window_bounds = array<i64: 256, 16>}, {transform_indices = @transform_2, window_bounds = array<i64: 256, 1>}, {transform_indices = @transform_3, window_bounds = array<i64: 1, 256>}, {pipeline_mode = #tpu.pipeline_mode<synchronous>, transform_indices = @transform_4, window_bounds = array<i64: 2, 128>}, {pipeline_mode = #tpu.pipeline_mode<synchronous>, transform_indices = @transform_5, window_bounds = array<i64: 16, 128>}, {pipeline_mode = #tpu.pipeline_mode<synchronous>, transform_indices = @transform_6, window_bounds = array<i64: 1, 128>}, {pipeline_mode = #tpu.pipeline_mode<synchronous>, transform_indices = @transform_7, window_bounds = array<i64: 16, 128>}, {pipeline_mode = #tpu.pipeline_mode<synchronous>, transform_indices = @transform_8, window_bounds = array<i64: 1, 128>}, {transform_indices = @transform_9, window_bounds = array<i64: 1, 1, 128>}, {transform_indices = @transform_10, window_bounds = array<i64: 1, 1, 128>}, {transform_indices = @transform_11, window_bounds = array<i64: 1, 1, 128>}, {transform_indices = @transform_12, window_bounds = array<i64: 1, 128, 128>}, {transform_indices = @transform_13, window_bounds = array<i64: 1, 1, 128>}, {transform_indices = @transform_14, window_bounds = array<i64: 1, 1, 128>}, {transform_indices = @transform_15, window_bounds = array<i64: 1, 1, 128>}, {transform_indices = @transform_16, window_bounds = array<i64: 1, 128, 128>}, {transform_indices = @transform_17, window_bounds = array<i64: 1, 1, 128>}, {transform_indices = @transform_18, window_bounds = array<i64: 128, 128>}, {transform_indices = @transform_19, window_bounds = array<i64: 2, 128>}]} {
    %c0_i32 = arith.constant 0 : i32
    %0 = arith.cmpi eq, %arg0, %c0_i32 : i32
    %c0_i32_0 = arith.constant 0 : i32
    %1 = arith.cmpi eq, %arg1, %c0_i32_0 : i32
    %2 = arith.andi %0, %1 : i1
    %3 = arith.extui %2 : i1 to i32
    %c0_i32_1 = arith.constant 0 : i32
    %4 = arith.cmpi ne, %3, %c0_i32_1 : i32
    scf.if %4 {
      %c0_40 = arith.constant 0 : index
      %c0_41 = arith.constant 0 : index
      %72 = vector.load %arg2[%c0_40, %c0_41] : memref<128x16xbf16, #tpu.memory_space<vmem>>, vector<128x16xbf16>
      %c0_42 = arith.constant 0 : index
      %c0_43 = arith.constant 0 : index
      %73 = vector.load %arg7[%c0_42, %c0_43] : memref<16x128xbf16, #tpu.memory_space<vmem>>, vector<16x128xbf16>
      %cst_44 = arith.constant dense<0.000000e+00> : vector<128x128xf32>
      %74 = tpu.matmul %72, %73, %cst_44 {dimension_numbers = #tpu.dot_dimension_numbers<[1], [0], [0], [1], [0, 0, 1, 1], [], []>} : vector<128x16xbf16>, vector<16x128xbf16>, vector<128x128xf32> -> vector<128x128xf32>
      %c0_45 = arith.constant 0 : index
      %c0_46 = arith.constant 0 : index
      %75 = vector.load %arg8[%c0_45, %c0_46] : memref<1x128xf32, #tpu.memory_space<vmem>>, vector<1x128xf32>
      %76 = vector.broadcast %75 : vector<1x128xf32> to vector<128x128xf32>
      %77 = arith.addf %74, %76 : vector<128x128xf32>
      %c0_47 = arith.constant 0 : index
      %c0_48 = arith.constant 0 : index
      %78 = vector.load %arg22[%c0_47, %c0_48] : memref<128x128xf32, #tpu.memory_space<vmem>>, vector<128x128xf32>
      tpu.vector_store %arg22[%c0_47, %c0_48], %77 {strides = array<i32>} : memref<128x128xf32, #tpu.memory_space<vmem>>, vector<128x128xf32>,
    } else {
    }
    %c0_i32_2 = arith.constant 0 : i32
    %5 = arith.cmpi eq, %arg1, %c0_i32_2 : i32
    %6 = arith.extui %5 : i1 to i32
    %c0_i32_3 = arith.constant 0 : i32
    %7 = arith.cmpi ne, %6, %c0_i32_3 : i32
    scf.if %7 {
      %c0_40 = arith.constant 0 : index
      %c0_41 = arith.constant 0 : index
      %72 = vector.load %arg22[%c0_40, %c0_41] : memref<128x128xf32, #tpu.memory_space<vmem>>, vector<128x128xf32>
      %c0_42 = arith.constant 0 : index
      %c0_43 = arith.constant 0 : index
      %c0_44 = arith.constant 0 : index
      %73 = vector.load %arg12[%c0_42, %c0_43, %c0_44] : memref<1x1x128xf32, #tpu.memory_space<vmem>>, vector<1x1x128xf32>
      %74 = vector.shape_cast %73 : vector<1x1x128xf32> to vector<1x128xf32>
      %c0_45 = arith.constant 0 : index
      %c0_46 = arith.constant 0 : index
      %c0_47 = arith.constant 0 : index
      %75 = vector.load %arg13[%c0_45, %c0_46, %c0_47] : memref<1x1x128xf32, #tpu.memory_space<vmem>>, vector<1x1x128xf32>
      %76 = vector.shape_cast %75 : vector<1x1x128xf32> to vector<1x128xf32>
      %cst_48 = arith.constant dense<0.000000e+00> : vector<128xf32>
      %77 = vector.multi_reduction <add>, %72, %cst_48 [1] : vector<128x128xf32> to vector<128xf32>
      %78 = vector.shape_cast %77 : vector<128xf32> to vector<128x1xf32>
      %cst_49 = arith.constant 3.125000e-02 : f32
      %79 = vector.broadcast %cst_49 : f32 to vector<128x1xf32>
      %80 = arith.mulf %78, %79 : vector<128x1xf32>
      %81 = arith.mulf %72, %72 : vector<128x128xf32>
      %cst_50 = arith.constant dense<0.000000e+00> : vector<128xf32>
      %82 = vector.multi_reduction <add>, %81, %cst_50 [1] : vector<128x128xf32> to vector<128xf32>
      %83 = vector.shape_cast %82 : vector<128xf32> to vector<128x1xf32>
      %cst_51 = arith.constant 3.125000e-02 : f32
      %84 = vector.broadcast %cst_51 : f32 to vector<128x1xf32>
      %85 = arith.mulf %83, %84 : vector<128x1xf32>
      %86 = arith.mulf %80, %80 : vector<128x1xf32>
      %87 = arith.subf %85, %86 : vector<128x1xf32>
      %cst_52 = arith.constant 0.000000e+00 : f32
      %88 = vector.broadcast %cst_52 : f32 to vector<128x1xf32>
      %89 = arith.maximumf %87, %88 : vector<128x1xf32>
      %90 = vector.broadcast %80 : vector<128x1xf32> to vector<128x128xf32>
      %91 = arith.subf %72, %90 : vector<128x128xf32>
      %cst_53 = arith.constant 9.99999974E-6 : f32
      %92 = vector.broadcast %cst_53 : f32 to vector<128x1xf32>
      %93 = arith.addf %89, %92 : vector<128x1xf32>
      %94 = math.rsqrt %93 : vector<128x1xf32>
      %95 = vector.broadcast %94 : vector<128x1xf32> to vector<128x128xf32>
      %96 = arith.mulf %91, %95 : vector<128x128xf32>
      %97 = vector.broadcast %74 : vector<1x128xf32> to vector<128x128xf32>
      %98 = arith.mulf %96, %97 : vector<128x128xf32>
      %99 = vector.broadcast %76 : vector<1x128xf32> to vector<128x128xf32>
      %100 = arith.addf %98, %99 : vector<128x128xf32>
      %cst_54 = arith.constant 0.000000e+00 : f32
      %101 = vector.broadcast %cst_54 : f32 to vector<128x128xf32>
      %102 = arith.maximumf %100, %101 : vector<128x128xf32>
      %c0_55 = arith.constant 0 : index
      %c0_56 = arith.constant 0 : index
      %103 = vector.load %arg23[%c0_55, %c0_56] : memref<128x128xf32, #tpu.memory_space<vmem>>, vector<128x128xf32>
      tpu.vector_store %arg23[%c0_55, %c0_56], %102 {strides = array<i32>} : memref<128x128xf32, #tpu.memory_space<vmem>>, vector<128x128xf32>,
      %cst_57 = arith.constant 0.000000e+00 : f32
      %104 = vector.broadcast %cst_57 : f32 to vector<128x128xf32>
      %c0_58 = arith.constant 0 : index
      %c0_59 = arith.constant 0 : index
      %105 = vector.load %arg24[%c0_58, %c0_59] : memref<128x128xf32, #tpu.memory_space<vmem>>, vector<128x128xf32>
      tpu.vector_store %arg24[%c0_58, %c0_59], %104 {strides = array<i32>} : memref<128x128xf32, #tpu.memory_space<vmem>>, vector<128x128xf32>,
      %cst_60 = arith.constant 0.000000e+00 : f32
      %106 = vector.broadcast %cst_60 : f32 to vector<128x128xf32>
      %c0_61 = arith.constant 0 : index
      %c0_62 = arith.constant 0 : index
      %107 = vector.load %arg25[%c0_61, %c0_62] : memref<128x128xf32, #tpu.memory_space<vmem>>, vector<128x128xf32>
      tpu.vector_store %arg25[%c0_61, %c0_62], %106 {strides = array<i32>} : memref<128x128xf32, #tpu.memory_space<vmem>>, vector<128x128xf32>,
      %cst_63 = arith.constant -1.000000e+30 : f32
      %108 = vector.broadcast %cst_63 : f32 to vector<1x128xf32>
      %c0_64 = arith.constant 0 : index
      %c0_65 = arith.constant 0 : index
      %109 = vector.load %arg26[%c0_64, %c0_65] : memref<1x128xf32, #tpu.memory_space<vmem>>, vector<1x128xf32>
      tpu.vector_store %arg26[%c0_64, %c0_65], %108 {strides = array<i32>} : memref<1x128xf32, #tpu.memory_space<vmem>>, vector<1x128xf32>,
    } else {
    }
    %c0 = arith.constant 0 : index
    %c0_4 = arith.constant 0 : index
    %8 = vector.load %arg23[%c0, %c0_4] : memref<128x128xf32, #tpu.memory_space<vmem>>, vector<128x128xf32>
    %c0_5 = arith.constant 0 : index
    %c0_6 = arith.constant 0 : index
    %9 = vector.load %arg3[%c0_5, %c0_6] : memref<256x16xbf16, #tpu.memory_space<vmem>>, vector<256x16xbf16>
    %c0_7 = arith.constant 0 : index
    %c0_8 = arith.constant 0 : index
    %10 = vector.load %arg9[%c0_7, %c0_8] : memref<16x128xbf16, #tpu.memory_space<vmem>>, vector<16x128xbf16>
    %cst = arith.constant dense<0.000000e+00> : vector<256x128xf32>
    %11 = tpu.matmul %9, %10, %cst {dimension_numbers = #tpu.dot_dimension_numbers<[1], [0], [0], [1], [0, 0, 1, 1], [], []>} : vector<256x16xbf16>, vector<16x128xbf16>, vector<256x128xf32> -> vector<256x128xf32>
    %c0_9 = arith.constant 0 : index
    %c0_10 = arith.constant 0 : index
    %12 = vector.load %arg10[%c0_9, %c0_10] : memref<1x128xf32, #tpu.memory_space<vmem>>, vector<1x128xf32>
    %13 = vector.broadcast %12 : vector<1x128xf32> to vector<256x128xf32>
    %14 = arith.addf %11, %13 : vector<256x128xf32>
    %15 = tpu.iota {dimensions = array<i32: 1>} : vector<256x128xi32>
    %16 = tpu.iota {dimensions = array<i32: 0>} : vector<128x256xi32>
    %c0_11 = arith.constant 0 : index
    %c0_12 = arith.constant 0 : index
    %17 = vector.load %arg4[%c0_11, %c0_12] : memref<256x1xi32, #tpu.memory_space<vmem>>, vector<256x1xi32>
    %18 = vector.broadcast %17 : vector<256x1xi32> to vector<256x128xi32>
    %19 = arith.cmpi eq, %15, %18 : vector<256x128xi32>
    %cst_13 = arith.constant 1.000000e+00 : f32
    %cst_14 = arith.constant 0.000000e+00 : f32
    %20 = vector.broadcast %cst_13 : f32 to vector<256x128xf32>
    %21 = vector.broadcast %cst_14 : f32 to vector<256x128xf32>
    %22 = arith.select %19, %20, %21 : vector<256x128xi1>, vector<256x128xf32>
    %23 = arith.truncf %22 : vector<256x128xf32> to vector<256x128xbf16>
    %c0_15 = arith.constant 0 : index
    %c0_16 = arith.constant 0 : index
    %24 = vector.load %arg5[%c0_15, %c0_16] : memref<1x256xi32, #tpu.memory_space<vmem>>, vector<1x256xi32>
    %25 = vector.broadcast %24 : vector<1x256xi32> to vector<128x256xi32>
    %26 = arith.cmpi eq, %16, %25 : vector<128x256xi32>
    %cst_17 = arith.constant 1.000000e+00 : f32
    %cst_18 = arith.constant 0.000000e+00 : f32
    %27 = vector.broadcast %cst_17 : f32 to vector<128x256xf32>
    %28 = vector.broadcast %cst_18 : f32 to vector<128x256xf32>
    %29 = arith.select %26, %27, %28 : vector<128x256xi1>, vector<128x256xf32>
    %30 = arith.truncf %29 : vector<128x256xf32> to vector<128x256xbf16>
    %31 = arith.truncf %8 : vector<128x128xf32> to vector<128x128xbf16>
    %cst_19 = arith.constant dense<0.000000e+00> : vector<256x128xf32>
    %32 = tpu.matmul %23, %31, %cst_19 {dimension_numbers = #tpu.dot_dimension_numbers<[1], [0], [0], [1], [0, 0, 1, 1], [], []>} : vector<256x128xbf16>, vector<128x128xbf16>, vector<256x128xf32> -> vector<256x128xf32>
    %33 = arith.addf %32, %14 : vector<256x128xf32>
    %cst_20 = arith.constant 0.000000e+00 : f32
    %34 = vector.broadcast %cst_20 : f32 to vector<256x128xf32>
    %35 = arith.maximumf %33, %34 : vector<256x128xf32>
    %cst_21 = arith.constant 1.000000e-07 : f32
    %36 = vector.broadcast %cst_21 : f32 to vector<256x128xf32>
    %37 = arith.addf %35, %36 : vector<256x128xf32>
    %c0_22 = arith.constant 0 : index
    %c0_23 = arith.constant 0 : index
    %c0_24 = arith.constant 0 : index
    %38 = vector.load %arg11[%c0_22, %c0_23, %c0_24] : memref<1x1x128xf32, #tpu.memory_space<vmem>>, vector<1x1x128xf32>
    %39 = vector.shape_cast %38 : vector<1x1x128xf32> to vector<1x128xf32>
    %40 = vector.broadcast %39 : vector<1x128xf32> to vector<256x128xf32>
    %41 = arith.mulf %40, %37 : vector<256x128xf32>
    %c0_25 = arith.constant 0 : index
    %c0_26 = arith.constant 0 : index
    %42 = vector.load %arg26[%c0_25, %c0_26] : memref<1x128xf32, #tpu.memory_space<vmem>>, vector<1x128xf32>
    %cst_27 = arith.constant dense<0xFF800000> : vector<128xf32>
    %43 = vector.multi_reduction <maximumf>, %41, %cst_27 [0] : vector<256x128xf32> to vector<128xf32>
    %44 = vector.shape_cast %43 : vector<128xf32> to vector<1x128xf32>
    %45 = arith.maximumf %42, %44 : vector<1x128xf32>
    %46 = arith.subf %42, %45 : vector<1x128xf32>
    %47 = math.exp %46 : vector<1x128xf32>
    %48 = vector.broadcast %45 : vector<1x128xf32> to vector<256x128xf32>
    %49 = arith.subf %41, %48 : vector<256x128xf32>
    %50 = math.exp %49 : vector<256x128xf32>
    %51 = arith.truncf %50 : vector<256x128xf32> to vector<256x128xbf16>
    %52 = arith.mulf %37, %50 : vector<256x128xf32>
    %53 = arith.truncf %52 : vector<256x128xf32> to vector<256x128xbf16>
    %54 = tpu.concatenate %51, %53 in 1 : vector<256x128xbf16>, vector<256x128xbf16> -> vector<256x256xbf16>
    %cst_28 = arith.constant dense<0.000000e+00> : vector<128x256xf32>
    %55 = tpu.matmul %30, %54, %cst_28 {dimension_numbers = #tpu.dot_dimension_numbers<[1], [0], [0], [1], [0, 0, 1, 1], [], []>} : vector<128x256xbf16>, vector<256x256xbf16>, vector<128x256xf32> -> vector<128x256xf32>
    %c0_29 = arith.constant 0 : index
    %c0_30 = arith.constant 0 : index
    %56 = vector.load %arg24[%c0_29, %c0_30] : memref<128x128xf32, #tpu.memory_space<vmem>>, vector<128x128xf32>
    %57 = vector.broadcast %47 : vector<1x128xf32> to vector<128x128xf32>
    %58 = arith.mulf %57, %56 : vector<128x128xf32>
    %59 = vector.extract_strided_slice %55 {offsets = [0, 0], sizes = [128, 128], strides = [1, 1]} : vector<128x256xf32> to vector<128x128xf32>
    %60 = arith.addf %58, %59 : vector<128x128xf32>
    %c0_31 = arith.constant 0 : index
    %c0_32 = arith.constant 0 : index
    %61 = vector.load %arg24[%c0_31, %c0_32] : memref<128x128xf32, #tpu.memory_space<vmem>>, vector<128x128xf32>
    tpu.vector_store %arg24[%c0_31, %c0_32], %60 {strides = array<i32>} : memref<128x128xf32, #tpu.memory_space<vmem>>, vector<128x128xf32>,
    %c0_33 = arith.constant 0 : index
    %c0_34 = arith.constant 0 : index
    %62 = vector.load %arg25[%c0_33, %c0_34] : memref<128x128xf32, #tpu.memory_space<vmem>>, vector<128x128xf32>
    %63 = vector.broadcast %47 : vector<1x128xf32> to vector<128x128xf32>
    %64 = arith.mulf %63, %62 : vector<128x128xf32>
    %65 = vector.extract_strided_slice %55 {offsets = [0, 128], sizes = [128, 128], strides = [1, 1]} : vector<128x256xf32> to vector<128x128xf32>
    %66 = arith.addf %64, %65 : vector<128x128xf32>
    %c0_35 = arith.constant 0 : index
    %c0_36 = arith.constant 0 : index
    %67 = vector.load %arg25[%c0_35, %c0_36] : memref<128x128xf32, #tpu.memory_space<vmem>>, vector<128x128xf32>
    tpu.vector_store %arg25[%c0_35, %c0_36], %66 {strides = array<i32>} : memref<128x128xf32, #tpu.memory_space<vmem>>, vector<128x128xf32>,
    %c0_37 = arith.constant 0 : index
    %c0_38 = arith.constant 0 : index
    %68 = vector.load %arg26[%c0_37, %c0_38] : memref<1x128xf32, #tpu.memory_space<vmem>>, vector<1x128xf32>
    tpu.vector_store %arg26[%c0_37, %c0_38], %45 {strides = array<i32>} : memref<1x128xf32, #tpu.memory_space<vmem>>, vector<1x128xf32>,
    %c1_i32 = arith.constant 1 : i32
    %69 = arith.cmpi eq, %arg1, %c1_i32 : i32
    %70 = arith.extui %69 : i1 to i32
    %c0_i32_39 = arith.constant 0 : i32
    %71 = arith.cmpi ne, %70, %c0_i32_39 : i32
    scf.if %71 {
      %c0_40 = arith.constant 0 : index
      %c0_41 = arith.constant 0 : index
      %72 = vector.load %arg24[%c0_40, %c0_41] : memref<128x128xf32, #tpu.memory_space<vmem>>, vector<128x128xf32>
      %cst_42 = arith.constant 0.000000e+00 : f32
      %73 = vector.broadcast %cst_42 : f32 to vector<128x128xf32>
      %74 = arith.cmpf ogt, %72, %73 : vector<128x128xf32>
      %cst_43 = arith.constant 1.000000e+00 : f32
      %75 = vector.broadcast %cst_43 : f32 to vector<128x128xf32>
      %76 = arith.select %74, %72, %75 : vector<128x128xi1>, vector<128x128xf32>
      %77 = tpu.reciprocal %76 {approx = true} : vector<128x128xf32> -> vector<128x128xf32>
      %c0_44 = arith.constant 0 : index
      %c0_45 = arith.constant 0 : index
      %78 = vector.load %arg25[%c0_44, %c0_45] : memref<128x128xf32, #tpu.memory_space<vmem>>, vector<128x128xf32>
      %79 = arith.mulf %78, %77 : vector<128x128xf32>
      %80 = arith.addf %79, %8 : vector<128x128xf32>
      %81 = arith.truncf %80 : vector<128x128xf32> to vector<128x128xbf16>
      %c0_46 = arith.constant 0 : index
      %c0_47 = arith.constant 0 : index
      %c0_48 = arith.constant 0 : index
      %82 = vector.load %arg14[%c0_46, %c0_47, %c0_48] : memref<1x128x128xbf16, #tpu.memory_space<vmem>>, vector<1x128x128xbf16>
      %83 = vector.shape_cast %82 : vector<1x128x128xbf16> to vector<128x128xbf16>
      %cst_49 = arith.constant dense<0.000000e+00> : vector<128x128xf32>
      %84 = tpu.matmul %81, %83, %cst_49 {dimension_numbers = #tpu.dot_dimension_numbers<[1], [0], [0], [1], [0, 0, 1, 1], [], []>} : vector<128x128xbf16>, vector<128x128xbf16>, vector<128x128xf32> -> vector<128x128xf32>
      %c0_50 = arith.constant 0 : index
      %c0_51 = arith.constant 0 : index
      %c0_52 = arith.constant 0 : index
      %85 = vector.load %arg15[%c0_50, %c0_51, %c0_52] : memref<1x1x128xf32, #tpu.memory_space<vmem>>, vector<1x1x128xf32>
      %86 = vector.shape_cast %85 : vector<1x1x128xf32> to vector<1x128xf32>
      %87 = vector.broadcast %86 : vector<1x128xf32> to vector<128x128xf32>
      %88 = arith.addf %84, %87 : vector<128x128xf32>
      %c0_53 = arith.constant 0 : index
      %c0_54 = arith.constant 0 : index
      %c0_55 = arith.constant 0 : index
      %89 = vector.load %arg16[%c0_53, %c0_54, %c0_55] : memref<1x1x128xf32, #tpu.memory_space<vmem>>, vector<1x1x128xf32>
      %90 = vector.shape_cast %89 : vector<1x1x128xf32> to vector<1x128xf32>
      %c0_56 = arith.constant 0 : index
      %c0_57 = arith.constant 0 : index
      %c0_58 = arith.constant 0 : index
      %91 = vector.load %arg17[%c0_56, %c0_57, %c0_58] : memref<1x1x128xf32, #tpu.memory_space<vmem>>, vector<1x1x128xf32>
      %92 = vector.shape_cast %91 : vector<1x1x128xf32> to vector<1x128xf32>
      %cst_59 = arith.constant dense<0.000000e+00> : vector<128xf32>
      %93 = vector.multi_reduction <add>, %88, %cst_59 [1] : vector<128x128xf32> to vector<128xf32>
      %94 = vector.shape_cast %93 : vector<128xf32> to vector<128x1xf32>
      %cst_60 = arith.constant 1.562500e-02 : f32
      %95 = vector.broadcast %cst_60 : f32 to vector<128x1xf32>
      %96 = arith.mulf %94, %95 : vector<128x1xf32>
      %97 = arith.mulf %88, %88 : vector<128x128xf32>
      %cst_61 = arith.constant dense<0.000000e+00> : vector<128xf32>
      %98 = vector.multi_reduction <add>, %97, %cst_61 [1] : vector<128x128xf32> to vector<128xf32>
      %99 = vector.shape_cast %98 : vector<128xf32> to vector<128x1xf32>
      %cst_62 = arith.constant 1.562500e-02 : f32
      %100 = vector.broadcast %cst_62 : f32 to vector<128x1xf32>
      %101 = arith.mulf %99, %100 : vector<128x1xf32>
      %102 = arith.mulf %96, %96 : vector<128x1xf32>
      %103 = arith.subf %101, %102 : vector<128x1xf32>
      %cst_63 = arith.constant 0.000000e+00 : f32
      %104 = vector.broadcast %cst_63 : f32 to vector<128x1xf32>
      %105 = arith.maximumf %103, %104 : vector<128x1xf32>
      %106 = vector.broadcast %96 : vector<128x1xf32> to vector<128x128xf32>
      %107 = arith.subf %88, %106 : vector<128x128xf32>
      %cst_64 = arith.constant 9.99999974E-6 : f32
      %108 = vector.broadcast %cst_64 : f32 to vector<128x1xf32>
      %109 = arith.addf %105, %108 : vector<128x1xf32>
      %110 = math.rsqrt %109 : vector<128x1xf32>
      %111 = vector.broadcast %110 : vector<128x1xf32> to vector<128x128xf32>
      %112 = arith.mulf %107, %111 : vector<128x128xf32>
      %113 = vector.broadcast %90 : vector<1x128xf32> to vector<128x128xf32>
      %114 = arith.mulf %112, %113 : vector<128x128xf32>
      %115 = vector.broadcast %92 : vector<1x128xf32> to vector<128x128xf32>
      %116 = arith.addf %114, %115 : vector<128x128xf32>
      %cst_65 = arith.constant 0.000000e+00 : f32
      %117 = vector.broadcast %cst_65 : f32 to vector<128x128xf32>
      %118 = arith.maximumf %116, %117 : vector<128x128xf32>
      %c0_66 = arith.constant 0 : index
      %c0_67 = arith.constant 0 : index
      %119 = vector.load %arg22[%c0_66, %c0_67] : memref<128x128xf32, #tpu.memory_space<vmem>>, vector<128x128xf32>
      %120 = arith.truncf %118 : vector<128x128xf32> to vector<128x128xbf16>
      %c0_68 = arith.constant 0 : index
      %c0_69 = arith.constant 0 : index
      %c0_70 = arith.constant 0 : index
      %121 = vector.load %arg18[%c0_68, %c0_69, %c0_70] : memref<1x128x128xbf16, #tpu.memory_space<vmem>>, vector<1x128x128xbf16>
      %122 = vector.shape_cast %121 : vector<1x128x128xbf16> to vector<128x128xbf16>
      %cst_71 = arith.constant dense<0.000000e+00> : vector<128x128xf32>
      %123 = tpu.matmul %120, %122, %cst_71 {dimension_numbers = #tpu.dot_dimension_numbers<[1], [0], [0], [1], [0, 0, 1, 1], [], []>} : vector<128x128xbf16>, vector<128x128xbf16>, vector<128x128xf32> -> vector<128x128xf32>
      %124 = arith.addf %119, %123 : vector<128x128xf32>
      %c0_72 = arith.constant 0 : index
      %c0_73 = arith.constant 0 : index
      %c0_74 = arith.constant 0 : index
      %125 = vector.load %arg19[%c0_72, %c0_73, %c0_74] : memref<1x1x128xf32, #tpu.memory_space<vmem>>, vector<1x1x128xf32>
      %126 = vector.shape_cast %125 : vector<1x1x128xf32> to vector<1x128xf32>
      %127 = vector.broadcast %126 : vector<1x128xf32> to vector<128x128xf32>
      %128 = arith.addf %124, %127 : vector<128x128xf32>
      %c0_75 = arith.constant 0 : index
      %c0_76 = arith.constant 0 : index
      %129 = vector.load %arg22[%c0_75, %c0_76] : memref<128x128xf32, #tpu.memory_space<vmem>>, vector<128x128xf32>
      tpu.vector_store %arg22[%c0_75, %c0_76], %128 {strides = array<i32>} : memref<128x128xf32, #tpu.memory_space<vmem>>, vector<128x128xf32>,
      %c0_77 = arith.constant 0 : index
      %c0_78 = arith.constant 0 : index
      %130 = vector.load %arg20[%c0_77, %c0_78] : memref<128x128xf32, #tpu.memory_space<vmem>>, vector<128x128xf32>
      tpu.vector_store %arg20[%c0_77, %c0_78], %128 {strides = array<i32>} : memref<128x128xf32, #tpu.memory_space<vmem>>, vector<128x128xf32>,
      %c0_79 = arith.constant 0 : index
      %c0_80 = arith.constant 0 : index
      %131 = vector.load %arg6[%c0_79, %c0_80] : memref<2x128xf32, #tpu.memory_space<vmem>>, vector<2x128xf32>
      %cst_81 = arith.constant dense<0.000000e+00> : vector<2x128xf32>
      %132 = tpu.matmul %131, %128, %cst_81 {dimension_numbers = #tpu.dot_dimension_numbers<[1], [0], [0], [1], [0, 0, 1, 1], [], []>} : vector<2x128xf32>, vector<128x128xf32>, vector<2x128xf32> -> vector<2x128xf32>
      %c0_82 = arith.constant 0 : index
      %c0_83 = arith.constant 0 : index
      %133 = vector.load %arg21[%c0_82, %c0_83] : memref<2x128xf32, #tpu.memory_space<vmem>>, vector<2x128xf32>
      tpu.vector_store %arg21[%c0_82, %c0_83], %132 {strides = array<i32>} : memref<2x128xf32, #tpu.memory_space<vmem>>, vector<2x128xf32>,
    } else {
    }
    return
  }
  func.func @transform_0(%arg0: i32, %arg1: i32) -> (i32, i32) {
    %c0_i32 = arith.constant 0 : i32
    %c0_i32_0 = arith.constant 0 : i32
    %c0_i32_1 = arith.constant 0 : i32
    return %c0_i32, %c0_i32_0 : i32, i32
  }
  func.func @transform_1(%arg0: i32, %arg1: i32) -> (i32, i32) {
    %c0_i32 = arith.constant 0 : i32
    %c0_i32_0 = arith.constant 0 : i32
    return %arg1, %c0_i32 : i32, i32
  }
  func.func @transform_2(%arg0: i32, %arg1: i32) -> (i32, i32) {
    %c0_i32 = arith.constant 0 : i32
    %c0_i32_0 = arith.constant 0 : i32
    return %arg1, %c0_i32 : i32, i32
  }
  func.func @transform_3(%arg0: i32, %arg1: i32) -> (i32, i32) {
    %c0_i32 = arith.constant 0 : i32
    %c0_i32_0 = arith.constant 0 : i32
    return %c0_i32, %arg1 : i32, i32
  }
  func.func @transform_4(%arg0: i32, %arg1: i32) -> (i32, i32) {
    %c0_i32 = arith.constant 0 : i32
    %c0_i32_0 = arith.constant 0 : i32
    %c0_i32_1 = arith.constant 0 : i32
    return %c0_i32, %c0_i32_0 : i32, i32
  }
  func.func @transform_5(%arg0: i32, %arg1: i32) -> (i32, i32) {
    %c0_i32 = arith.constant 0 : i32
    %c0_i32_0 = arith.constant 0 : i32
    %c0_i32_1 = arith.constant 0 : i32
    return %c0_i32, %c0_i32_0 : i32, i32
  }
  func.func @transform_6(%arg0: i32, %arg1: i32) -> (i32, i32) {
    %c0_i32 = arith.constant 0 : i32
    %c0_i32_0 = arith.constant 0 : i32
    %c0_i32_1 = arith.constant 0 : i32
    return %c0_i32, %c0_i32_0 : i32, i32
  }
  func.func @transform_7(%arg0: i32, %arg1: i32) -> (i32, i32) {
    %c0_i32 = arith.constant 0 : i32
    %c0_i32_0 = arith.constant 0 : i32
    %c0_i32_1 = arith.constant 0 : i32
    return %c0_i32, %c0_i32_0 : i32, i32
  }
  func.func @transform_8(%arg0: i32, %arg1: i32) -> (i32, i32) {
    %c0_i32 = arith.constant 0 : i32
    %c0_i32_0 = arith.constant 0 : i32
    %c0_i32_1 = arith.constant 0 : i32
    return %c0_i32, %c0_i32_0 : i32, i32
  }
  func.func @transform_9(%arg0: i32, %arg1: i32) -> (i32, i32, i32) {
    %c0_i32 = arith.constant 0 : i32
    %c0_i32_0 = arith.constant 0 : i32
    %c0_i32_1 = arith.constant 0 : i32
    return %arg0, %c0_i32, %c0_i32_0 : i32, i32, i32
  }
  func.func @transform_10(%arg0: i32, %arg1: i32) -> (i32, i32, i32) {
    %c0_i32 = arith.constant 0 : i32
    %c0_i32_0 = arith.constant 0 : i32
    %c0_i32_1 = arith.constant 0 : i32
    return %arg0, %c0_i32, %c0_i32_0 : i32, i32, i32
  }
  func.func @transform_11(%arg0: i32, %arg1: i32) -> (i32, i32, i32) {
    %c0_i32 = arith.constant 0 : i32
    %c0_i32_0 = arith.constant 0 : i32
    %c0_i32_1 = arith.constant 0 : i32
    return %arg0, %c0_i32, %c0_i32_0 : i32, i32, i32
  }
  func.func @transform_12(%arg0: i32, %arg1: i32) -> (i32, i32, i32) {
    %c0_i32 = arith.constant 0 : i32
    %c0_i32_0 = arith.constant 0 : i32
    %c0_i32_1 = arith.constant 0 : i32
    return %arg0, %c0_i32, %c0_i32_0 : i32, i32, i32
  }
  func.func @transform_13(%arg0: i32, %arg1: i32) -> (i32, i32, i32) {
    %c0_i32 = arith.constant 0 : i32
    %c0_i32_0 = arith.constant 0 : i32
    %c0_i32_1 = arith.constant 0 : i32
    return %arg0, %c0_i32, %c0_i32_0 : i32, i32, i32
  }
  func.func @transform_14(%arg0: i32, %arg1: i32) -> (i32, i32, i32) {
    %c0_i32 = arith.constant 0 : i32
    %c0_i32_0 = arith.constant 0 : i32
    %c0_i32_1 = arith.constant 0 : i32
    return %arg0, %c0_i32, %c0_i32_0 : i32, i32, i32
  }
  func.func @transform_15(%arg0: i32, %arg1: i32) -> (i32, i32, i32) {
    %c0_i32 = arith.constant 0 : i32
    %c0_i32_0 = arith.constant 0 : i32
    %c0_i32_1 = arith.constant 0 : i32
    return %arg0, %c0_i32, %c0_i32_0 : i32, i32, i32
  }
  func.func @transform_16(%arg0: i32, %arg1: i32) -> (i32, i32, i32) {
    %c0_i32 = arith.constant 0 : i32
    %c0_i32_0 = arith.constant 0 : i32
    %c0_i32_1 = arith.constant 0 : i32
    return %arg0, %c0_i32, %c0_i32_0 : i32, i32, i32
  }
  func.func @transform_17(%arg0: i32, %arg1: i32) -> (i32, i32, i32) {
    %c0_i32 = arith.constant 0 : i32
    %c0_i32_0 = arith.constant 0 : i32
    %c0_i32_1 = arith.constant 0 : i32
    return %arg0, %c0_i32, %c0_i32_0 : i32, i32, i32
  }
  func.func @transform_18(%arg0: i32, %arg1: i32) -> (i32, i32) {
    %c0_i32 = arith.constant 0 : i32
    %c0_i32_0 = arith.constant 0 : i32
    return %c0_i32, %arg0 : i32, i32
  }
  func.func @transform_19(%arg0: i32, %arg1: i32) -> (i32, i32) {
    %c0_i32 = arith.constant 0 : i32
    %c0_i32_0 = arith.constant 0 : i32
    return %c0_i32, %arg0 : i32, i32
  }
}

</mosaic_0001>

<llo_original>
// kernel: tpu_custom_call.1
$region0: #{tpu_custom_call.1}
  #allocation0 [shape = 'u32[]', space=smem, size = 0x4, offset = 0x4, fixed_abs, tag = 'smem constant byte address 0x4 - core index']
  #allocation1 [shape = 'u32[144,128]{1,0:T(1,128)}', space=vmem, size = 0x12000, scoped, tag = 'internal scratch']
  #allocation2 [shape = 'f32[128,128]{1,0:T(8,128)}', space=vmem, size = 0x10000, scoped, tag = 'scratch operand']
  #allocation3 [shape = 'f32[128,128]{1,0:T(8,128)}', space=vmem, size = 0x10000, scoped, tag = 'scratch operand']
  #allocation4 [shape = 'f32[128,128]{1,0:T(8,128)}', space=vmem, size = 0x10000, scoped, tag = 'scratch operand']
  #allocation5 [shape = 'f32[128,128]{1,0:T(8,128)}', space=vmem, size = 0x10000, scoped, tag = 'scratch operand']
  #allocation6 [shape = 'f32[1,128]{1,0:T(1,128)}', space=vmem, size = 0x200, scoped, tag = 'scratch operand']
  %s0 = inlined_call_operand.vmem [shape: bf16[128,16], index: 0, kind: input, shape index: {}]
  %s1 = inlined_call_operand.vmem [shape: bf16[512,16], index: 1, kind: input, shape index: {}]
  %s2 = inlined_call_operand.vmem [shape: s32[512,1], index: 2, kind: input, shape index: {}]
  %s3 = inlined_call_operand.vmem [shape: s32[1,512], index: 3, kind: input, shape index: {}]
  %s4 = inlined_call_operand.vmem [shape: f32[2,128], index: 4, kind: input, shape index: {}]
  %s5 = inlined_call_operand.vmem [shape: bf16[16,128], index: 5, kind: input, shape index: {}]
  %s6 = inlined_call_operand.vmem [shape: f32[1,128], index: 6, kind: input, shape index: {}]
  %s7 = inlined_call_operand.vmem [shape: bf16[16,128], index: 7, kind: input, shape index: {}]
  %s8 = inlined_call_operand.vmem [shape: f32[1,128], index: 8, kind: input, shape index: {}]
  %s9 = inlined_call_operand.vmem [shape: f32[2,1,128], index: 9, kind: input, shape index: {}]
  %s10 = inlined_call_operand.vmem [shape: f32[2,1,128], index: 10, kind: input, shape index: {}]
  %s11 = inlined_call_operand.vmem [shape: f32[2,1,128], index: 11, kind: input, shape index: {}]
  %s12 = inlined_call_operand.vmem [shape: bf16[2,128,128], index: 12, kind: input, shape index: {}]
  %s13 = inlined_call_operand.vmem [shape: f32[2,1,128], index: 13, kind: input, shape index: {}]
  %s14 = inlined_call_operand.vmem [shape: f32[2,1,128], index: 14, kind: input, shape index: {}]
  %s15 = inlined_call_operand.vmem [shape: f32[2,1,128], index: 15, kind: input, shape index: {}]
  %s16 = inlined_call_operand.vmem [shape: bf16[2,128,128], index: 16, kind: input, shape index: {}]
  %s17 = inlined_call_operand.vmem [shape: f32[2,1,128], index: 17, kind: input, shape index: {}]
  %s18 = inlined_call_operand.hbm [shape: f32[128,256], index: 18, kind: output, shape index: {0}]
  %s19 = inlined_call_operand.hbm [shape: f32[2,256], index: 19, kind: output, shape index: {1}]
  %20 = xla_tuple %s18, %s19
  %s21 = sld [smem:[#allocation0]]
  $region125: #{tpu_custom_call.1} parent=0
    _
  %s23 = ssub.s32 1, %s21
  %s24 = scalar_select 0, %s23, %s21
  $region1: #{tpu_custom_call.1} parent=0
    #allocation7 [shape = 'u8[131072]{0}', space=vmem, size = 0x20000, scoped, tag = 'output window, operand 0']
    #allocation8 [shape = 's32[2]{0}', space=sflag, size = 0x8, scoped, tag = 'scoped memory for tpu_custom_call.1']
    #allocation9 [shape = 'u8[2048]{0}', space=vmem, size = 0x800, scoped, tag = 'output window, operand 1']
    #allocation10 [shape = 's32[2]{0}', space=sflag, size = 0x8, scoped, tag = 'scoped memory for tpu_custom_call.1']
    %25 = vsyncpa [#allocation8], 0
    %s26 = scalar_lea.sflag [#allocation8], 1
    %27 = vsyncpa %s26, 0
    %28 = vsyncpa [#allocation10], 0
    %s29 = scalar_lea.sflag [#allocation10], 1
    %30 = vsyncpa %s29, 0
    loop: start=0, step=1, limit=6
    $region2: #{tpu_custom_call.1} parent=1 // loop_pre_header
      _
    $region3: #{tpu_custom_call.1} parent=1 // loop_header
      %s32 = sphi 0, %s36
      %p33 = scmp.ge.s32.totalorder %s32, 6
      %s39 = sphi 0, %s51
      %s40 = sphi 0, %s47
      %s41 = sphi 0, %s39
      %s42 = sphi 0, %s40
      %s43 = sphi 0, %s41
      %s44 = sphi 0, %s42
      %s52 = sphi 0, %s52
      %s54 = sphi 0, %s52
      %s55 = sphi 0, %s54
      %s69 = sphi 0, %s55
      %s75 = sphi 0, %s77
      %s78 = sphi 0, %s75
      %s79 = sphi 0, %s78
      %s95 = sphi 0, %s79
      %s101 = sphi 0, %s103
      %s104 = sphi 0, %s101
      %s105 = sphi 0, %s104
      %s121 = sphi 0, %s105
      %s127 = sphi 0, %s129
      %s130 = sphi 0, %s127
      %s131 = sphi 0, %s130
      %s147 = sphi 0, %s131
      %s151 = sphi 0, %s151
      %s153 = sphi 0, %s151
      %s154 = sphi 0, %s153
      %s168 = sphi 0, %s154
      %s172 = sphi 0, %s172
      %s174 = sphi 0, %s172
      %s175 = sphi 0, %s174
      %s189 = sphi 0, %s175
      %s193 = sphi 0, %s193
      %s195 = sphi 0, %s193
      %s196 = sphi 0, %s195
      %s210 = sphi 0, %s196
      %s214 = sphi 0, %s214
      %s216 = sphi 0, %s214
      %s217 = sphi 0, %s216
      %s231 = sphi 0, %s217
      %s235 = sphi 0, %s235
      %s237 = sphi 0, %s235
      %s238 = sphi 0, %s237
      %s252 = sphi 0, %s238
      %s258 = sphi 0, %s260
      %s261 = sphi 0, %s258
      %s262 = sphi 0, %s261
      %s278 = sphi 0, %s262
      %s284 = sphi 0, %s286
      %s287 = sphi 0, %s284
      %s288 = sphi 0, %s287
      %s304 = sphi 0, %s288
      %s310 = sphi 0, %s312
      %s313 = sphi 0, %s310
      %s314 = sphi 0, %s313
      %s330 = sphi 0, %s314
      %s336 = sphi 0, %s338
      %s339 = sphi 0, %s336
      %s340 = sphi 0, %s339
      %s356 = sphi 0, %s340
      %s362 = sphi 0, %s364
      %s365 = sphi 0, %s362
      %s366 = sphi 0, %s365
      %s382 = sphi 0, %s366
      %s388 = sphi 0, %s390
      %s391 = sphi 0, %s388
      %s392 = sphi 0, %s391
      %s408 = sphi 0, %s392
      %s414 = sphi 0, %s416
      %s417 = sphi 0, %s414
      %s418 = sphi 0, %s417
      %s434 = sphi 0, %s418
      %s440 = sphi 0, %s442
      %s443 = sphi 0, %s440
      %s444 = sphi 0, %s443
      %s460 = sphi 0, %s444
      %s466 = sphi 0, %s468
      %s469 = sphi 0, %s466
      %s470 = sphi 0, %s469
      %s486 = sphi 0, %s470
      %s492 = sphi 0, %s494
      %s495 = sphi 0, %s492
      %s496 = sphi 0, %s495
      %s512 = sphi 0, %s496
      %s518 = sphi 0, %s520
      %s521 = sphi 0, %s518
      %s522 = sphi 0, %s521
      %s538 = sphi 0, %s522
    $region4: #{tpu_custom_call.1} parent=1 // loop_header_branch
      %35 = sbr.rel (%p33) target = $region8
    $region5: #{tpu_custom_call.1} parent=1 // loop_body
      %s37 = ssub.s32 %s32, 1
      %s38 = ssub.s32 %s32, 2
      %s45 = sadd.s32 1, %s40
      %p46 = scmp.ge.s32.totalorder %s45, 2
      %s47 = scalar_select %p46, 0, %s45
      %s48 = sadd.s32 1, %s39
      %s49 = scalar_select %p46, %s48, %s39
      %p50 = scmp.ge.s32.totalorder %s49, 2
      %s51 = scalar_select %p50, 0, %s49
      %s53 = sadd.s32 %s52, 1
      %p56 = scmp.eq.s32.totalorder %s32, 3
      %p57 = scmp.ne.s32.totalorder %s52, %s54
      %p58 = scmp.eq.s32.totalorder %s32, 0
      %p59 = por %p57, %p58
      %p60 = scmp.ne.s32.totalorder %s52, %s54
      %p61 = scmp.eq.s32.totalorder %s37, 3
      %p62 = por %p60, %p61
      %p63 = scmp.ne.s32.totalorder %s54, %s55
      %p64 = scmp.eq.s32.totalorder %s37, 0
      %p65 = por %p63, %p64
      %p66 = scmp.ne.s32.totalorder %s54, %s55
      %p67 = scmp.eq.s32.totalorder %s38, 3
      %p68 = por %p66, %p67
      %p70 = scmp.ne.s32.totalorder %s55, %s69
      %p71 = scmp.eq.s32.totalorder %s38, 0
      %p72 = por %p70, %p71
      %s73 = ssub.s32 %s40, %s47
      %p74 = scmp.eq.s32.totalorder %s73, 0
      %s76 = sadd.s32 %s75, 1
      %s77 = scalar_select %p74, %s75, %s76
      %p80 = pneg %p74
      %p81 = scmp.eq.s32.totalorder %s32, 3
      %p82 = por %p80, %p81
      %p83 = scmp.ne.s32.totalorder %s75, %s78
      %p84 = scmp.eq.s32.totalorder %s32, 0
      %p85 = por %p83, %p84
      %p86 = scmp.ne.s32.totalorder %s75, %s78
      %p87 = scmp.eq.s32.totalorder %s37, 3
      %p88 = por %p86, %p87
      %p89 = scmp.ne.s32.totalorder %s78, %s79
      %p90 = scmp.eq.s32.totalorder %s37, 0
      %p91 = por %p89, %p90
      %p92 = scmp.ne.s32.totalorder %s78, %s79
      %p93 = scmp.eq.s32.totalorder %s38, 3
      %p94 = por %p92, %p93
      %p96 = scmp.ne.s32.totalorder %s79, %s95
      %p97 = scmp.eq.s32.totalorder %s38, 0
      %p98 = por %p96, %p97
      %s99 = ssub.s32 %s40, %s47
      %p100 = scmp.eq.s32.totalorder %s99, 0
      %s102 = sadd.s32 %s101, 1
      %s103 = scalar_select %p100, %s101, %s102
      %p106 = pneg %p100
      %p107 = scmp.eq.s32.totalorder %s32, 3
      %p108 = por %p106, %p107
      %p109 = scmp.ne.s32.totalorder %s101, %s104
      %p110 = scmp.eq.s32.totalorder %s32, 0
      %p111 = por %p109, %p110
      %p112 = scmp.ne.s32.totalorder %s101, %s104
      %p113 = scmp.eq.s32.totalorder %s37, 3
      %p114 = por %p112, %p113
      %p115 = scmp.ne.s32.totalorder %s104, %s105
      %p116 = scmp.eq.s32.totalorder %s37, 0
      %p117 = por %p115, %p116
      %p118 = scmp.ne.s32.totalorder %s104, %s105
      %p119 = scmp.eq.s32.totalorder %s38, 3
      %p120 = por %p118, %p119
      %p122 = scmp.ne.s32.totalorder %s105, %s121
      %p123 = scmp.eq.s32.totalorder %s38, 0
      %p124 = por %p122, %p123
      %s125 = ssub.s32 %s40, %s47
      %p126 = scmp.eq.s32.totalorder %s125, 0
      %s128 = sadd.s32 %s127, 1
      %s129 = scalar_select %p126, %s127, %s128
      %p132 = pneg %p126
      %p133 = scmp.eq.s32.totalorder %s32, 3
      %p134 = por %p132, %p133
      %p135 = scmp.ne.s32.totalorder %s127, %s130
      %p136 = scmp.eq.s32.totalorder %s32, 0
      %p137 = por %p135, %p136
      %p138 = scmp.ne.s32.totalorder %s127, %s130
      %p139 = scmp.eq.s32.totalorder %s37, 3
      %p140 = por %p138, %p139
      %p141 = scmp.ne.s32.totalorder %s130, %s131
      %p142 = scmp.eq.s32.totalorder %s37, 0
      %p143 = por %p141, %p142
      %p144 = scmp.ne.s32.totalorder %s130, %s131
      %p145 = scmp.eq.s32.totalorder %s38, 3
      %p146 = por %p144, %p145
      %p148 = scmp.ne.s32.totalorder %s131, %s147
      %p149 = scmp.eq.s32.totalorder %s38, 0
      %p150 = por %p148, %p149
      %s152 = sadd.s32 %s151, 1
      %p155 = scmp.eq.s32.totalorder %s32, 3
      %p156 = scmp.ne.s32.totalorder %s151, %s153
      %p157 = scmp.eq.s32.totalorder %s32, 0
      %p158 = por %p156, %p157
      %p159 = scmp.ne.s32.totalorder %s151, %s153
      %p160 = scmp.eq.s32.totalorder %s37, 3
      %p161 = por %p159, %p160
      %p162 = scmp.ne.s32.totalorder %s153, %s154
      %p163 = scmp.eq.s32.totalorder %s37, 0
      %p164 = por %p162, %p163
      %p165 = scmp.ne.s32.totalorder %s153, %s154
      %p166 = scmp.eq.s32.totalorder %s38, 3
      %p167 = por %p165, %p166
      %p169 = scmp.ne.s32.totalorder %s154, %s168
      %p170 = scmp.eq.s32.totalorder %s38, 0
      %p171 = por %p169, %p170
      %s173 = sadd.s32 %s172, 1
      %p176 = scmp.eq.s32.totalorder %s32, 3
      %p177 = scmp.ne.s32.totalorder %s172, %s174
      %p178 = scmp.eq.s32.totalorder %s32, 0
      %p179 = por %p177, %p178
      %p180 = scmp.ne.s32.totalorder %s172, %s174
      %p181 = scmp.eq.s32.totalorder %s37, 3
      %p182 = por %p180, %p181
      %p183 = scmp.ne.s32.totalorder %s174, %s175
      %p184 = scmp.eq.s32.totalorder %s37, 0
      %p185 = por %p183, %p184
      %p186 = scmp.ne.s32.totalorder %s174, %s175
      %p187 = scmp.eq.s32.totalorder %s38, 3
      %p188 = por %p186, %p187
      %p190 = scmp.ne.s32.totalorder %s175, %s189
      %p191 = scmp.eq.s32.totalorder %s38, 0
      %p192 = por %p190, %p191
      %s194 = sadd.s32 %s193, 1
      %p197 = scmp.eq.s32.totalorder %s32, 3
      %p198 = scmp.ne.s32.totalorder %s193, %s195
      %p199 = scmp.eq.s32.totalorder %s32, 0
      %p200 = por %p198, %p199
      %p201 = scmp.ne.s32.totalorder %s193, %s195
      %p202 = scmp.eq.s32.totalorder %s37, 3
      %p203 = por %p201, %p202
      %p204 = scmp.ne.s32.totalorder %s195, %s196
      %p205 = scmp.eq.s32.totalorder %s37, 0
      %p206 = por %p204, %p205
      %p207 = scmp.ne.s32.totalorder %s195, %s196
      %p208 = scmp.eq.s32.totalorder %s38, 3
      %p209 = por %p207, %p208
      %p211 = scmp.ne.s32.totalorder %s196, %s210
      %p212 = scmp.eq.s32.totalorder %s38, 0
      %p213 = por %p211, %p212
      %s215 = sadd.s32 %s214, 1
      %p218 = scmp.eq.s32.totalorder %s32, 3
      %p219 = scmp.ne.s32.totalorder %s214, %s216
      %p220 = scmp.eq.s32.totalorder %s32, 0
      %p221 = por %p219, %p220
      %p222 = scmp.ne.s32.totalorder %s214, %s216
      %p223 = scmp.eq.s32.totalorder %s37, 3
      %p224 = por %p222, %p223
      %p225 = scmp.ne.s32.totalorder %s216, %s217
      %p226 = scmp.eq.s32.totalorder %s37, 0
      %p227 = por %p225, %p226
      %p228 = scmp.ne.s32.totalorder %s216, %s217
      %p229 = scmp.eq.s32.totalorder %s38, 3
      %p230 = por %p228, %p229
      %p232 = scmp.ne.s32.totalorder %s217, %s231
      %p233 = scmp.eq.s32.totalorder %s38, 0
      %p234 = por %p232, %p233
      %s236 = sadd.s32 %s235, 1
      %p239 = scmp.eq.s32.totalorder %s32, 3
      %p240 = scmp.ne.s32.totalorder %s235, %s237
      %p241 = scmp.eq.s32.totalorder %s32, 0
      %p242 = por %p240, %p241
      %p243 = scmp.ne.s32.totalorder %s235, %s237
      %p244 = scmp.eq.s32.totalorder %s37, 3
      %p245 = por %p243, %p244
      %p246 = scmp.ne.s32.totalorder %s237, %s238
      %p247 = scmp.eq.s32.totalorder %s37, 0
      %p248 = por %p246, %p247
      %p249 = scmp.ne.s32.totalorder %s237, %s238
      %p250 = scmp.eq.s32.totalorder %s38, 3
      %p251 = por %p249, %p250
      %p253 = scmp.ne.s32.totalorder %s238, %s252
      %p254 = scmp.eq.s32.totalorder %s38, 0
      %p255 = por %p253, %p254
      %s256 = ssub.s32 %s39, %s51
      %p257 = scmp.eq.s32.totalorder %s256, 0
      %s259 = sadd.s32 %s258, 1
      %s260 = scalar_select %p257, %s258, %s259
      %p263 = pneg %p257
      %p264 = scmp.eq.s32.totalorder %s32, 3
      %p265 = por %p263, %p264
      %p266 = scmp.ne.s32.totalorder %s258, %s261
      %p267 = scmp.eq.s32.totalorder %s32, 0
      %p268 = por %p266, %p267
      %p269 = scmp.ne.s32.totalorder %s258, %s261
      %p270 = scmp.eq.s32.totalorder %s37, 3
      %p271 = por %p269, %p270
      %p272 = scmp.ne.s32.totalorder %s261, %s262
      %p273 = scmp.eq.s32.totalorder %s37, 0
      %p274 = por %p272, %p273
      %p275 = scmp.ne.s32.totalorder %s261, %s262
      %p276 = scmp.eq.s32.totalorder %s38, 3
      %p277 = por %p275, %p276
      %p279 = scmp.ne.s32.totalorder %s262, %s278
      %p280 = scmp.eq.s32.totalorder %s38, 0
      %p281 = por %p279, %p280
      %s282 = ssub.s32 %s39, %s51
      %p283 = scmp.eq.s32.totalorder %s282, 0
      %s285 = sadd.s32 %s284, 1
      %s286 = scalar_select %p283, %s284, %s285
      %p289 = pneg %p283
      %p290 = scmp.eq.s32.totalorder %s32, 3
      %p291 = por %p289, %p290
      %p292 = scmp.ne.s32.totalorder %s284, %s287
      %p293 = scmp.eq.s32.totalorder %s32, 0
      %p294 = por %p292, %p293
      %p295 = scmp.ne.s32.totalorder %s284, %s287
      %p296 = scmp.eq.s32.totalorder %s37, 3
      %p297 = por %p295, %p296
      %p298 = scmp.ne.s32.totalorder %s287, %s288
      %p299 = scmp.eq.s32.totalorder %s37, 0
      %p300 = por %p298, %p299
      %p301 = scmp.ne.s32.totalorder %s287, %s288
      %p302 = scmp.eq.s32.totalorder %s38, 3
      %p303 = por %p301, %p302
      %p305 = scmp.ne.s32.totalorder %s288, %s304
      %p306 = scmp.eq.s32.totalorder %s38, 0
      %p307 = por %p305, %p306
      %s308 = ssub.s32 %s39, %s51
      %p309 = scmp.eq.s32.totalorder %s308, 0
      %s311 = sadd.s32 %s310, 1
      %s312 = scalar_select %p309, %s310, %s311
      %p315 = pneg %p309
      %p316 = scmp.eq.s32.totalorder %s32, 3
      %p317 = por %p315, %p316
      %p318 = scmp.ne.s32.totalorder %s310, %s313
      %p319 = scmp.eq.s32.totalorder %s32, 0
      %p320 = por %p318, %p319
      %p321 = scmp.ne.s32.totalorder %s310, %s313
      %p322 = scmp.eq.s32.totalorder %s37, 3
      %p323 = por %p321, %p322
      %p324 = scmp.ne.s32.totalorder %s313, %s314
      %p325 = scmp.eq.s32.totalorder %s37, 0
      %p326 = por %p324, %p325
      %p327 = scmp.ne.s32.totalorder %s313, %s314
      %p328 = scmp.eq.s32.totalorder %s38, 3
      %p329 = por %p327, %p328
      %p331 = scmp.ne.s32.totalorder %s314, %s330
      %p332 = scmp.eq.s32.totalorder %s38, 0
      %p333 = por %p331, %p332
      %s334 = ssub.s32 %s39, %s51
      %p335 = scmp.eq.s32.totalorder %s334, 0
      %s337 = sadd.s32 %s336, 1
      %s338 = scalar_select %p335, %s336, %s337
      %p341 = pneg %p335
      %p342 = scmp.eq.s32.totalorder %s32, 3
      %p343 = por %p341, %p342
      %p344 = scmp.ne.s32.totalorder %s336, %s339
      %p345 = scmp.eq.s32.totalorder %s32, 0
      %p346 = por %p344, %p345
      %p347 = scmp.ne.s32.totalorder %s336, %s339
      %p348 = scmp.eq.s32.totalorder %s37, 3
      %p349 = por %p347, %p348
      %p350 = scmp.ne.s32.totalorder %s339, %s340
      %p351 = scmp.eq.s32.totalorder %s37, 0
      %p352 = por %p350, %p351
      %p353 = scmp.ne.s32.totalorder %s339, %s340
      %p354 = scmp.eq.s32.totalorder %s38, 3
      %p355 = por %p353, %p354
      %p357 = scmp.ne.s32.totalorder %s340, %s356
      %p358 = scmp.eq.s32.totalorder %s38, 0
      %p359 = por %p357, %p358
      %s360 = ssub.s32 %s39, %s51
      %p361 = scmp.eq.s32.totalorder %s360, 0
      %s363 = sadd.s32 %s362, 1
      %s364 = scalar_select %p361, %s362, %s363
      %p367 = pneg %p361
      %p368 = scmp.eq.s32.totalorder %s32, 3
      %p369 = por %p367, %p368
      %p370 = scmp.ne.s32.totalorder %s362, %s365
      %p371 = scmp.eq.s32.totalorder %s32, 0
      %p372 = por %p370, %p371
      %p373 = scmp.ne.s32.totalorder %s362, %s365
      %p374 = scmp.eq.s32.totalorder %s37, 3
      %p375 = por %p373, %p374
      %p376 = scmp.ne.s32.totalorder %s365, %s366
      %p377 = scmp.eq.s32.totalorder %s37, 0
      %p378 = por %p376, %p377
      %p379 = scmp.ne.s32.totalorder %s365, %s366
      %p380 = scmp.eq.s32.totalorder %s38, 3
      %p381 = por %p379, %p380
      %p383 = scmp.ne.s32.totalorder %s366, %s382
      %p384 = scmp.eq.s32.totalorder %s38, 0
      %p385 = por %p383, %p384
      %s386 = ssub.s32 %s39, %s51
      %p387 = scmp.eq.s32.totalorder %s386, 0
      %s389 = sadd.s32 %s388, 1
      %s390 = scalar_select %p387, %s388, %s389
      %p393 = pneg %p387
      %p394 = scmp.eq.s32.totalorder %s32, 3
      %p395 = por %p393, %p394
      %p396 = scmp.ne.s32.totalorder %s388, %s391
      %p397 = scmp.eq.s32.totalorder %s32, 0
      %p398 = por %p396, %p397
      %p399 = scmp.ne.s32.totalorder %s388, %s391
      %p400 = scmp.eq.s32.totalorder %s37, 3
      %p401 = por %p399, %p400
      %p402 = scmp.ne.s32.totalorder %s391, %s392
      %p403 = scmp.eq.s32.totalorder %s37, 0
      %p404 = por %p402, %p403
      %p405 = scmp.ne.s32.totalorder %s391, %s392
      %p406 = scmp.eq.s32.totalorder %s38, 3
      %p407 = por %p405, %p406
      %p409 = scmp.ne.s32.totalorder %s392, %s408
      %p410 = scmp.eq.s32.totalorder %s38, 0
      %p411 = por %p409, %p410
      %s412 = ssub.s32 %s39, %s51
      %p413 = scmp.eq.s32.totalorder %s412, 0
      %s415 = sadd.s32 %s414, 1
      %s416 = scalar_select %p413, %s414, %s415
      %p419 = pneg %p413
      %p420 = scmp.eq.s32.totalorder %s32, 3
      %p421 = por %p419, %p420
      %p422 = scmp.ne.s32.totalorder %s414, %s417
      %p423 = scmp.eq.s32.totalorder %s32, 0
      %p424 = por %p422, %p423
      %p425 = scmp.ne.s32.totalorder %s414, %s417
      %p426 = scmp.eq.s32.totalorder %s37, 3
      %p427 = por %p425, %p426
      %p428 = scmp.ne.s32.totalorder %s417, %s418
      %p429 = scmp.eq.s32.totalorder %s37, 0
      %p430 = por %p428, %p429
      %p431 = scmp.ne.s32.totalorder %s417, %s418
      %p432 = scmp.eq.s32.totalorder %s38, 3
      %p433 = por %p431, %p432
      %p435 = scmp.ne.s32.totalorder %s418, %s434
      %p436 = scmp.eq.s32.totalorder %s38, 0
      %p437 = por %p435, %p436
      %s438 = ssub.s32 %s39, %s51
      %p439 = scmp.eq.s32.totalorder %s438, 0
      %s441 = sadd.s32 %s440, 1
      %s442 = scalar_select %p439, %s440, %s441
      %p445 = pneg %p439
      %p446 = scmp.eq.s32.totalorder %s32, 3
      %p447 = por %p445, %p446
      %p448 = scmp.ne.s32.totalorder %s440, %s443
      %p449 = scmp.eq.s32.totalorder %s32, 0
      %p450 = por %p448, %p449
      %p451 = scmp.ne.s32.totalorder %s440, %s443
      %p452 = scmp.eq.s32.totalorder %s37, 3
      %p453 = por %p451, %p452
      %p454 = scmp.ne.s32.totalorder %s443, %s444
      %p455 = scmp.eq.s32.totalorder %s37, 0
      %p456 = por %p454, %p455
      %p457 = scmp.ne.s32.totalorder %s443, %s444
      %p458 = scmp.eq.s32.totalorder %s38, 3
      %p459 = por %p457, %p458
      %p461 = scmp.ne.s32.totalorder %s444, %s460
      %p462 = scmp.eq.s32.totalorder %s38, 0
      %p463 = por %p461, %p462
      %s464 = ssub.s32 %s39, %s51
      %p465 = scmp.eq.s32.totalorder %s464, 0
      %s467 = sadd.s32 %s466, 1
      %s468 = scalar_select %p465, %s466, %s467
      %p471 = pneg %p465
      %p472 = scmp.eq.s32.totalorder %s32, 3
      %p473 = por %p471, %p472
      %p474 = scmp.ne.s32.totalorder %s466, %s469
      %p475 = scmp.eq.s32.totalorder %s32, 0
      %p476 = por %p474, %p475
      %p477 = scmp.ne.s32.totalorder %s466, %s469
      %p478 = scmp.eq.s32.totalorder %s37, 3
      %p479 = por %p477, %p478
      %p480 = scmp.ne.s32.totalorder %s469, %s470
      %p481 = scmp.eq.s32.totalorder %s37, 0
      %p482 = por %p480, %p481
      %p483 = scmp.ne.s32.totalorder %s469, %s470
      %p484 = scmp.eq.s32.totalorder %s38, 3
      %p485 = por %p483, %p484
      %p487 = scmp.ne.s32.totalorder %s470, %s486
      %p488 = scmp.eq.s32.totalorder %s38, 0
      %p489 = por %p487, %p488
      %s490 = ssub.s32 %s39, %s51
      %p491 = scmp.eq.s32.totalorder %s490, 0
      %s493 = sadd.s32 %s492, 1
      %s494 = scalar_select %p491, %s492, %s493
      %p497 = pneg %p491
      %p498 = scmp.eq.s32.totalorder %s32, 3
      %p499 = por %p497, %p498
      %p500 = scmp.ne.s32.totalorder %s492, %s495
      %p501 = scmp.eq.s32.totalorder %s32, 0
      %p502 = por %p500, %p501
      %p503 = scmp.ne.s32.totalorder %s492, %s495
      %p504 = scmp.eq.s32.totalorder %s37, 3
      %p505 = por %p503, %p504
      %p506 = scmp.ne.s32.totalorder %s495, %s496
      %p507 = scmp.eq.s32.totalorder %s37, 0
      %p508 = por %p506, %p507
      %p509 = scmp.ne.s32.totalorder %s495, %s496
      %p510 = scmp.eq.s32.totalorder %s38, 3
      %p511 = por %p509, %p510
      %p513 = scmp.ne.s32.totalorder %s496, %s512
      %p514 = scmp.eq.s32.totalorder %s38, 0
      %p515 = por %p513, %p514
      %s516 = ssub.s32 %s39, %s51
      %p517 = scmp.eq.s32.totalorder %s516, 0
      %s519 = sadd.s32 %s518, 1
      %s520 = scalar_select %p517, %s518, %s519
      %p523 = pneg %p517
      %p524 = scmp.eq.s32.totalorder %s32, 3
      %p525 = por %p523, %p524
      %p526 = scmp.ne.s32.totalorder %s518, %s521
      %p527 = scmp.eq.s32.totalorder %s32, 0
      %p528 = por %p526, %p527
      %p529 = scmp.ne.s32.totalorder %s518, %s521
      %p530 = scmp.eq.s32.totalorder %s37, 3
      %p531 = por %p529, %p530
      %p532 = scmp.ne.s32.totalorder %s521, %s522
      %p533 = scmp.eq.s32.totalorder %s37, 0
      %p534 = por %p532, %p533
      %p535 = scmp.ne.s32.totalorder %s521, %s522
      %p536 = scmp.eq.s32.totalorder %s38, 3
      %p537 = por %p535, %p536
      %p539 = scmp.ne.s32.totalorder %s522, %s538
      %p540 = scmp.eq.s32.totalorder %s38, 0
      %p541 = por %p539, %p540
      %p542 = scmp.le.s32.totalorder 1, %s32
      %p543 = scmp.lt.s32.totalorder %s32, 5
      %p544 = pnand %p542, %p543
      %p545 = pneg %p544
      // Predicated region
      $region9: #{tpu_custom_call.1} parent=5 // pred_check
        _
      $region10: #{tpu_custom_call.1} parent=5 // pred_check_branch
        %547 = sbr.rel (%p544) target = $region12
      $region11: #{tpu_custom_call.1} parent=5 // pred_region
        %s548 = ssub.s32 %s32, 1
        // Predicated region
        $region13: #{tpu_custom_call.1} parent=11 // pred_check
          %p549 = pneg %p65
        $region14: #{tpu_custom_call.1} parent=11 // pred_check_branch
          %551 = sbr.rel (%p549) target = $region16
        $region15: #{tpu_custom_call.1} parent=11 // pred_region
          _
        $region16: #{tpu_custom_call.1} parent=11 // pred_fallthru
          _
        // Predicated region
        $region17: #{tpu_custom_call.1} parent=11 // pred_check
          %p552 = pneg %p164
        $region18: #{tpu_custom_call.1} parent=11 // pred_check_branch
          %554 = sbr.rel (%p552) target = $region20
        $region19: #{tpu_custom_call.1} parent=11 // pred_region
          _
        $region20: #{tpu_custom_call.1} parent=11 // pred_fallthru
          _
        // Predicated region
        $region21: #{tpu_custom_call.1} parent=11 // pred_check
          %p555 = pneg %p185
        $region22: #{tpu_custom_call.1} parent=11 // pred_check_branch
          %557 = sbr.rel (%p555) target = $region24
        $region23: #{tpu_custom_call.1} parent=11 // pred_region
          _
        $region24: #{tpu_custom_call.1} parent=11 // pred_fallthru
          _
        // Predicated region
        $region25: #{tpu_custom_call.1} parent=11 // pred_check
          %p558 = pneg %p206
        $region26: #{tpu_custom_call.1} parent=11 // pred_check_branch
          %560 = sbr.rel (%p558) target = $region28
        $region27: #{tpu_custom_call.1} parent=11 // pred_region
          _
        $region28: #{tpu_custom_call.1} parent=11 // pred_fallthru
          _
        // Predicated region
        $region29: #{tpu_custom_call.1} parent=11 // pred_check
          %p561 = pneg %p227
        $region30: #{tpu_custom_call.1} parent=11 // pred_check_branch
          %563 = sbr.rel (%p561) target = $region32
        $region31: #{tpu_custom_call.1} parent=11 // pred_region
          _
        $region32: #{tpu_custom_call.1} parent=11 // pred_fallthru
          _
        // Predicated region
        $region33: #{tpu_custom_call.1} parent=11 // pred_check
          %p564 = pneg %p248
        $region34: #{tpu_custom_call.1} parent=11 // pred_check_branch
          %566 = sbr.rel (%p564) target = $region36
        $region35: #{tpu_custom_call.1} parent=11 // pred_region
          _
        $region36: #{tpu_custom_call.1} parent=11 // pred_fallthru
          _
      $region12: #{tpu_custom_call.1} parent=5 // pred_fallthru
        _
      %p567 = scmp.lt.s32.totalorder %s32, 4
      // Predicated region
      $region37: #{tpu_custom_call.1} parent=5 // pred_check
        %p568 = pneg %p567
      $region38: #{tpu_custom_call.1} parent=5 // pred_check_branch
        %570 = sbr.rel (%p568) target = $region40
      $region39: #{tpu_custom_call.1} parent=5 // pred_region
        // Predicated region
        $region41: #{tpu_custom_call.1} parent=39 // pred_check
          %p571 = pneg %p85
        $region42: #{tpu_custom_call.1} parent=39 // pred_check_branch
          %573 = sbr.rel (%p571) target = $region44
        $region43: #{tpu_custom_call.1} parent=39 // pred_region
          %s574 = smul.u32 32, %s40
          %p575 = scmp.lt.s32.totalorder %s574, 63
          %s576 = scalar_select %p575, %s574, 63
          %s577 = smul.addr %s576, 4
          %s578 = scalar_lea.vmem %s1, %s577
          %s579 = smul.u32 32, %s40
        $region44: #{tpu_custom_call.1} parent=39 // pred_fallthru
          _
        // Predicated region
        $region45: #{tpu_custom_call.1} parent=39 // pred_check
          %p580 = pneg %p111
        $region46: #{tpu_custom_call.1} parent=39 // pred_check_branch
          %582 = sbr.rel (%p580) target = $region48
        $region47: #{tpu_custom_call.1} parent=39 // pred_region
          %s583 = smul.u32 32, %s40
          %p584 = scmp.lt.s32.totalorder %s583, 63
          %s585 = scalar_select %p584, %s583, 63
          %s586 = smul.addr %s585, 8
          %s587 = scalar_lea.vmem %s2, %s586
          %s588 = smul.u32 32, %s40
        $region48: #{tpu_custom_call.1} parent=39 // pred_fallthru
          _
        // Predicated region
        $region49: #{tpu_custom_call.1} parent=39 // pred_check
          %p589 = pneg %p137
        $region50: #{tpu_custom_call.1} parent=39 // pred_check_branch
          %591 = sbr.rel (%p589) target = $region52
        $region51: #{tpu_custom_call.1} parent=39 // pred_region
          %s592 = smul.u32 2, %s40
          %p593 = scmp.lt.s32.totalorder %s592, 3
          %s594 = scalar_select %p593, %s592, 3
          %s595 = scalar_lea.vmem %s3, %s594
          %s596 = smul.u32 2, %s40
        $region52: #{tpu_custom_call.1} parent=39 // pred_fallthru
          _
        // Predicated region
        $region53: #{tpu_custom_call.1} parent=39 // pred_check
          %p597 = pneg %p268
        $region54: #{tpu_custom_call.1} parent=39 // pred_check_branch
          %599 = sbr.rel (%p597) target = $region56
        $region55: #{tpu_custom_call.1} parent=39 // pred_region
          %p600 = scmp.lt.s32.totalorder %s39, 1
          %s601 = scalar_select %p600, %s39, 1
          %s602 = scalar_lea.vmem %s9, %s601
        $region56: #{tpu_custom_call.1} parent=39 // pred_fallthru
          _
        // Predicated region
        $region57: #{tpu_custom_call.1} parent=39 // pred_check
          %p603 = pneg %p294
        $region58: #{tpu_custom_call.1} parent=39 // pred_check_branch
          %605 = sbr.rel (%p603) target = $region60
        $region59: #{tpu_custom_call.1} parent=39 // pred_region
          %p606 = scmp.lt.s32.totalorder %s39, 1
          %s607 = scalar_select %p606, %s39, 1
          %s608 = scalar_lea.vmem %s10, %s607
        $region60: #{tpu_custom_call.1} parent=39 // pred_fallthru
          _
        // Predicated region
        $region61: #{tpu_custom_call.1} parent=39 // pred_check
          %p609 = pneg %p320
        $region62: #{tpu_custom_call.1} parent=39 // pred_check_branch
          %611 = sbr.rel (%p609) target = $region64
        $region63: #{tpu_custom_call.1} parent=39 // pred_region
          %p612 = scmp.lt.s32.totalorder %s39, 1
          %s613 = scalar_select %p612, %s39, 1
          %s614 = scalar_lea.vmem %s11, %s613
        $region64: #{tpu_custom_call.1} parent=39 // pred_fallthru
          _
        // Predicated region
        $region65: #{tpu_custom_call.1} parent=39 // pred_check
          %p615 = pneg %p346
        $region66: #{tpu_custom_call.1} parent=39 // pred_check_branch
          %617 = sbr.rel (%p615) target = $region68
        $region67: #{tpu_custom_call.1} parent=39 // pred_region
          %p618 = scmp.lt.s32.totalorder %s39, 1
          %s619 = scalar_select %p618, %s39, 1
          %s620 = smul.addr %s619, 16
          %s621 = smul.addr %s620, 4
          %s622 = scalar_lea.vmem %s12, %s621
        $region68: #{tpu_custom_call.1} parent=39 // pred_fallthru
          _
        // Predicated region
        $region69: #{tpu_custom_call.1} parent=39 // pred_check
          %p623 = pneg %p372
        $region70: #{tpu_custom_call.1} parent=39 // pred_check_branch
          %625 = sbr.rel (%p623) target = $region72
        $region71: #{tpu_custom_call.1} parent=39 // pred_region
          %p626 = scmp.lt.s32.totalorder %s39, 1
          %s627 = scalar_select %p626, %s39, 1
          %s628 = scalar_lea.vmem %s13, %s627
        $region72: #{tpu_custom_call.1} parent=39 // pred_fallthru
          _
        // Predicated region
        $region73: #{tpu_custom_call.1} parent=39 // pred_check
          %p629 = pneg %p398
        $region74: #{tpu_custom_call.1} parent=39 // pred_check_branch
          %631 = sbr.rel (%p629) target = $region76
        $region75: #{tpu_custom_call.1} parent=39 // pred_region
          %p632 = scmp.lt.s32.totalorder %s39, 1
          %s633 = scalar_select %p632, %s39, 1
          %s634 = scalar_lea.vmem %s14, %s633
        $region76: #{tpu_custom_call.1} parent=39 // pred_fallthru
          _
        // Predicated region
        $region77: #{tpu_custom_call.1} parent=39 // pred_check
          %p635 = pneg %p424
        $region78: #{tpu_custom_call.1} parent=39 // pred_check_branch
          %637 = sbr.rel (%p635) target = $region80
        $region79: #{tpu_custom_call.1} parent=39 // pred_region
          %p638 = scmp.lt.s32.totalorder %s39, 1
          %s639 = scalar_select %p638, %s39, 1
          %s640 = scalar_lea.vmem %s15, %s639
        $region80: #{tpu_custom_call.1} parent=39 // pred_fallthru
          _
        // Predicated region
        $region81: #{tpu_custom_call.1} parent=39 // pred_check
          %p641 = pneg %p450
        $region82: #{tpu_custom_call.1} parent=39 // pred_check_branch
          %643 = sbr.rel (%p641) target = $region84
        $region83: #{tpu_custom_call.1} parent=39 // pred_region
          %p644 = scmp.lt.s32.totalorder %s39, 1
          %s645 = scalar_select %p644, %s39, 1
          %s646 = smul.addr %s645, 16
          %s647 = smul.addr %s646, 4
          %s648 = scalar_lea.vmem %s16, %s647
        $region84: #{tpu_custom_call.1} parent=39 // pred_fallthru
          _
        // Predicated region
        $region85: #{tpu_custom_call.1} parent=39 // pred_check
          %p649 = pneg %p476
        $region86: #{tpu_custom_call.1} parent=39 // pred_check_branch
          %651 = sbr.rel (%p649) target = $region88
        $region87: #{tpu_custom_call.1} parent=39 // pred_region
          %p652 = scmp.lt.s32.totalorder %s39, 1
          %s653 = scalar_select %p652, %s39, 1
          %s654 = scalar_lea.vmem %s17, %s653
        $region88: #{tpu_custom_call.1} parent=39 // pred_fallthru
          _
      $region40: #{tpu_custom_call.1} parent=5 // pred_fallthru
        _
      %p655 = scmp.le.s32.totalorder 1, %s32
      %p656 = scmp.lt.s32.totalorder %s32, 5
      %p657 = pnand %p655, %p656
      %p658 = pneg %p657
      // Predicated region
      $region89: #{tpu_custom_call.1} parent=5 // pred_check
        _
      $region90: #{tpu_custom_call.1} parent=5 // pred_check_branch
        %660 = sbr.rel (%p657) target = $region92
      $region91: #{tpu_custom_call.1} parent=5 // pred_region
        %s661 = ssub.s32 %s32, 1
        %p662 = pneg %p65
        %p663 = pneg %p62
        %s664 = smul.u32 32, %s42
        %p665 = scmp.lt.s32.totalorder %s664, 63
        %s666 = scalar_select %p665, %s664, 63
        %s667 = smul.addr %s666, 4
        %s668 = scalar_lea.vmem %s1, %s667
        %p669 = pneg %p91
        %p670 = pneg %p88
        %s671 = smul.u32 32, %s42
        %p672 = scmp.lt.s32.totalorder %s671, 63
        %s673 = scalar_select %p672, %s671, 63
        %s674 = smul.addr %s673, 8
        %s675 = scalar_lea.vmem %s2, %s674
        %p676 = pneg %p117
        %p677 = pneg %p114
        %s678 = smul.u32 2, %s42
        %p679 = scmp.lt.s32.totalorder %s678, 3
        %s680 = scalar_select %p679, %s678, 3
        %s681 = scalar_lea.vmem %s3, %s680
        %p682 = pneg %p143
        %p683 = pneg %p140
        %p684 = pneg %p164
        %p685 = pneg %p161
        %p686 = pneg %p185
        %p687 = pneg %p182
        %p688 = pneg %p206
        %p689 = pneg %p203
        %p690 = pneg %p227
        %p691 = pneg %p224
        %p692 = pneg %p248
        %p693 = pneg %p245
        %p694 = scmp.lt.s32.totalorder %s41, 1
        %s695 = scalar_select %p694, %s41, 1
        %s696 = scalar_lea.vmem %s9, %s695
        %p697 = pneg %p274
        %p698 = pneg %p271
        %p699 = scmp.lt.s32.totalorder %s41, 1
        %s700 = scalar_select %p699, %s41, 1
        %s701 = scalar_lea.vmem %s10, %s700
        %p702 = pneg %p300
        %p703 = pneg %p297
        %p704 = scmp.lt.s32.totalorder %s41, 1
        %s705 = scalar_select %p704, %s41, 1
        %s706 = scalar_lea.vmem %s11, %s705
        %p707 = pneg %p326
        %p708 = pneg %p323
        %p709 = scmp.lt.s32.totalorder %s41, 1
        %s710 = scalar_select %p709, %s41, 1
        %s711 = smul.addr %s710, 16
        %s712 = smul.addr %s711, 4
        %s713 = scalar_lea.vmem %s12, %s712
        %p714 = pneg %p352
        %p715 = pneg %p349
        %p716 = scmp.lt.s32.totalorder %s41, 1
        %s717 = scalar_select %p716, %s41, 1
        %s718 = scalar_lea.vmem %s13, %s717
        %p719 = pneg %p378
        %p720 = pneg %p375
        %p721 = scmp.lt.s32.totalorder %s41, 1
        %s722 = scalar_select %p721, %s41, 1
        %s723 = scalar_lea.vmem %s14, %s722
        %p724 = pneg %p404
        %p725 = pneg %p401
        %p726 = scmp.lt.s32.totalorder %s41, 1
        %s727 = scalar_select %p726, %s41, 1
        %s728 = scalar_lea.vmem %s15, %s727
        %p729 = pneg %p430
        %p730 = pneg %p427
        %p731 = scmp.lt.s32.totalorder %s41, 1
        %s732 = scalar_select %p731, %s41, 1
        %s733 = smul.addr %s732, 16
        %s734 = smul.addr %s733, 4
        %s735 = scalar_lea.vmem %s16, %s734
        %p736 = pneg %p456
        %p737 = pneg %p453
        %p738 = scmp.lt.s32.totalorder %s41, 1
        %s739 = scalar_select %p738, %s41, 1
        %s740 = scalar_lea.vmem %s17, %s739
        %p741 = pneg %p482
        %p742 = pneg %p479
        %p743 = pneg %p508
        %p744 = pneg %p505
        %s745 = sand.u32 %s495, 1
        %s746 = scalar_lea.sflag [#allocation8], %s745
        %s747 = sand.u32 %s495, 1
        %s748 = smul.addr %s747, 128
        %s749 = scalar_lea.vmem [#allocation7], %s748
        %p750 = pneg %p534
        %p751 = pneg %p531
        %s752 = sand.u32 %s521, 1
        %s753 = scalar_lea.sflag [#allocation10], %s752
        %s754 = sand.u32 %s521, 1
        %s755 = smul.addr %s754, 2
        %s756 = scalar_lea.vmem [#allocation9], %s755
        %s757 = smul.u32 32, %s42
        %p758 = scmp.lt.s32.totalorder %s757, 63
        %s759 = scalar_select %p758, %s757, 63
        %s760 = smul.addr %s759, 4
        %s761 = scalar_lea.vmem %s1, %s760
        %s762 = smul.u32 32, %s42
        %s763 = smul.u32 32, %s42
        %p764 = scmp.lt.s32.totalorder %s763, 63
        %s765 = scalar_select %p764, %s763, 63
        %s766 = smul.addr %s765, 8
        %s767 = scalar_lea.vmem %s2, %s766
        %s768 = smul.u32 32, %s42
        %s769 = smul.u32 2, %s42
        %p770 = scmp.lt.s32.totalorder %s769, 3
        %s771 = scalar_select %p770, %s769, 3
        %s772 = scalar_lea.vmem %s3, %s771
        %s773 = smul.u32 2, %s42
        %p774 = scmp.lt.s32.totalorder %s41, 1
        %s775 = scalar_select %p774, %s41, 1
        %s776 = scalar_lea.vmem %s9, %s775
        %p777 = scmp.lt.s32.totalorder %s41, 1
        %s778 = scalar_select %p777, %s41, 1
        %s779 = scalar_lea.vmem %s10, %s778
        %p780 = scmp.lt.s32.totalorder %s41, 1
        %s781 = scalar_select %p780, %s41, 1
        %s782 = scalar_lea.vmem %s11, %s781
        %p783 = scmp.lt.s32.totalorder %s41, 1
        %s784 = scalar_select %p783, %s41, 1
        %s785 = smul.addr %s784, 16
        %s786 = smul.addr %s785, 4
        %s787 = scalar_lea.vmem %s12, %s786
        %p788 = scmp.lt.s32.totalorder %s41, 1
        %s789 = scalar_select %p788, %s41, 1
        %s790 = scalar_lea.vmem %s13, %s789
        %p791 = scmp.lt.s32.totalorder %s41, 1
        %s792 = scalar_select %p791, %s41, 1
        %s793 = scalar_lea.vmem %s14, %s792
        %p794 = scmp.lt.s32.totalorder %s41, 1
        %s795 = scalar_select %p794, %s41, 1
        %s796 = scalar_lea.vmem %s15, %s795
        %p797 = scmp.lt.s32.totalorder %s41, 1
        %s798 = scalar_select %p797, %s41, 1
        %s799 = smul.addr %s798, 16
        %s800 = smul.addr %s799, 4
        %s801 = scalar_lea.vmem %s16, %s800
        %p802 = scmp.lt.s32.totalorder %s41, 1
        %s803 = scalar_select %p802, %s41, 1
        %s804 = scalar_lea.vmem %s17, %s803
        %p806 = scmp.eq.s32.totalorder %s41, 0
        %p807 = scmp.eq.s32.totalorder %s42, 0
        %p808 = pnand %p806, %p807
        %p809 = pneg %p808
        // Predicated region
        $region93: #{tpu_custom_call.1} parent=91 // pred_check
          _
        $region94: #{tpu_custom_call.1} parent=91 // pred_check_branch
          %811 = sbr.rel (%p808) target = $region96
        $region95: #{tpu_custom_call.1} parent=91 // pred_region
          %v812 = vld [vmem:[%s0] sm:$0xf]
          %v813 = vld [vmem:[%s0 + $0x4] sm:$0xf]
          %v814 = vld [vmem:[%s0 + $0x8] sm:$0xf]
          %v815 = vld [vmem:[%s0 + $0xc] sm:$0xf]
          %v816 = vld [vmem:[%s0 + $0x10] sm:$0xf]
          %v817 = vld [vmem:[%s0 + $0x14] sm:$0xf]
          %v818 = vld [vmem:[%s0 + $0x18] sm:$0xf]
          %v819 = vld [vmem:[%s0 + $0x1c] sm:$0xf]
          %v820 = vld [vmem:[%s0 + $0x20] sm:$0xf]
          %v821 = vld [vmem:[%s0 + $0x24] sm:$0xf]
          %v822 = vld [vmem:[%s0 + $0x28] sm:$0xf]
          %v823 = vld [vmem:[%s0 + $0x2c] sm:$0xf]
          %v824 = vld [vmem:[%s0 + $0x30] sm:$0xf]
          %v825 = vld [vmem:[%s0 + $0x34] sm:$0xf]
          %v826 = vld [vmem:[%s0 + $0x38] sm:$0xf]
          %v827 = vld [vmem:[%s0 + $0x3c] sm:$0xf]
          %v828 = vld [vmem:[%s5] sm:$0xf]
          %v829 = vld [vmem:[%s5 + $0x4] sm:$0xf]
          %v830 = vld [vmem:[%s6] sm:$0x1]
          %v832 = vlaneseq
          %v833 = vshrl.u32 %v832, 7
          %v834 = vsub.s32 0, %v833
          %v835 = vrot.slane %v830, %v834
          %v853 = vunpack.c.l.b16 %v812
          %v854 = vunpack.c.l.b16 %v813
          %v855 = vunpack.c.l.b16 %v814
          %v856 = vunpack.c.l.b16 %v815
          %v857 = vunpack.c.l.b16 %v816
          %v858 = vunpack.c.l.b16 %v817
          %v859 = vunpack.c.l.b16 %v818
          %v860 = vunpack.c.l.b16 %v819
          %v861 = vunpack.c.l.b16 %v820
          %v862 = vunpack.c.l.b16 %v821
          %v863 = vunpack.c.l.b16 %v822
          %v864 = vunpack.c.l.b16 %v823
          %v865 = vunpack.c.l.b16 %v824
          %v866 = vunpack.c.l.b16 %v825
          %v867 = vunpack.c.l.b16 %v826
          %v868 = vunpack.c.l.b16 %v827
          %v869 = vpack.c.b16 %v854, %v853
          %v870 = vpack.c.b16 %v856, %v855
          %v871 = vpack.c.b16 %v858, %v857
          %v872 = vpack.c.b16 %v860, %v859
          %v873 = vpack.c.b16 %v862, %v861
          %v874 = vpack.c.b16 %v864, %v863
          %v875 = vpack.c.b16 %v866, %v865
          %v876 = vpack.c.b16 %v868, %v867
          %v879 = vunpack.c.l.b16 %v828
          %v880 = vunpack.c.l.b16 %v829
          %v881 = vpack.c.b16 %v880, %v879
          %vm883 = vcmask 130048
          %v885 = vsel %vm883, %v869, 0
          %v888 = vsel %vm883, %v870, 0
          %v891 = vsel %vm883, %v871, 0
          %v894 = vsel %vm883, %v872, 0
          %v897 = vsel %vm883, %v873, 0
          %v900 = vsel %vm883, %v874, 0
          %v903 = vsel %vm883, %v875, 0
          %v906 = vsel %vm883, %v876, 0
          %908 = vmatprep.subr.bf16.mxu0 0
          %909 = vmatpush1.bf16.msra.mxu0 %v881
          %910 = vmatprep.subr.bf16.mxu0 0
          %911 = vmatpush1.bf16.msra.mxu0 0
          %912 = vmatprep.subr.bf16.mxu0 0
          %913 = vmatpush1.bf16.msra.mxu0 0
          %914 = vmatprep.subr.bf16.mxu0 0
          %915 = vmatpush1.bf16.msra.mxu0 0
          %916 = vmatprep.subr.bf16.mxu0 0
          %917 = vmatpush1.bf16.msra.mxu0 0
          %918 = vmatprep.subr.bf16.mxu0 0
          %919 = vmatpush1.bf16.msra.mxu0 0
          %920 = vmatprep.subr.bf16.mxu0 0
          %921 = vmatpush1.bf16.msra.mxu0 0
          %922 = vmatprep.subr.bf16.mxu0 0
          %923 = vmatpush1.bf16.msra.mxu0 0
          %924 = vmatprep.subr.bf16.mxu0 0
          %925 = vmatpush1.bf16.msra.mxu0 0
          %926 = vmatprep.subr.bf16.mxu0 0
          %927 = vmatpush1.bf16.msra.mxu0 0
          %928 = vmatprep.subr.bf16.mxu0 0
          %929 = vmatpush1.bf16.msra.mxu0 0
          %930 = vmatprep.subr.bf16.mxu0 0
          %931 = vmatpush1.bf16.msra.mxu0 0
          %932 = vmatprep.subr.bf16.mxu0 0
          %933 = vmatpush1.bf16.msra.mxu0 0
          %934 = vmatprep.subr.bf16.mxu0 0
          %935 = vmatpush1.bf16.msra.mxu0 0
          %936 = vmatprep.subr.bf16.mxu0 0
          %937 = vmatpush1.bf16.msra.mxu0 0
          %938 = vmatprep.subr.bf16.mxu0 0
          %939 = vmatpush1.bf16.msra.mxu0 0
          %940 = vmatprep.mubr.bf16.mxu0 0
          %941 = vmatmul.mubr.bf16.gmra.mrb[0].mxu0 %v885
          %v942 = vpop.f32.mrb[0].mxu0
          %v943 = vadd.f32 %v835, %v942
          %v944 = vpop.f32.mrb[0].mxu0
          %v945 = vpop.f32.mrb[0].mxu0
          %v946 = vadd.f32 %v835, %v945
          %v947 = vpop.f32.mrb[0].mxu0
          %948 = vmatprep.mubr.bf16.mxu0 0
          %949 = vmatmul.mubr.bf16.gmra.mrb[0].mxu0 %v888
          %v950 = vpop.f32.mrb[0].mxu0
          %v951 = vadd.f32 %v835, %v950
          %v952 = vpop.f32.mrb[0].mxu0
          %v953 = vpop.f32.mrb[0].mxu0
          %v954 = vadd.f32 %v835, %v953
          %v955 = vpop.f32.mrb[0].mxu0
          %956 = vmatprep.mubr.bf16.mxu0 0
          %957 = vmatmul.mubr.bf16.gmra.mrb[0].mxu0 %v891
          %v958 = vpop.f32.mrb[0].mxu0
          %v959 = vadd.f32 %v835, %v958
          %v960 = vpop.f32.mrb[0].mxu0
          %v961 = vpop.f32.mrb[0].mxu0
          %v962 = vadd.f32 %v835, %v961
          %v963 = vpop.f32.mrb[0].mxu0
          %964 = vmatprep.mubr.bf16.mxu0 0
          %965 = vmatmul.mubr.bf16.gmra.mrb[0].mxu0 %v894
          %v966 = vpop.f32.mrb[0].mxu0
          %v967 = vadd.f32 %v835, %v966
          %v968 = vpop.f32.mrb[0].mxu0
          %v969 = vpop.f32.mrb[0].mxu0
          %v970 = vadd.f32 %v835, %v969
          %v971 = vpop.f32.mrb[0].mxu0
          %972 = vmatprep.mubr.bf16.mxu0 0
          %973 = vmatmul.mubr.bf16.gmra.mrb[0].mxu0 %v897
          %v974 = vpop.f32.mrb[0].mxu0
          %v975 = vadd.f32 %v835, %v974
          %v976 = vpop.f32.mrb[0].mxu0
          %v977 = vpop.f32.mrb[0].mxu0
          %v978 = vadd.f32 %v835, %v977
          %v979 = vpop.f32.mrb[0].mxu0
          %980 = vmatprep.mubr.bf16.mxu0 0
          %981 = vmatmul.mubr.bf16.gmra.mrb[0].mxu0 %v900
          %v982 = vpop.f32.mrb[0].mxu0
          %v983 = vadd.f32 %v835, %v982
          %v984 = vpop.f32.mrb[0].mxu0
          %v985 = vpop.f32.mrb[0].mxu0
          %v986 = vadd.f32 %v835, %v985
          %v987 = vpop.f32.mrb[0].mxu0
          %988 = vmatprep.mubr.bf16.mxu0 0
          %989 = vmatmul.mubr.bf16.gmra.mrb[0].mxu0 %v903
          %v990 = vpop.f32.mrb[0].mxu0
          %v991 = vadd.f32 %v835, %v990
          %v992 = vpop.f32.mrb[0].mxu0
          %v993 = vpop.f32.mrb[0].mxu0
          %v994 = vadd.f32 %v835, %v993
          %v995 = vpop.f32.mrb[0].mxu0
          %996 = vmatprep.mubr.bf16.mxu0 0
          %997 = vmatmul.mubr.bf16.gmra.mrb[0].mxu0 %v906
          %v998 = vpop.f32.mrb[0].mxu0
          %v999 = vadd.f32 %v835, %v998
          %v1000 = vpop.f32.mrb[0].mxu0
          %v1001 = vpop.f32.mrb[0].mxu0
          %v1002 = vadd.f32 %v835, %v1001
          %v1003 = vpop.f32.mrb[0].mxu0
          %1004 = vdwg.mxu0
          %1005 = vst [vmem:[#allocation2] sm:$0xff] %v943
          %1006 = vst [vmem:[#allocation2 + $0x8] sm:$0xff] %v946
          %1007 = vst [vmem:[#allocation2 + $0x10] sm:$0xff] %v951
          %1008 = vst [vmem:[#allocation2 + $0x18] sm:$0xff] %v954
          %1009 = vst [vmem:[#allocation2 + $0x20] sm:$0xff] %v959
          %1010 = vst [vmem:[#allocation2 + $0x28] sm:$0xff] %v962
          %1011 = vst [vmem:[#allocation2 + $0x30] sm:$0xff] %v967
          %1012 = vst [vmem:[#allocation2 + $0x38] sm:$0xff] %v970
          %1013 = vst [vmem:[#allocation2 + $0x40] sm:$0xff] %v975
          %1014 = vst [vmem:[#allocation2 + $0x48] sm:$0xff] %v978
          %1015 = vst [vmem:[#allocation2 + $0x50] sm:$0xff] %v983
          %1016 = vst [vmem:[#allocation2 + $0x58] sm:$0xff] %v986
          %1017 = vst [vmem:[#allocation2 + $0x60] sm:$0xff] %v991
          %1018 = vst [vmem:[#allocation2 + $0x68] sm:$0xff] %v994
          %1019 = vst [vmem:[#allocation2 + $0x70] sm:$0xff] %v999
          %1020 = vst [vmem:[#allocation2 + $0x78] sm:$0xff] %v1002
        $region96: #{tpu_custom_call.1} parent=91 // pred_fallthru
          _
        // Predicated region
        $region97: #{tpu_custom_call.1} parent=91 // pred_check
          %p1021 = pneg %p807
        $region98: #{tpu_custom_call.1} parent=91 // pred_check_branch
          %1023 = sbr.rel (%p1021) target = $region100
        $region99: #{tpu_custom_call.1} parent=91 // pred_region
          %v1024 = vld [vmem:[#allocation2] sm:$0xff]
          %v1025 = vld [vmem:[#allocation2 + $0x8] sm:$0xff]
          %v1026 = vld [vmem:[#allocation2 + $0x10] sm:$0xff]
          %v1027 = vld [vmem:[#allocation2 + $0x18] sm:$0xff]
          %v1028 = vld [vmem:[#allocation2 + $0x20] sm:$0xff]
          %v1029 = vld [vmem:[#allocation2 + $0x28] sm:$0xff]
          %v1030 = vld [vmem:[#allocation2 + $0x30] sm:$0xff]
          %v1031 = vld [vmem:[#allocation2 + $0x38] sm:$0xff]
          %v1032 = vld [vmem:[#allocation2 + $0x40] sm:$0xff]
          %v1033 = vld [vmem:[#allocation2 + $0x48] sm:$0xff]
          %v1034 = vld [vmem:[#allocation2 + $0x50] sm:$0xff]
          %v1035 = vld [vmem:[#allocation2 + $0x58] sm:$0xff]
          %v1036 = vld [vmem:[#allocation2 + $0x60] sm:$0xff]
          %v1037 = vld [vmem:[#allocation2 + $0x68] sm:$0xff]
          %v1038 = vld [vmem:[#allocation2 + $0x70] sm:$0xff]
          %v1039 = vld [vmem:[#allocation2 + $0x78] sm:$0xff]
          %v1040 = vld [vmem:[%s779] sm:$0x1]
          %v1041 = vld [vmem:[%s782] sm:$0x1]
          %1042 = vadd.xlane.f32.xlu0 %v1024
          %v1043 = vpop.xlane.xlu0 %1042
          %1044 = vadd.xlane.f32.xlu0 %v1025
          %v1045 = vpop.xlane.xlu0 %1044
          %1046 = vadd.xlane.f32.xlu0 %v1026
          %v1047 = vpop.xlane.xlu0 %1046
          %1048 = vadd.xlane.f32.xlu0 %v1027
          %v1049 = vpop.xlane.xlu0 %1048
          %1050 = vadd.xlane.f32.xlu0 %v1028
          %v1051 = vpop.xlane.xlu0 %1050
          %1052 = vadd.xlane.f32.xlu0 %v1029
          %v1053 = vpop.xlane.xlu0 %1052
          %1054 = vadd.xlane.f32.xlu0 %v1030
          %v1055 = vpop.xlane.xlu0 %1054
          %1056 = vadd.xlane.f32.xlu0 %v1031
          %v1057 = vpop.xlane.xlu0 %1056
          %1058 = vadd.xlane.f32.xlu0 %v1032
          %v1059 = vpop.xlane.xlu0 %1058
          %1060 = vadd.xlane.f32.xlu0 %v1033
          %v1061 = vpop.xlane.xlu0 %1060
          %1062 = vadd.xlane.f32.xlu0 %v1034
          %v1063 = vpop.xlane.xlu0 %1062
          %1064 = vadd.xlane.f32.xlu0 %v1035
          %v1065 = vpop.xlane.xlu0 %1064
          %1066 = vadd.xlane.f32.xlu0 %v1036
          %v1067 = vpop.xlane.xlu0 %1066
          %1068 = vadd.xlane.f32.xlu0 %v1037
          %v1069 = vpop.xlane.xlu0 %1068
          %1070 = vadd.xlane.f32.xlu0 %v1038
          %v1071 = vpop.xlane.xlu0 %1070
          %1072 = vadd.xlane.f32.xlu0 %v1039
          %v1073 = vpop.xlane.xlu0 %1072
          %v1074 = vmul.f32 %v1043, 0.03125
          %v1075 = vmul.f32 %v1045, 0.03125
          %v1076 = vmul.f32 %v1047, 0.03125
          %v1077 = vmul.f32 %v1049, 0.03125
          %v1078 = vmul.f32 %v1051, 0.03125
          %v1079 = vmul.f32 %v1053, 0.03125
          %v1080 = vmul.f32 %v1055, 0.03125
          %v1081 = vmul.f32 %v1057, 0.03125
          %v1082 = vmul.f32 %v1059, 0.03125
          %v1083 = vmul.f32 %v1061, 0.03125
          %v1084 = vmul.f32 %v1063, 0.03125
          %v1085 = vmul.f32 %v1065, 0.03125
          %v1086 = vmul.f32 %v1067, 0.03125
          %v1087 = vmul.f32 %v1069, 0.03125
          %v1088 = vmul.f32 %v1071, 0.03125
          %v1089 = vmul.f32 %v1073, 0.03125
          %v1090 = vmul.f32 %v1024, %v1024
          %v1091 = vmul.f32 %v1025, %v1025
          %v1092 = vmul.f32 %v1026, %v1026
          %v1093 = vmul.f32 %v1027, %v1027
          %v1094 = vmul.f32 %v1028, %v1028
          %v1095 = vmul.f32 %v1029, %v1029
          %v1096 = vmul.f32 %v1030, %v1030
          %v1097 = vmul.f32 %v1031, %v1031
          %v1098 = vmul.f32 %v1032, %v1032
          %v1099 = vmul.f32 %v1033, %v1033
          %v1100 = vmul.f32 %v1034, %v1034
          %v1101 = vmul.f32 %v1035, %v1035
          %v1102 = vmul.f32 %v1036, %v1036
          %v1103 = vmul.f32 %v1037, %v1037
          %v1104 = vmul.f32 %v1038, %v1038
          %v1105 = vmul.f32 %v1039, %v1039
          %1106 = vadd.xlane.f32.xlu0 %v1090
          %v1107 = vpop.xlane.xlu0 %1106
          %1108 = vadd.xlane.f32.xlu0 %v1091
          %v1109 = vpop.xlane.xlu0 %1108
          %1110 = vadd.xlane.f32.xlu0 %v1092
          %v1111 = vpop.xlane.xlu0 %1110
          %1112 = vadd.xlane.f32.xlu0 %v1093
          %v1113 = vpop.xlane.xlu0 %1112
          %1114 = vadd.xlane.f32.xlu0 %v1094
          %v1115 = vpop.xlane.xlu0 %1114
          %1116 = vadd.xlane.f32.xlu0 %v1095
          %v1117 = vpop.xlane.xlu0 %1116
          %1118 = vadd.xlane.f32.xlu0 %v1096
          %v1119 = vpop.xlane.xlu0 %1118
          %1120 = vadd.xlane.f32.xlu0 %v1097
          %v1121 = vpop.xlane.xlu0 %1120
          %1122 = vadd.xlane.f32.xlu0 %v1098
          %v1123 = vpop.xlane.xlu0 %1122
          %1124 = vadd.xlane.f32.xlu0 %v1099
          %v1125 = vpop.xlane.xlu0 %1124
          %1126 = vadd.xlane.f32.xlu0 %v1100
          %v1127 = vpop.xlane.xlu0 %1126
          %1128 = vadd.xlane.f32.xlu0 %v1101
          %v1129 = vpop.xlane.xlu0 %1128
          %1130 = vadd.xlane.f32.xlu0 %v1102
          %v1131 = vpop.xlane.xlu0 %1130
          %1132 = vadd.xlane.f32.xlu0 %v1103
          %v1133 = vpop.xlane.xlu0 %1132
          %1134 = vadd.xlane.f32.xlu0 %v1104
          %v1135 = vpop.xlane.xlu0 %1134
          %1136 = vadd.xlane.f32.xlu0 %v1105
          %v1137 = vpop.xlane.xlu0 %1136
          %v1138 = vmul.f32 %v1107, 0.03125
          %v1139 = vmul.f32 %v1109, 0.03125
          %v1140 = vmul.f32 %v1111, 0.03125
          %v1141 = vmul.f32 %v1113, 0.03125
          %v1142 = vmul.f32 %v1115, 0.03125
          %v1143 = vmul.f32 %v1117, 0.03125
          %v1144 = vmul.f32 %v1119, 0.03125
          %v1145 = vmul.f32 %v1121, 0.03125
          %v1146 = vmul.f32 %v1123, 0.03125
          %v1147 = vmul.f32 %v1125, 0.03125
          %v1148 = vmul.f32 %v1127, 0.03125
          %v1149 = vmul.f32 %v1129, 0.03125
          %v1150 = vmul.f32 %v1131, 0.03125
          %v1151 = vmul.f32 %v1133, 0.03125
          %v1152 = vmul.f32 %v1135, 0.03125
          %v1153 = vmul.f32 %v1137, 0.03125
          %v1154 = vmul.f32 %v1074, %v1074
          %v1155 = vmul.f32 %v1075, %v1075
          %v1156 = vmul.f32 %v1076, %v1076
          %v1157 = vmul.f32 %v1077, %v1077
          %v1158 = vmul.f32 %v1078, %v1078
          %v1159 = vmul.f32 %v1079, %v1079
          %v1160 = vmul.f32 %v1080, %v1080
          %v1161 = vmul.f32 %v1081, %v1081
          %v1162 = vmul.f32 %v1082, %v1082
          %v1163 = vmul.f32 %v1083, %v1083
          %v1164 = vmul.f32 %v1084, %v1084
          %v1165 = vmul.f32 %v1085, %v1085
          %v1166 = vmul.f32 %v1086, %v1086
          %v1167 = vmul.f32 %v1087, %v1087
          %v1168 = vmul.f32 %v1088, %v1088
          %v1169 = vmul.f32 %v1089, %v1089
          %v1170 = vsub.f32 %v1138, %v1154
          %v1171 = vsub.f32 %v1139, %v1155
          %v1172 = vsub.f32 %v1140, %v1156
          %v1173 = vsub.f32 %v1141, %v1157
          %v1174 = vsub.f32 %v1142, %v1158
          %v1175 = vsub.f32 %v1143, %v1159
          %v1176 = vsub.f32 %v1144, %v1160
          %v1177 = vsub.f32 %v1145, %v1161
          %v1178 = vsub.f32 %v1146, %v1162
          %v1179 = vsub.f32 %v1147, %v1163
          %v1180 = vsub.f32 %v1148, %v1164
          %v1181 = vsub.f32 %v1149, %v1165
          %v1182 = vsub.f32 %v1150, %v1166
          %v1183 = vsub.f32 %v1151, %v1167
          %v1184 = vsub.f32 %v1152, %v1168
          %v1185 = vsub.f32 %v1153, %v1169
          %v1186 = vmax.f32 %v1170, 0.0
          %v1187 = vmax.f32 %v1171, 0.0
          %v1188 = vmax.f32 %v1172, 0.0
          %v1189 = vmax.f32 %v1173, 0.0
          %v1190 = vmax.f32 %v1174, 0.0
          %v1191 = vmax.f32 %v1175, 0.0
          %v1192 = vmax.f32 %v1176, 0.0
          %v1193 = vmax.f32 %v1177, 0.0
          %v1194 = vmax.f32 %v1178, 0.0
          %v1195 = vmax.f32 %v1179, 0.0
          %v1196 = vmax.f32 %v1180, 0.0
          %v1197 = vmax.f32 %v1181, 0.0
          %v1198 = vmax.f32 %v1182, 0.0
          %v1199 = vmax.f32 %v1183, 0.0
          %v1200 = vmax.f32 %v1184, 0.0
          %v1201 = vmax.f32 %v1185, 0.0
          %v1202 = vsub.f32 %v1024, %v1074
          %v1203 = vsub.f32 %v1025, %v1075
          %v1204 = vsub.f32 %v1026, %v1076
          %v1205 = vsub.f32 %v1027, %v1077
          %v1206 = vsub.f32 %v1028, %v1078
          %v1207 = vsub.f32 %v1029, %v1079
          %v1208 = vsub.f32 %v1030, %v1080
          %v1209 = vsub.f32 %v1031, %v1081
          %v1210 = vsub.f32 %v1032, %v1082
          %v1211 = vsub.f32 %v1033, %v1083
          %v1212 = vsub.f32 %v1034, %v1084
          %v1213 = vsub.f32 %v1035, %v1085
          %v1214 = vsub.f32 %v1036, %v1086
          %v1215 = vsub.f32 %v1037, %v1087
          %v1216 = vsub.f32 %v1038, %v1088
          %v1217 = vsub.f32 %v1039, %v1089
          %v1218 = vadd.f32 %v1186, 1e-05
          %v1219 = vadd.f32 %v1187, 1e-05
          %v1220 = vadd.f32 %v1188, 1e-05
          %v1221 = vadd.f32 %v1189, 1e-05
          %v1222 = vadd.f32 %v1190, 1e-05
          %v1223 = vadd.f32 %v1191, 1e-05
          %v1224 = vadd.f32 %v1192, 1e-05
          %v1225 = vadd.f32 %v1193, 1e-05
          %v1226 = vadd.f32 %v1194, 1e-05
          %v1227 = vadd.f32 %v1195, 1e-05
          %v1228 = vadd.f32 %v1196, 1e-05
          %v1229 = vadd.f32 %v1197, 1e-05
          %v1230 = vadd.f32 %v1198, 1e-05
          %v1231 = vadd.f32 %v1199, 1e-05
          %v1232 = vadd.f32 %v1200, 1e-05
          %v1233 = vadd.f32 %v1201, 1e-05
          %v1234 = vrsqrt.pop %v1218
          %v1235 = vrsqrt.pop %v1219
          %v1236 = vrsqrt.pop %v1220
          %v1237 = vrsqrt.pop %v1221
          %v1238 = vrsqrt.pop %v1222
          %v1239 = vrsqrt.pop %v1223
          %v1240 = vrsqrt.pop %v1224
          %v1241 = vrsqrt.pop %v1225
          %v1242 = vrsqrt.pop %v1226
          %v1243 = vrsqrt.pop %v1227
          %v1244 = vrsqrt.pop %v1228
          %v1245 = vrsqrt.pop %v1229
          %v1246 = vrsqrt.pop %v1230
          %v1247 = vrsqrt.pop %v1231
          %v1248 = vrsqrt.pop %v1232
          %v1249 = vrsqrt.pop %v1233
          %v1250 = vmul.f32 %v1202, %v1234
          %v1251 = vmul.f32 %v1203, %v1235
          %v1252 = vmul.f32 %v1204, %v1236
          %v1253 = vmul.f32 %v1205, %v1237
          %v1254 = vmul.f32 %v1206, %v1238
          %v1255 = vmul.f32 %v1207, %v1239
          %v1256 = vmul.f32 %v1208, %v1240
          %v1257 = vmul.f32 %v1209, %v1241
          %v1258 = vmul.f32 %v1210, %v1242
          %v1259 = vmul.f32 %v1211, %v1243
          %v1260 = vmul.f32 %v1212, %v1244
          %v1261 = vmul.f32 %v1213, %v1245
          %v1262 = vmul.f32 %v1214, %v1246
          %v1263 = vmul.f32 %v1215, %v1247
          %v1264 = vmul.f32 %v1216, %v1248
          %v1265 = vmul.f32 %v1217, %v1249
          %v1267 = vlaneseq
          %v1268 = vshrl.u32 %v1267, 7
          %v1269 = vsub.s32 0, %v1268
          %v1270 = vrot.slane %v1040, %v1269
          %v1272 = vmul.f32 %v1250, %v1270
          %v1273 = vmul.f32 %v1251, %v1270
          %v1274 = vmul.f32 %v1252, %v1270
          %v1275 = vmul.f32 %v1253, %v1270
          %v1276 = vmul.f32 %v1254, %v1270
          %v1277 = vmul.f32 %v1255, %v1270
          %v1278 = vmul.f32 %v1256, %v1270
          %v1279 = vmul.f32 %v1257, %v1270
          %v1280 = vmul.f32 %v1258, %v1270
          %v1281 = vmul.f32 %v1259, %v1270
          %v1282 = vmul.f32 %v1260, %v1270
          %v1283 = vmul.f32 %v1261, %v1270
          %v1284 = vmul.f32 %v1262, %v1270
          %v1285 = vmul.f32 %v1263, %v1270
          %v1286 = vmul.f32 %v1264, %v1270
          %v1287 = vmul.f32 %v1265, %v1270
          %v1289 = vlaneseq
          %v1290 = vshrl.u32 %v1289, 7
          %v1291 = vsub.s32 0, %v1290
          %v1292 = vrot.slane %v1041, %v1291
          %v1294 = vadd.f32 %v1272, %v1292
          %v1295 = vadd.f32 %v1273, %v1292
          %v1296 = vadd.f32 %v1274, %v1292
          %v1297 = vadd.f32 %v1275, %v1292
          %v1298 = vadd.f32 %v1276, %v1292
          %v1299 = vadd.f32 %v1277, %v1292
          %v1300 = vadd.f32 %v1278, %v1292
          %v1301 = vadd.f32 %v1279, %v1292
          %v1302 = vadd.f32 %v1280, %v1292
          %v1303 = vadd.f32 %v1281, %v1292
          %v1304 = vadd.f32 %v1282, %v1292
          %v1305 = vadd.f32 %v1283, %v1292
          %v1306 = vadd.f32 %v1284, %v1292
          %v1307 = vadd.f32 %v1285, %v1292
          %v1308 = vadd.f32 %v1286, %v1292
          %v1309 = vadd.f32 %v1287, %v1292
          %v1310 = vmax.f32 %v1294, 0.0
          %v1311 = vmax.f32 %v1295, 0.0
          %v1312 = vmax.f32 %v1296, 0.0
          %v1313 = vmax.f32 %v1297, 0.0
          %v1314 = vmax.f32 %v1298, 0.0
          %v1315 = vmax.f32 %v1299, 0.0
          %v1316 = vmax.f32 %v1300, 0.0
          %v1317 = vmax.f32 %v1301, 0.0
          %v1318 = vmax.f32 %v1302, 0.0
          %v1319 = vmax.f32 %v1303, 0.0
          %v1320 = vmax.f32 %v1304, 0.0
          %v1321 = vmax.f32 %v1305, 0.0
          %v1322 = vmax.f32 %v1306, 0.0
          %v1323 = vmax.f32 %v1307, 0.0
          %v1324 = vmax.f32 %v1308, 0.0
          %v1325 = vmax.f32 %v1309, 0.0
          %1326 = vst [vmem:[#allocation3] sm:$0xff] %v1310
          %1327 = vst [vmem:[#allocation3 + $0x8] sm:$0xff] %v1311
          %1328 = vst [vmem:[#allocation3 + $0x10] sm:$0xff] %v1312
          %1329 = vst [vmem:[#allocation3 + $0x18] sm:$0xff] %v1313
          %1330 = vst [vmem:[#allocation3 + $0x20] sm:$0xff] %v1314
          %1331 = vst [vmem:[#allocation3 + $0x28] sm:$0xff] %v1315
          %1332 = vst [vmem:[#allocation3 + $0x30] sm:$0xff] %v1316
          %1333 = vst [vmem:[#allocation3 + $0x38] sm:$0xff] %v1317
          %1334 = vst [vmem:[#allocation3 + $0x40] sm:$0xff] %v1318
          %1335 = vst [vmem:[#allocation3 + $0x48] sm:$0xff] %v1319
          %1336 = vst [vmem:[#allocation3 + $0x50] sm:$0xff] %v1320
          %1337 = vst [vmem:[#allocation3 + $0x58] sm:$0xff] %v1321
          %1338 = vst [vmem:[#allocation3 + $0x60] sm:$0xff] %v1322
          %1339 = vst [vmem:[#allocation3 + $0x68] sm:$0xff] %v1323
          %1340 = vst [vmem:[#allocation3 + $0x70] sm:$0xff] %v1324
          %1341 = vst [vmem:[#allocation3 + $0x78] sm:$0xff] %v1325
          %1342 = vst [vmem:[#allocation4] sm:$0xff] 0.0
          %1343 = vst [vmem:[#allocation4 + $0x8] sm:$0xff] 0.0
          %1344 = vst [vmem:[#allocation4 + $0x10] sm:$0xff] 0.0
          %1345 = vst [vmem:[#allocation4 + $0x18] sm:$0xff] 0.0
          %1346 = vst [vmem:[#allocation4 + $0x20] sm:$0xff] 0.0
          %1347 = vst [vmem:[#allocation4 + $0x28] sm:$0xff] 0.0
          %1348 = vst [vmem:[#allocation4 + $0x30] sm:$0xff] 0.0
          %1349 = vst [vmem:[#allocation4 + $0x38] sm:$0xff] 0.0
          %1350 = vst [vmem:[#allocation4 + $0x40] sm:$0xff] 0.0
          %1351 = vst [vmem:[#allocation4 + $0x48] sm:$0xff] 0.0
          %1352 = vst [vmem:[#allocation4 + $0x50] sm:$0xff] 0.0
          %1353 = vst [vmem:[#allocation4 + $0x58] sm:$0xff] 0.0
          %1354 = vst [vmem:[#allocation4 + $0x60] sm:$0xff] 0.0
          %1355 = vst [vmem:[#allocation4 + $0x68] sm:$0xff] 0.0
          %1356 = vst [vmem:[#allocation4 + $0x70] sm:$0xff] 0.0
          %1357 = vst [vmem:[#allocation4 + $0x78] sm:$0xff] 0.0
          %1358 = vst [vmem:[#allocation5] sm:$0xff] 0.0
          %1359 = vst [vmem:[#allocation5 + $0x8] sm:$0xff] 0.0
          %1360 = vst [vmem:[#allocation5 + $0x10] sm:$0xff] 0.0
          %1361 = vst [vmem:[#allocation5 + $0x18] sm:$0xff] 0.0
          %1362 = vst [vmem:[#allocation5 + $0x20] sm:$0xff] 0.0
          %1363 = vst [vmem:[#allocation5 + $0x28] sm:$0xff] 0.0
          %1364 = vst [vmem:[#allocation5 + $0x30] sm:$0xff] 0.0
          %1365 = vst [vmem:[#allocation5 + $0x38] sm:$0xff] 0.0
          %1366 = vst [vmem:[#allocation5 + $0x40] sm:$0xff] 0.0
          %1367 = vst [vmem:[#allocation5 + $0x48] sm:$0xff] 0.0
          %1368 = vst [vmem:[#allocation5 + $0x50] sm:$0xff] 0.0
          %1369 = vst [vmem:[#allocation5 + $0x58] sm:$0xff] 0.0
          %1370 = vst [vmem:[#allocation5 + $0x60] sm:$0xff] 0.0
          %1371 = vst [vmem:[#allocation5 + $0x68] sm:$0xff] 0.0
          %1372 = vst [vmem:[#allocation5 + $0x70] sm:$0xff] 0.0
          %1373 = vst [vmem:[#allocation5 + $0x78] sm:$0xff] 0.0
          %1374 = vst [vmem:[#allocation6] sm:$0x1] -1e+30
        $region100: #{tpu_custom_call.1} parent=91 // pred_fallthru
          _
        %v1375 = vld [vmem:[#allocation3] sm:$0xff]
        %v1376 = vld [vmem:[#allocation3 + $0x8] sm:$0xff]
        %v1377 = vld [vmem:[#allocation3 + $0x10] sm:$0xff]
        %v1378 = vld [vmem:[#allocation3 + $0x18] sm:$0xff]
        %v1379 = vld [vmem:[#allocation3 + $0x20] sm:$0xff]
        %v1380 = vld [vmem:[#allocation3 + $0x28] sm:$0xff]
        %v1381 = vld [vmem:[#allocation3 + $0x30] sm:$0xff]
        %v1382 = vld [vmem:[#allocation3 + $0x38] sm:$0xff]
        %v1383 = vld [vmem:[#allocation3 + $0x40] sm:$0xff]
        %v1384 = vld [vmem:[#allocation3 + $0x48] sm:$0xff]
        %v1385 = vld [vmem:[#allocation3 + $0x50] sm:$0xff]
        %v1386 = vld [vmem:[#allocation3 + $0x58] sm:$0xff]
        %v1387 = vld [vmem:[#allocation3 + $0x60] sm:$0xff]
        %v1388 = vld [vmem:[#allocation3 + $0x68] sm:$0xff]
        %v1389 = vld [vmem:[#allocation3 + $0x70] sm:$0xff]
        %v1390 = vld [vmem:[#allocation3 + $0x78] sm:$0xff]
        %v1391 = vld [vmem:[%s761] sm:$0xf]
        %v1392 = vld [vmem:[%s761 + $0x4] sm:$0xf]
        %v1393 = vld [vmem:[%s761 + $0x8] sm:$0xf]
        %v1394 = vld [vmem:[%s761 + $0xc] sm:$0xf]
        %v1395 = vld [vmem:[%s761 + $0x10] sm:$0xf]
        %v1396 = vld [vmem:[%s761 + $0x14] sm:$0xf]
        %v1397 = vld [vmem:[%s761 + $0x18] sm:$0xf]
        %v1398 = vld [vmem:[%s761 + $0x1c] sm:$0xf]
        %v1399 = vld [vmem:[%s761 + $0x20] sm:$0xf]
        %v1400 = vld [vmem:[%s761 + $0x24] sm:$0xf]
        %v1401 = vld [vmem:[%s761 + $0x28] sm:$0xf]
        %v1402 = vld [vmem:[%s761 + $0x2c] sm:$0xf]
        %v1403 = vld [vmem:[%s761 + $0x30] sm:$0xf]
        %v1404 = vld [vmem:[%s761 + $0x34] sm:$0xf]
        %v1405 = vld [vmem:[%s761 + $0x38] sm:$0xf]
        %v1406 = vld [vmem:[%s761 + $0x3c] sm:$0xf]
        %v1407 = vld [vmem:[%s761 + $0x40] sm:$0xf]
        %v1408 = vld [vmem:[%s761 + $0x44] sm:$0xf]
        %v1409 = vld [vmem:[%s761 + $0x48] sm:$0xf]
        %v1410 = vld [vmem:[%s761 + $0x4c] sm:$0xf]
        %v1411 = vld [vmem:[%s761 + $0x50] sm:$0xf]
        %v1412 = vld [vmem:[%s761 + $0x54] sm:$0xf]
        %v1413 = vld [vmem:[%s761 + $0x58] sm:$0xf]
        %v1414 = vld [vmem:[%s761 + $0x5c] sm:$0xf]
        %v1415 = vld [vmem:[%s761 + $0x60] sm:$0xf]
        %v1416 = vld [vmem:[%s761 + $0x64] sm:$0xf]
        %v1417 = vld [vmem:[%s761 + $0x68] sm:$0xf]
        %v1418 = vld [vmem:[%s761 + $0x6c] sm:$0xf]
        %v1419 = vld [vmem:[%s761 + $0x70] sm:$0xf]
        %v1420 = vld [vmem:[%s761 + $0x74] sm:$0xf]
        %v1421 = vld [vmem:[%s761 + $0x78] sm:$0xf]
        %v1422 = vld [vmem:[%s761 + $0x7c] sm:$0xf]
        %v1423 = vld [vmem:[%s7] sm:$0xf]
        %v1424 = vld [vmem:[%s7 + $0x4] sm:$0xf]
        %v1425 = vld [vmem:[%s8] sm:$0x1]
        %v1427 = vlaneseq
        %v1428 = vshrl.u32 %v1427, 7
        %v1429 = vsub.s32 0, %v1428
        %v1430 = vrot.slane %v1425, %v1429
        %v1464 = vunpack.c.l.b16 %v1391
        %v1465 = vunpack.c.l.b16 %v1392
        %v1466 = vunpack.c.l.b16 %v1393
        %v1467 = vunpack.c.l.b16 %v1394
        %v1468 = vunpack.c.l.b16 %v1395
        %v1469 = vunpack.c.l.b16 %v1396
        %v1470 = vunpack.c.l.b16 %v1397
        %v1471 = vunpack.c.l.b16 %v1398
        %v1472 = vunpack.c.l.b16 %v1399
        %v1473 = vunpack.c.l.b16 %v1400
        %v1474 = vunpack.c.l.b16 %v1401
        %v1475 = vunpack.c.l.b16 %v1402
        %v1476 = vunpack.c.l.b16 %v1403
        %v1477 = vunpack.c.l.b16 %v1404
        %v1478 = vunpack.c.l.b16 %v1405
        %v1479 = vunpack.c.l.b16 %v1406
        %v1480 = vunpack.c.l.b16 %v1407
        %v1481 = vunpack.c.l.b16 %v1408
        %v1482 = vunpack.c.l.b16 %v1409
        %v1483 = vunpack.c.l.b16 %v1410
        %v1484 = vunpack.c.l.b16 %v1411
        %v1485 = vunpack.c.l.b16 %v1412
        %v1486 = vunpack.c.l.b16 %v1413
        %v1487 = vunpack.c.l.b16 %v1414
        %v1488 = vunpack.c.l.b16 %v1415
        %v1489 = vunpack.c.l.b16 %v1416
        %v1490 = vunpack.c.l.b16 %v1417
        %v1491 = vunpack.c.l.b16 %v1418
        %v1492 = vunpack.c.l.b16 %v1419
        %v1493 = vunpack.c.l.b16 %v1420
        %v1494 = vunpack.c.l.b16 %v1421
        %v1495 = vunpack.c.l.b16 %v1422
        %v1496 = vpack.c.b16 %v1465, %v1464
        %v1497 = vpack.c.b16 %v1467, %v1466
        %v1498 = vpack.c.b16 %v1469, %v1468
        %v1499 = vpack.c.b16 %v1471, %v1470
        %v1500 = vpack.c.b16 %v1473, %v1472
        %v1501 = vpack.c.b16 %v1475, %v1474
        %v1502 = vpack.c.b16 %v1477, %v1476
        %v1503 = vpack.c.b16 %v1479, %v1478
        %v1504 = vpack.c.b16 %v1481, %v1480
        %v1505 = vpack.c.b16 %v1483, %v1482
        %v1506 = vpack.c.b16 %v1485, %v1484
        %v1507 = vpack.c.b16 %v1487, %v1486
        %v1508 = vpack.c.b16 %v1489, %v1488
        %v1509 = vpack.c.b16 %v1491, %v1490
        %v1510 = vpack.c.b16 %v1493, %v1492
        %v1511 = vpack.c.b16 %v1495, %v1494
        %v1514 = vunpack.c.l.b16 %v1423
        %v1515 = vunpack.c.l.b16 %v1424
        %v1516 = vpack.c.b16 %v1515, %v1514
        %vm1518 = vcmask 130048
        %v1520 = vsel %vm1518, %v1496, 0
        %v1523 = vsel %vm1518, %v1497, 0
        %v1526 = vsel %vm1518, %v1498, 0
        %v1529 = vsel %vm1518, %v1499, 0
        %v1532 = vsel %vm1518, %v1500, 0
        %v1535 = vsel %vm1518, %v1501, 0
        %v1538 = vsel %vm1518, %v1502, 0
        %v1541 = vsel %vm1518, %v1503, 0
        %v1544 = vsel %vm1518, %v1504, 0
        %v1547 = vsel %vm1518, %v1505, 0
        %v1550 = vsel %vm1518, %v1506, 0
        %v1553 = vsel %vm1518, %v1507, 0
        %v1556 = vsel %vm1518, %v1508, 0
        %v1559 = vsel %vm1518, %v1509, 0
        %v1562 = vsel %vm1518, %v1510, 0
        %v1565 = vsel %vm1518, %v1511, 0
        %1567 = vmatprep.subr.bf16.mxu0 0
        %1568 = vmatpush1.bf16.msra.mxu0 %v1516
        %1569 = vmatprep.subr.bf16.mxu0 0
        %1570 = vmatpush1.bf16.msra.mxu0 0
        %1571 = vmatprep.subr.bf16.mxu0 0
        %1572 = vmatpush1.bf16.msra.mxu0 0
        %1573 = vmatprep.subr.bf16.mxu0 0
        %1574 = vmatpush1.bf16.msra.mxu0 0
        %1575 = vmatprep.subr.bf16.mxu0 0
        %1576 = vmatpush1.bf16.msra.mxu0 0
        %1577 = vmatprep.subr.bf16.mxu0 0
        %1578 = vmatpush1.bf16.msra.mxu0 0
        %1579 = vmatprep.subr.bf16.mxu0 0
        %1580 = vmatpush1.bf16.msra.mxu0 0
        %1581 = vmatprep.subr.bf16.mxu0 0
        %1582 = vmatpush1.bf16.msra.mxu0 0
        %1583 = vmatprep.subr.bf16.mxu0 0
        %1584 = vmatpush1.bf16.msra.mxu0 0
        %1585 = vmatprep.subr.bf16.mxu0 0
        %1586 = vmatpush1.bf16.msra.mxu0 0
        %1587 = vmatprep.subr.bf16.mxu0 0
        %1588 = vmatpush1.bf16.msra.mxu0 0
        %1589 = vmatprep.subr.bf16.mxu0 0
        %1590 = vmatpush1.bf16.msra.mxu0 0
        %1591 = vmatprep.subr.bf16.mxu0 0
        %1592 = vmatpush1.bf16.msra.mxu0 0
        %1593 = vmatprep.subr.bf16.mxu0 0
        %1594 = vmatpush1.bf16.msra.mxu0 0
        %1595 = vmatprep.subr.bf16.mxu0 0
        %1596 = vmatpush1.bf16.msra.mxu0 0
        %1597 = vmatprep.subr.bf16.mxu0 0
        %1598 = vmatpush1.bf16.msra.mxu0 0
        %1599 = vmatprep.mubr.bf16.mxu0 0
        %1600 = vmatmul.mubr.bf16.gmra.mrb[0].mxu0 %v1520
        %v1601 = vpop.f32.mrb[0].mxu0
        %v1602 = vadd.f32 %v1430, %v1601
        %v1603 = vpop.f32.mrb[0].mxu0
        %v1604 = vpop.f32.mrb[0].mxu0
        %v1605 = vadd.f32 %v1430, %v1604
        %v1606 = vpop.f32.mrb[0].mxu0
        %1607 = vmatprep.mubr.bf16.mxu0 0
        %1608 = vmatmul.mubr.bf16.gmra.mrb[0].mxu0 %v1523
        %v1609 = vpop.f32.mrb[0].mxu0
        %v1610 = vadd.f32 %v1430, %v1609
        %v1611 = vpop.f32.mrb[0].mxu0
        %v1612 = vpop.f32.mrb[0].mxu0
        %v1613 = vadd.f32 %v1430, %v1612
        %v1614 = vpop.f32.mrb[0].mxu0
        %1615 = vmatprep.mubr.bf16.mxu0 0
        %1616 = vmatmul.mubr.bf16.gmra.mrb[0].mxu0 %v1526
        %v1617 = vpop.f32.mrb[0].mxu0
        %v1618 = vadd.f32 %v1430, %v1617
        %v1619 = vpop.f32.mrb[0].mxu0
        %v1620 = vpop.f32.mrb[0].mxu0
        %v1621 = vadd.f32 %v1430, %v1620
        %v1622 = vpop.f32.mrb[0].mxu0
        %1623 = vmatprep.mubr.bf16.mxu0 0
        %1624 = vmatmul.mubr.bf16.gmra.mrb[0].mxu0 %v1529
        %v1625 = vpop.f32.mrb[0].mxu0
        %v1626 = vadd.f32 %v1430, %v1625
        %v1627 = vpop.f32.mrb[0].mxu0
        %v1628 = vpop.f32.mrb[0].mxu0
        %v1629 = vadd.f32 %v1430, %v1628
        %v1630 = vpop.f32.mrb[0].mxu0
        %1631 = vmatprep.mubr.bf16.mxu0 0
        %1632 = vmatmul.mubr.bf16.gmra.mrb[0].mxu0 %v1532
        %v1633 = vpop.f32.mrb[0].mxu0
        %v1634 = vadd.f32 %v1430, %v1633
        %v1635 = vpop.f32.mrb[0].mxu0
        %v1636 = vpop.f32.mrb[0].mxu0
        %v1637 = vadd.f32 %v1430, %v1636
        %v1638 = vpop.f32.mrb[0].mxu0
        %1639 = vmatprep.mubr.bf16.mxu0 0
        %1640 = vmatmul.mubr.bf16.gmra.mrb[0].mxu0 %v1535
        %v1641 = vpop.f32.mrb[0].mxu0
        %v1642 = vadd.f32 %v1430, %v1641
        %v1643 = vpop.f32.mrb[0].mxu0
        %v1644 = vpop.f32.mrb[0].mxu0
        %v1645 = vadd.f32 %v1430, %v1644
        %v1646 = vpop.f32.mrb[0].mxu0
        %1647 = vmatprep.mubr.bf16.mxu0 0
        %1648 = vmatmul.mubr.bf16.gmra.mrb[0].mxu0 %v1538
        %v1649 = vpop.f32.mrb[0].mxu0
        %v1650 = vadd.f32 %v1430, %v1649
        %v1651 = vpop.f32.mrb[0].mxu0
        %v1652 = vpop.f32.mrb[0].mxu0
        %v1653 = vadd.f32 %v1430, %v1652
        %v1654 = vpop.f32.mrb[0].mxu0
        %1655 = vmatprep.mubr.bf16.mxu0 0
        %1656 = vmatmul.mubr.bf16.gmra.mrb[0].mxu0 %v1541
        %v1657 = vpop.f32.mrb[0].mxu0
        %v1658 = vadd.f32 %v1430, %v1657
        %v1659 = vpop.f32.mrb[0].mxu0
        %v1660 = vpop.f32.mrb[0].mxu0
        %v1661 = vadd.f32 %v1430, %v1660
        %v1662 = vpop.f32.mrb[0].mxu0
        %1663 = vmatprep.mubr.bf16.mxu0 0
        %1664 = vmatmul.mubr.bf16.gmra.mrb[0].mxu0 %v1544
        %v1665 = vpop.f32.mrb[0].mxu0
        %v1666 = vadd.f32 %v1430, %v1665
        %v1667 = vpop.f32.mrb[0].mxu0
        %v1668 = vpop.f32.mrb[0].mxu0
        %v1669 = vadd.f32 %v1430, %v1668
        %v1670 = vpop.f32.mrb[0].mxu0
        %1671 = vmatprep.mubr.bf16.mxu0 0
        %1672 = vmatmul.mubr.bf16.gmra.mrb[0].mxu0 %v1547
        %v1673 = vpop.f32.mrb[0].mxu0
        %v1674 = vadd.f32 %v1430, %v1673
        %v1675 = vpop.f32.mrb[0].mxu0
        %v1676 = vpop.f32.mrb[0].mxu0
        %v1677 = vadd.f32 %v1430, %v1676
        %v1678 = vpop.f32.mrb[0].mxu0
        %1679 = vmatprep.mubr.bf16.mxu0 0
        %1680 = vmatmul.mubr.bf16.gmra.mrb[0].mxu0 %v1550
        %v1681 = vpop.f32.mrb[0].mxu0
        %v1682 = vadd.f32 %v1430, %v1681
        %v1683 = vpop.f32.mrb[0].mxu0
        %v1684 = vpop.f32.mrb[0].mxu0
        %v1685 = vadd.f32 %v1430, %v1684
        %v1686 = vpop.f32.mrb[0].mxu0
        %1687 = vmatprep.mubr.bf16.mxu0 0
        %1688 = vmatmul.mubr.bf16.gmra.mrb[0].mxu0 %v1553
        %v1689 = vpop.f32.mrb[0].mxu0
        %v1690 = vadd.f32 %v1430, %v1689
        %v1691 = vpop.f32.mrb[0].mxu0
        %v1692 = vpop.f32.mrb[0].mxu0
        %v1693 = vadd.f32 %v1430, %v1692
        %v1694 = vpop.f32.mrb[0].mxu0
        %1695 = vmatprep.mubr.bf16.mxu0 0
        %1696 = vmatmul.mubr.bf16.gmra.mrb[0].mxu0 %v1556
        %v1697 = vpop.f32.mrb[0].mxu0
        %v1698 = vadd.f32 %v1430, %v1697
        %v1699 = vpop.f32.mrb[0].mxu0
        %v1700 = vpop.f32.mrb[0].mxu0
        %v1701 = vadd.f32 %v1430, %v1700
        %v1702 = vpop.f32.mrb[0].mxu0
        %1703 = vmatprep.mubr.bf16.mxu0 0
        %1704 = vmatmul.mubr.bf16.gmra.mrb[0].mxu0 %v1559
        %v1705 = vpop.f32.mrb[0].mxu0
        %v1706 = vadd.f32 %v1430, %v1705
        %v1707 = vpop.f32.mrb[0].mxu0
        %v1708 = vpop.f32.mrb[0].mxu0
        %v1709 = vadd.f32 %v1430, %v1708
        %v1710 = vpop.f32.mrb[0].mxu0
        %1711 = vmatprep.mubr.bf16.mxu0 0
        %1712 = vmatmul.mubr.bf16.gmra.mrb[0].mxu0 %v1562
        %v1713 = vpop.f32.mrb[0].mxu0
        %v1714 = vadd.f32 %v1430, %v1713
        %v1715 = vpop.f32.mrb[0].mxu0
        %v1716 = vpop.f32.mrb[0].mxu0
        %v1717 = vadd.f32 %v1430, %v1716
        %v1718 = vpop.f32.mrb[0].mxu0
        %1719 = vmatprep.mubr.bf16.mxu0 0
        %1720 = vmatmul.mubr.bf16.gmra.mrb[0].mxu0 %v1565
        %v1721 = vpop.f32.mrb[0].mxu0
        %v1722 = vadd.f32 %v1430, %v1721
        %v1723 = vpop.f32.mrb[0].mxu0
        %v1724 = vpop.f32.mrb[0].mxu0
        %v1725 = vadd.f32 %v1430, %v1724
        %v1726 = vpop.f32.mrb[0].mxu0
        %1727 = vdwg.mxu0
        %v1728 = vlaneseq
        %v1729 = vand.u32 %v1728, 127
        %v1730 = vlaneseq
        %v1731 = vshrl.u32 %v1730, 7
        %v1732 = vadd.s32 %v1731, 8
        %v1733 = vadd.s32 %v1731, 16
        %v1734 = vadd.s32 %v1731, 24
        %v1735 = vadd.s32 %v1731, 32
        %v1736 = vadd.s32 %v1731, 40
        %v1737 = vadd.s32 %v1731, 48
        %v1738 = vadd.s32 %v1731, 56
        %v1739 = vadd.s32 %v1731, 64
        %v1740 = vadd.s32 %v1731, 72
        %v1741 = vadd.s32 %v1731, 80
        %v1742 = vadd.s32 %v1731, 88
        %v1743 = vadd.s32 %v1731, 96
        %v1744 = vadd.s32 %v1731, 104
        %v1745 = vadd.s32 %v1731, 112
        %v1746 = vadd.s32 %v1731, 120
        %v1747 = vld [vmem:[%s767] sm:$0xff]
        %v1748 = vld [vmem:[%s767 + $0x8] sm:$0xff]
        %v1749 = vld [vmem:[%s767 + $0x10] sm:$0xff]
        %v1750 = vld [vmem:[%s767 + $0x18] sm:$0xff]
        %v1751 = vld [vmem:[%s767 + $0x20] sm:$0xff]
        %v1752 = vld [vmem:[%s767 + $0x28] sm:$0xff]
        %v1753 = vld [vmem:[%s767 + $0x30] sm:$0xff]
        %v1754 = vld [vmem:[%s767 + $0x38] sm:$0xff]
        %v1755 = vld [vmem:[%s767 + $0x40] sm:$0xff]
        %v1756 = vld [vmem:[%s767 + $0x48] sm:$0xff]
        %v1757 = vld [vmem:[%s767 + $0x50] sm:$0xff]
        %v1758 = vld [vmem:[%s767 + $0x58] sm:$0xff]
        %v1759 = vld [vmem:[%s767 + $0x60] sm:$0xff]
        %v1760 = vld [vmem:[%s767 + $0x68] sm:$0xff]
        %v1761 = vld [vmem:[%s767 + $0x70] sm:$0xff]
        %v1762 = vld [vmem:[%s767 + $0x78] sm:$0xff]
        %v1763 = vld [vmem:[%s767 + $0x80] sm:$0xff]
        %v1764 = vld [vmem:[%s767 + $0x88] sm:$0xff]
        %v1765 = vld [vmem:[%s767 + $0x90] sm:$0xff]
        %v1766 = vld [vmem:[%s767 + $0x98] sm:$0xff]
        %v1767 = vld [vmem:[%s767 + $0xa0] sm:$0xff]
        %v1768 = vld [vmem:[%s767 + $0xa8] sm:$0xff]
        %v1769 = vld [vmem:[%s767 + $0xb0] sm:$0xff]
        %v1770 = vld [vmem:[%s767 + $0xb8] sm:$0xff]
        %v1771 = vld [vmem:[%s767 + $0xc0] sm:$0xff]
        %v1772 = vld [vmem:[%s767 + $0xc8] sm:$0xff]
        %v1773 = vld [vmem:[%s767 + $0xd0] sm:$0xff]
        %v1774 = vld [vmem:[%s767 + $0xd8] sm:$0xff]
        %v1775 = vld [vmem:[%s767 + $0xe0] sm:$0xff]
        %v1776 = vld [vmem:[%s767 + $0xe8] sm:$0xff]
        %v1777 = vld [vmem:[%s767 + $0xf0] sm:$0xff]
        %v1778 = vld [vmem:[%s767 + $0xf8] sm:$0xff]
        %1779 = vset.pattern.permute.xlu0 0
        %1780 = vperm.xlu0 %1779, %v1747
        %v1781 = vpop.permute.xlu0 %1780
        %1782 = vset.pattern.permute.xlu0 0
        %1783 = vperm.xlu0 %1782, %v1748
        %v1784 = vpop.permute.xlu0 %1783
        %1785 = vset.pattern.permute.xlu0 0
        %1786 = vperm.xlu0 %1785, %v1749
        %v1787 = vpop.permute.xlu0 %1786
        %1788 = vset.pattern.permute.xlu0 0
        %1789 = vperm.xlu0 %1788, %v1750
        %v1790 = vpop.permute.xlu0 %1789
        %1791 = vset.pattern.permute.xlu0 0
        %1792 = vperm.xlu0 %1791, %v1751
        %v1793 = vpop.permute.xlu0 %1792
        %1794 = vset.pattern.permute.xlu0 0
        %1795 = vperm.xlu0 %1794, %v1752
        %v1796 = vpop.permute.xlu0 %1795
        %1797 = vset.pattern.permute.xlu0 0
        %1798 = vperm.xlu0 %1797, %v1753
        %v1799 = vpop.permute.xlu0 %1798
        %1800 = vset.pattern.permute.xlu0 0
        %1801 = vperm.xlu0 %1800, %v1754
        %v1802 = vpop.permute.xlu0 %1801
        %1803 = vset.pattern.permute.xlu0 0
        %1804 = vperm.xlu0 %1803, %v1755
        %v1805 = vpop.permute.xlu0 %1804
        %1806 = vset.pattern.permute.xlu0 0
        %1807 = vperm.xlu0 %1806, %v1756
        %v1808 = vpop.permute.xlu0 %1807
        %1809 = vset.pattern.permute.xlu0 0
        %1810 = vperm.xlu0 %1809, %v1757
        %v1811 = vpop.permute.xlu0 %1810
        %1812 = vset.pattern.permute.xlu0 0
        %1813 = vperm.xlu0 %1812, %v1758
        %v1814 = vpop.permute.xlu0 %1813
        %1815 = vset.pattern.permute.xlu0 0
        %1816 = vperm.xlu0 %1815, %v1759
        %v1817 = vpop.permute.xlu0 %1816
        %1818 = vset.pattern.permute.xlu0 0
        %1819 = vperm.xlu0 %1818, %v1760
        %v1820 = vpop.permute.xlu0 %1819
        %1821 = vset.pattern.permute.xlu0 0
        %1822 = vperm.xlu0 %1821, %v1761
        %v1823 = vpop.permute.xlu0 %1822
        %1824 = vset.pattern.permute.xlu0 0
        %1825 = vperm.xlu0 %1824, %v1762
        %v1826 = vpop.permute.xlu0 %1825
        %1827 = vset.pattern.permute.xlu0 0
        %1828 = vperm.xlu0 %1827, %v1763
        %v1829 = vpop.permute.xlu0 %1828
        %1830 = vset.pattern.permute.xlu0 0
        %1831 = vperm.xlu0 %1830, %v1764
        %v1832 = vpop.permute.xlu0 %1831
        %1833 = vset.pattern.permute.xlu0 0
        %1834 = vperm.xlu0 %1833, %v1765
        %v1835 = vpop.permute.xlu0 %1834
        %1836 = vset.pattern.permute.xlu0 0
        %1837 = vperm.xlu0 %1836, %v1766
        %v1838 = vpop.permute.xlu0 %1837
        %1839 = vset.pattern.permute.xlu0 0
        %1840 = vperm.xlu0 %1839, %v1767
        %v1841 = vpop.permute.xlu0 %1840
        %1842 = vset.pattern.permute.xlu0 0
        %1843 = vperm.xlu0 %1842, %v1768
        %v1844 = vpop.permute.xlu0 %1843
        %1845 = vset.pattern.permute.xlu0 0
        %1846 = vperm.xlu0 %1845, %v1769
        %v1847 = vpop.permute.xlu0 %1846
        %1848 = vset.pattern.permute.xlu0 0
        %1849 = vperm.xlu0 %1848, %v1770
        %v1850 = vpop.permute.xlu0 %1849
        %1851 = vset.pattern.permute.xlu0 0
        %1852 = vperm.xlu0 %1851, %v1771
        %v1853 = vpop.permute.xlu0 %1852
        %1854 = vset.pattern.permute.xlu0 0
        %1855 = vperm.xlu0 %1854, %v1772
        %v1856 = vpop.permute.xlu0 %1855
        %1857 = vset.pattern.permute.xlu0 0
        %1858 = vperm.xlu0 %1857, %v1773
        %v1859 = vpop.permute.xlu0 %1858
        %1860 = vset.pattern.permute.xlu0 0
        %1861 = vperm.xlu0 %1860, %v1774
        %v1862 = vpop.permute.xlu0 %1861
        %1863 = vset.pattern.permute.xlu0 0
        %1864 = vperm.xlu0 %1863, %v1775
        %v1865 = vpop.permute.xlu0 %1864
        %1866 = vset.pattern.permute.xlu0 0
        %1867 = vperm.xlu0 %1866, %v1776
        %v1868 = vpop.permute.xlu0 %1867
        %1869 = vset.pattern.permute.xlu0 0
        %1870 = vperm.xlu0 %1869, %v1777
        %v1871 = vpop.permute.xlu0 %1870
        %1872 = vset.pattern.permute.xlu0 0
        %1873 = vperm.xlu0 %1872, %v1778
        %v1874 = vpop.permute.xlu0 %1873
        %vm1875 = vcmp.eq.s32.totalorder %v1729, %v1781
        %vm1876 = vcmp.eq.s32.totalorder %v1729, %v1784
        %vm1877 = vcmp.eq.s32.totalorder %v1729, %v1787
        %vm1878 = vcmp.eq.s32.totalorder %v1729, %v1790
        %vm1879 = vcmp.eq.s32.totalorder %v1729, %v1793
        %vm1880 = vcmp.eq.s32.totalorder %v1729, %v1796
        %vm1881 = vcmp.eq.s32.totalorder %v1729, %v1799
        %vm1882 = vcmp.eq.s32.totalorder %v1729, %v1802
        %vm1883 = vcmp.eq.s32.totalorder %v1729, %v1805
        %vm1884 = vcmp.eq.s32.totalorder %v1729, %v1808
        %vm1885 = vcmp.eq.s32.totalorder %v1729, %v1811
        %vm1886 = vcmp.eq.s32.totalorder %v1729, %v1814
        %vm1887 = vcmp.eq.s32.totalorder %v1729, %v1817
        %vm1888 = vcmp.eq.s32.totalorder %v1729, %v1820
        %vm1889 = vcmp.eq.s32.totalorder %v1729, %v1823
        %vm1890 = vcmp.eq.s32.totalorder %v1729, %v1826
        %vm1891 = vcmp.eq.s32.totalorder %v1729, %v1829
        %vm1892 = vcmp.eq.s32.totalorder %v1729, %v1832
        %vm1893 = vcmp.eq.s32.totalorder %v1729, %v1835
        %vm1894 = vcmp.eq.s32.totalorder %v1729, %v1838
        %vm1895 = vcmp.eq.s32.totalorder %v1729, %v1841
        %vm1896 = vcmp.eq.s32.totalorder %v1729, %v1844
        %vm1897 = vcmp.eq.s32.totalorder %v1729, %v1847
        %vm1898 = vcmp.eq.s32.totalorder %v1729, %v1850
        %vm1899 = vcmp.eq.s32.totalorder %v1729, %v1853
        %vm1900 = vcmp.eq.s32.totalorder %v1729, %v1856
        %vm1901 = vcmp.eq.s32.totalorder %v1729, %v1859
        %vm1902 = vcmp.eq.s32.totalorder %v1729, %v1862
        %vm1903 = vcmp.eq.s32.totalorder %v1729, %v1865
        %vm1904 = vcmp.eq.s32.totalorder %v1729, %v1868
        %vm1905 = vcmp.eq.s32.totalorder %v1729, %v1871
        %vm1906 = vcmp.eq.s32.totalorder %v1729, %v1874
        %v1907 = vsel %vm1875, 1.0, 0.0
        %v1908 = vsel %vm1876, 1.0, 0.0
        %v1909 = vsel %vm1877, 1.0, 0.0
        %v1910 = vsel %vm1878, 1.0, 0.0
        %v1911 = vsel %vm1879, 1.0, 0.0
        %v1912 = vsel %vm1880, 1.0, 0.0
        %v1913 = vsel %vm1881, 1.0, 0.0
        %v1914 = vsel %vm1882, 1.0, 0.0
        %v1915 = vsel %vm1883, 1.0, 0.0
        %v1916 = vsel %vm1884, 1.0, 0.0
        %v1917 = vsel %vm1885, 1.0, 0.0
        %v1918 = vsel %vm1886, 1.0, 0.0
        %v1919 = vsel %vm1887, 1.0, 0.0
        %v1920 = vsel %vm1888, 1.0, 0.0
        %v1921 = vsel %vm1889, 1.0, 0.0
        %v1922 = vsel %vm1890, 1.0, 0.0
        %v1923 = vsel %vm1891, 1.0, 0.0
        %v1924 = vsel %vm1892, 1.0, 0.0
        %v1925 = vsel %vm1893, 1.0, 0.0
        %v1926 = vsel %vm1894, 1.0, 0.0
        %v1927 = vsel %vm1895, 1.0, 0.0
        %v1928 = vsel %vm1896, 1.0, 0.0
        %v1929 = vsel %vm1897, 1.0, 0.0
        %v1930 = vsel %vm1898, 1.0, 0.0
        %v1931 = vsel %vm1899, 1.0, 0.0
        %v1932 = vsel %vm1900, 1.0, 0.0
        %v1933 = vsel %vm1901, 1.0, 0.0
        %v1934 = vsel %vm1902, 1.0, 0.0
        %v1935 = vsel %vm1903, 1.0, 0.0
        %v1936 = vsel %vm1904, 1.0, 0.0
        %v1937 = vsel %vm1905, 1.0, 0.0
        %v1938 = vsel %vm1906, 1.0, 0.0
        %v1939 = vpack.c.bf16 %v1908, %v1907
        %v1940 = vpack.c.bf16 %v1910, %v1909
        %v1941 = vpack.c.bf16 %v1912, %v1911
        %v1942 = vpack.c.bf16 %v1914, %v1913
        %v1943 = vpack.c.bf16 %v1916, %v1915
        %v1944 = vpack.c.bf16 %v1918, %v1917
        %v1945 = vpack.c.bf16 %v1920, %v1919
        %v1946 = vpack.c.bf16 %v1922, %v1921
        %v1947 = vpack.c.bf16 %v1924, %v1923
        %v1948 = vpack.c.bf16 %v1926, %v1925
        %v1949 = vpack.c.bf16 %v1928, %v1927
        %v1950 = vpack.c.bf16 %v1930, %v1929
        %v1951 = vpack.c.bf16 %v1932, %v1931
        %v1952 = vpack.c.bf16 %v1934, %v1933
        %v1953 = vpack.c.bf16 %v1936, %v1935
        %v1954 = vpack.c.bf16 %v1938, %v1937
        %v1955 = vld [vmem:[%s772] sm:$0x3]
        %v1956 = vlaneseq
        %v1957 = vshrl.u32 %v1956, 7
        %v1958 = vsub.s32 0, %v1957
        %v1959 = vrot.slane %v1955, %v1958
        %v1960 = vlaneseq
        %v1961 = vshrl.u32 %v1960, 7
        %v1962 = vsub.s32 1, %v1961
        %v1963 = vrot.slane %v1955, %v1962
        %vm1964 = vcmp.eq.s32.totalorder %v1731, %v1959
        %vm1965 = vcmp.eq.s32.totalorder %v1731, %v1963
        %vm1966 = vcmp.eq.s32.totalorder %v1732, %v1959
        %vm1967 = vcmp.eq.s32.totalorder %v1732, %v1963
        %vm1968 = vcmp.eq.s32.totalorder %v1733, %v1959
        %vm1969 = vcmp.eq.s32.totalorder %v1733, %v1963
        %vm1970 = vcmp.eq.s32.totalorder %v1734, %v1959
        %vm1971 = vcmp.eq.s32.totalorder %v1734, %v1963
        %vm1972 = vcmp.eq.s32.totalorder %v1735, %v1959
        %vm1973 = vcmp.eq.s32.totalorder %v1735, %v1963
        %vm1974 = vcmp.eq.s32.totalorder %v1736, %v1959
        %vm1975 = vcmp.eq.s32.totalorder %v1736, %v1963
        %vm1976 = vcmp.eq.s32.totalorder %v1737, %v1959
        %vm1977 = vcmp.eq.s32.totalorder %v1737, %v1963
        %vm1978 = vcmp.eq.s32.totalorder %v1738, %v1959
        %vm1979 = vcmp.eq.s32.totalorder %v1738, %v1963
        %vm1980 = vcmp.eq.s32.totalorder %v1739, %v1959
        %vm1981 = vcmp.eq.s32.totalorder %v1739, %v1963
        %vm1982 = vcmp.eq.s32.totalorder %v1740, %v1959
        %vm1983 = vcmp.eq.s32.totalorder %v1740, %v1963
        %vm1984 = vcmp.eq.s32.totalorder %v1741, %v1959
        %vm1985 = vcmp.eq.s32.totalorder %v1741, %v1963
        %vm1986 = vcmp.eq.s32.totalorder %v1742, %v1959
        %vm1987 = vcmp.eq.s32.totalorder %v1742, %v1963
        %vm1988 = vcmp.eq.s32.totalorder %v1743, %v1959
        %vm1989 = vcmp.eq.s32.totalorder %v1743, %v1963
        %vm1990 = vcmp.eq.s32.totalorder %v1744, %v1959
        %vm1991 = vcmp.eq.s32.totalorder %v1744, %v1963
        %vm1992 = vcmp.eq.s32.totalorder %v1745, %v1959
        %vm1993 = vcmp.eq.s32.totalorder %v1745, %v1963
        %vm1994 = vcmp.eq.s32.totalorder %v1746, %v1959
        %vm1995 = vcmp.eq.s32.totalorder %v1746, %v1963
        %v1996 = vsel %vm1964, 1.0, 0.0
        %v1997 = vsel %vm1965, 1.0, 0.0
        %v1998 = vsel %vm1966, 1.0, 0.0
        %v1999 = vsel %vm1967, 1.0, 0.0
        %v2000 = vsel %vm1968, 1.0, 0.0
        %v2001 = vsel %vm1969, 1.0, 0.0
        %v2002 = vsel %vm1970, 1.0, 0.0
        %v2003 = vsel %vm1971, 1.0, 0.0
        %v2004 = vsel %vm1972, 1.0, 0.0
        %v2005 = vsel %vm1973, 1.0, 0.0
        %v2006 = vsel %vm1974, 1.0, 0.0
        %v2007 = vsel %vm1975, 1.0, 0.0
        %v2008 = vsel %vm1976, 1.0, 0.0
        %v2009 = vsel %vm1977, 1.0, 0.0
        %v2010 = vsel %vm1978, 1.0, 0.0
        %v2011 = vsel %vm1979, 1.0, 0.0
        %v2012 = vsel %vm1980, 1.0, 0.0
        %v2013 = vsel %vm1981, 1.0, 0.0
        %v2014 = vsel %vm1982, 1.0, 0.0
        %v2015 = vsel %vm1983, 1.0, 0.0
        %v2016 = vsel %vm1984, 1.0, 0.0
        %v2017 = vsel %vm1985, 1.0, 0.0
        %v2018 = vsel %vm1986, 1.0, 0.0
        %v2019 = vsel %vm1987, 1.0, 0.0
        %v2020 = vsel %vm1988, 1.0, 0.0
        %v2021 = vsel %vm1989, 1.0, 0.0
        %v2022 = vsel %vm1990, 1.0, 0.0
        %v2023 = vsel %vm1991, 1.0, 0.0
        %v2024 = vsel %vm1992, 1.0, 0.0
        %v2025 = vsel %vm1993, 1.0, 0.0
        %v2026 = vsel %vm1994, 1.0, 0.0
        %v2027 = vsel %vm1995, 1.0, 0.0
        %v2028 = vpack.c.bf16 %v1998, %v1996
        %v2029 = vpack.c.bf16 %v1999, %v1997
        %v2030 = vpack.c.bf16 %v2002, %v2000
        %v2031 = vpack.c.bf16 %v2003, %v2001
        %v2032 = vpack.c.bf16 %v2006, %v2004
        %v2033 = vpack.c.bf16 %v2007, %v2005
        %v2034 = vpack.c.bf16 %v2010, %v2008
        %v2035 = vpack.c.bf16 %v2011, %v2009
        %v2036 = vpack.c.bf16 %v2014, %v2012
        %v2037 = vpack.c.bf16 %v2015, %v2013
        %v2038 = vpack.c.bf16 %v2018, %v2016
        %v2039 = vpack.c.bf16 %v2019, %v2017
        %v2040 = vpack.c.bf16 %v2022, %v2020
        %v2041 = vpack.c.bf16 %v2023, %v2021
        %v2042 = vpack.c.bf16 %v2026, %v2024
        %v2043 = vpack.c.bf16 %v2027, %v2025
        %v2044 = vpack.c.bf16 %v1376, %v1375
        %v2045 = vpack.c.bf16 %v1378, %v1377
        %v2046 = vpack.c.bf16 %v1380, %v1379
        %v2047 = vpack.c.bf16 %v1382, %v1381
        %v2048 = vpack.c.bf16 %v1384, %v1383
        %v2049 = vpack.c.bf16 %v1386, %v1385
        %v2050 = vpack.c.bf16 %v1388, %v1387
        %v2051 = vpack.c.bf16 %v1390, %v1389
        %2052 = vmatprep.subr.bf16.mxu0 0
        %2053 = vmatpush1.bf16.msra.mxu0 %v2044
        %2054 = vmatprep.subr.bf16.mxu0 0
        %2055 = vmatpush1.bf16.msra.mxu0 %v2045
        %2056 = vmatprep.subr.bf16.mxu0 0
        %2057 = vmatpush1.bf16.msra.mxu0 %v2046
        %2058 = vmatprep.subr.bf16.mxu0 0
        %2059 = vmatpush1.bf16.msra.mxu0 %v2047
        %2060 = vmatprep.subr.bf16.mxu0 0
        %2061 = vmatpush1.bf16.msra.mxu0 %v2048
        %2062 = vmatprep.subr.bf16.mxu0 0
        %2063 = vmatpush1.bf16.msra.mxu0 %v2049
        %2064 = vmatprep.subr.bf16.mxu0 0
        %2065 = vmatpush1.bf16.msra.mxu0 %v2050
        %2066 = vmatprep.subr.bf16.mxu0 0
        %2067 = vmatpush1.bf16.msra.mxu0 %v2051
        %2068 = vmatprep.subr.bf16.mxu0 0
        %2069 = vmatpush1.bf16.msra.mxu0 0
        %2070 = vmatprep.subr.bf16.mxu0 0
        %2071 = vmatpush1.bf16.msra.mxu0 0
        %2072 = vmatprep.subr.bf16.mxu0 0
        %2073 = vmatpush1.bf16.msra.mxu0 0
        %2074 = vmatprep.subr.bf16.mxu0 0
        %2075 = vmatpush1.bf16.msra.mxu0 0
        %2076 = vmatprep.subr.bf16.mxu0 0
        %2077 = vmatpush1.bf16.msra.mxu0 0
        %2078 = vmatprep.subr.bf16.mxu0 0
        %2079 = vmatpush1.bf16.msra.mxu0 0
        %2080 = vmatprep.subr.bf16.mxu0 0
        %2081 = vmatpush1.bf16.msra.mxu0 0
        %2082 = vmatprep.subr.bf16.mxu0 0
        %2083 = vmatpush1.bf16.msra.mxu0 0
        %2084 = vmatprep.mubr.bf16.mxu0 0
        %2085 = vmatmul.mubr.bf16.gmra.mrb[0].mxu0 %v1939
        %v2086 = vpop.f32.mrb[0].mxu0
        %v2087 = vadd.f32 %v1602, %v2086
        %v2088 = vpop.f32.mrb[0].mxu0
        %v2089 = vpop.f32.mrb[0].mxu0
        %v2090 = vadd.f32 %v1605, %v2089
        %v2091 = vpop.f32.mrb[0].mxu0
        %2092 = vmatprep.mubr.bf16.mxu0 0
        %2093 = vmatmul.mubr.bf16.gmra.mrb[0].mxu0 %v1940
        %v2094 = vpop.f32.mrb[0].mxu0
        %v2095 = vadd.f32 %v1610, %v2094
        %v2096 = vpop.f32.mrb[0].mxu0
        %v2097 = vpop.f32.mrb[0].mxu0
        %v2098 = vadd.f32 %v1613, %v2097
        %v2099 = vpop.f32.mrb[0].mxu0
        %2100 = vmatprep.mubr.bf16.mxu0 0
        %2101 = vmatmul.mubr.bf16.gmra.mrb[0].mxu0 %v1941
        %v2102 = vpop.f32.mrb[0].mxu0
        %v2103 = vadd.f32 %v1618, %v2102
        %v2104 = vpop.f32.mrb[0].mxu0
        %v2105 = vpop.f32.mrb[0].mxu0
        %v2106 = vadd.f32 %v1621, %v2105
        %v2107 = vpop.f32.mrb[0].mxu0
        %2108 = vmatprep.mubr.bf16.mxu0 0
        %2109 = vmatmul.mubr.bf16.gmra.mrb[0].mxu0 %v1942
        %v2110 = vpop.f32.mrb[0].mxu0
        %v2111 = vadd.f32 %v1626, %v2110
        %v2112 = vpop.f32.mrb[0].mxu0
        %v2113 = vpop.f32.mrb[0].mxu0
        %v2114 = vadd.f32 %v1629, %v2113
        %v2115 = vpop.f32.mrb[0].mxu0
        %2116 = vmatprep.mubr.bf16.mxu0 0
        %2117 = vmatmul.mubr.bf16.gmra.mrb[0].mxu0 %v1943
        %v2118 = vpop.f32.mrb[0].mxu0
        %v2119 = vadd.f32 %v1634, %v2118
        %v2120 = vpop.f32.mrb[0].mxu0
        %v2121 = vpop.f32.mrb[0].mxu0
        %v2122 = vadd.f32 %v1637, %v2121
        %v2123 = vpop.f32.mrb[0].mxu0
        %2124 = vmatprep.mubr.bf16.mxu0 0
        %2125 = vmatmul.mubr.bf16.gmra.mrb[0].mxu0 %v1944
        %v2126 = vpop.f32.mrb[0].mxu0
        %v2127 = vadd.f32 %v1642, %v2126
        %v2128 = vpop.f32.mrb[0].mxu0
        %v2129 = vpop.f32.mrb[0].mxu0
        %v2130 = vadd.f32 %v1645, %v2129
        %v2131 = vpop.f32.mrb[0].mxu0
        %2132 = vmatprep.mubr.bf16.mxu0 0
        %2133 = vmatmul.mubr.bf16.gmra.mrb[0].mxu0 %v1945
        %v2134 = vpop.f32.mrb[0].mxu0
        %v2135 = vadd.f32 %v1650, %v2134
        %v2136 = vpop.f32.mrb[0].mxu0
        %v2137 = vpop.f32.mrb[0].mxu0
        %v2138 = vadd.f32 %v1653, %v2137
        %v2139 = vpop.f32.mrb[0].mxu0
        %2140 = vmatprep.mubr.bf16.mxu0 0
        %2141 = vmatmul.mubr.bf16.gmra.mrb[0].mxu0 %v1946
        %v2142 = vpop.f32.mrb[0].mxu0
        %v2143 = vadd.f32 %v1658, %v2142
        %v2144 = vpop.f32.mrb[0].mxu0
        %v2145 = vpop.f32.mrb[0].mxu0
        %v2146 = vadd.f32 %v1661, %v2145
        %v2147 = vpop.f32.mrb[0].mxu0
        %2148 = vmatprep.mubr.bf16.mxu0 0
        %2149 = vmatmul.mubr.bf16.gmra.mrb[0].mxu0 %v1947
        %v2150 = vpop.f32.mrb[0].mxu0
        %v2151 = vadd.f32 %v1666, %v2150
        %v2152 = vpop.f32.mrb[0].mxu0
        %v2153 = vpop.f32.mrb[0].mxu0
        %v2154 = vadd.f32 %v1669, %v2153
        %v2155 = vpop.f32.mrb[0].mxu0
        %2156 = vmatprep.mubr.bf16.mxu0 0
        %2157 = vmatmul.mubr.bf16.gmra.mrb[0].mxu0 %v1948
        %v2158 = vpop.f32.mrb[0].mxu0
        %v2159 = vadd.f32 %v1674, %v2158
        %v2160 = vpop.f32.mrb[0].mxu0
        %v2161 = vpop.f32.mrb[0].mxu0
        %v2162 = vadd.f32 %v1677, %v2161
        %v2163 = vpop.f32.mrb[0].mxu0
        %2164 = vmatprep.mubr.bf16.mxu0 0
        %2165 = vmatmul.mubr.bf16.gmra.mrb[0].mxu0 %v1949
        %v2166 = vpop.f32.mrb[0].mxu0
        %v2167 = vadd.f32 %v1682, %v2166
        %v2168 = vpop.f32.mrb[0].mxu0
        %v2169 = vpop.f32.mrb[0].mxu0
        %v2170 = vadd.f32 %v1685, %v2169
        %v2171 = vpop.f32.mrb[0].mxu0
        %2172 = vmatprep.mubr.bf16.mxu0 0
        %2173 = vmatmul.mubr.bf16.gmra.mrb[0].mxu0 %v1950
        %v2174 = vpop.f32.mrb[0].mxu0
        %v2175 = vadd.f32 %v1690, %v2174
        %v2176 = vpop.f32.mrb[0].mxu0
        %v2177 = vpop.f32.mrb[0].mxu0
        %v2178 = vadd.f32 %v1693, %v2177
        %v2179 = vpop.f32.mrb[0].mxu0
        %2180 = vmatprep.mubr.bf16.mxu0 0
        %2181 = vmatmul.mubr.bf16.gmra.mrb[0].mxu0 %v1951
        %v2182 = vpop.f32.mrb[0].mxu0
        %v2183 = vadd.f32 %v1698, %v2182
        %v2184 = vpop.f32.mrb[0].mxu0
        %v2185 = vpop.f32.mrb[0].mxu0
        %v2186 = vadd.f32 %v1701, %v2185
        %v2187 = vpop.f32.mrb[0].mxu0
        %2188 = vmatprep.mubr.bf16.mxu0 0
        %2189 = vmatmul.mubr.bf16.gmra.mrb[0].mxu0 %v1952
        %v2190 = vpop.f32.mrb[0].mxu0
        %v2191 = vadd.f32 %v1706, %v2190
        %v2192 = vpop.f32.mrb[0].mxu0
        %v2193 = vpop.f32.mrb[0].mxu0
        %v2194 = vadd.f32 %v1709, %v2193
        %v2195 = vpop.f32.mrb[0].mxu0
        %2196 = vmatprep.mubr.bf16.mxu0 0
        %2197 = vmatmul.mubr.bf16.gmra.mrb[0].mxu0 %v1953
        %v2198 = vpop.f32.mrb[0].mxu0
        %v2199 = vadd.f32 %v1714, %v2198
        %v2200 = vpop.f32.mrb[0].mxu0
        %v2201 = vpop.f32.mrb[0].mxu0
        %v2202 = vadd.f32 %v1717, %v2201
        %v2203 = vpop.f32.mrb[0].mxu0
        %2204 = vmatprep.mubr.bf16.mxu0 0
        %2205 = vmatmul.mubr.bf16.gmra.mrb[0].mxu0 %v1954
        %v2206 = vpop.f32.mrb[0].mxu0
        %v2207 = vadd.f32 %v1722, %v2206
        %v2208 = vpop.f32.mrb[0].mxu0
        %v2209 = vpop.f32.mrb[0].mxu0
        %v2210 = vadd.f32 %v1725, %v2209
        %v2211 = vpop.f32.mrb[0].mxu0
        %2212 = vdwg.mxu0
        %v2213 = vmax.f32 %v2087, 0.0
        %v2214 = vmax.f32 %v2090, 0.0
        %v2215 = vmax.f32 %v2095, 0.0
        %v2216 = vmax.f32 %v2098, 0.0
        %v2217 = vmax.f32 %v2103, 0.0
        %v2218 = vmax.f32 %v2106, 0.0
        %v2219 = vmax.f32 %v2111, 0.0
        %v2220 = vmax.f32 %v2114, 0.0
        %v2221 = vmax.f32 %v2119, 0.0
        %v2222 = vmax.f32 %v2122, 0.0
        %v2223 = vmax.f32 %v2127, 0.0
        %v2224 = vmax.f32 %v2130, 0.0
        %v2225 = vmax.f32 %v2135, 0.0
        %v2226 = vmax.f32 %v2138, 0.0
        %v2227 = vmax.f32 %v2143, 0.0
        %v2228 = vmax.f32 %v2146, 0.0
        %v2229 = vmax.f32 %v2151, 0.0
        %v2230 = vmax.f32 %v2154, 0.0
        %v2231 = vmax.f32 %v2159, 0.0
        %v2232 = vmax.f32 %v2162, 0.0
        %v2233 = vmax.f32 %v2167, 0.0
        %v2234 = vmax.f32 %v2170, 0.0
        %v2235 = vmax.f32 %v2175, 0.0
        %v2236 = vmax.f32 %v2178, 0.0
        %v2237 = vmax.f32 %v2183, 0.0
        %v2238 = vmax.f32 %v2186, 0.0
        %v2239 = vmax.f32 %v2191, 0.0
        %v2240 = vmax.f32 %v2194, 0.0
        %v2241 = vmax.f32 %v2199, 0.0
        %v2242 = vmax.f32 %v2202, 0.0
        %v2243 = vmax.f32 %v2207, 0.0
        %v2244 = vmax.f32 %v2210, 0.0
        %v2245 = vadd.f32 %v2213, 1e-07
        %v2246 = vadd.f32 %v2214, 1e-07
        %v2247 = vadd.f32 %v2215, 1e-07
        %v2248 = vadd.f32 %v2216, 1e-07
        %v2249 = vadd.f32 %v2217, 1e-07
        %v2250 = vadd.f32 %v2218, 1e-07
        %v2251 = vadd.f32 %v2219, 1e-07
        %v2252 = vadd.f32 %v2220, 1e-07
        %v2253 = vadd.f32 %v2221, 1e-07
        %v2254 = vadd.f32 %v2222, 1e-07
        %v2255 = vadd.f32 %v2223, 1e-07
        %v2256 = vadd.f32 %v2224, 1e-07
        %v2257 = vadd.f32 %v2225, 1e-07
        %v2258 = vadd.f32 %v2226, 1e-07
        %v2259 = vadd.f32 %v2227, 1e-07
        %v2260 = vadd.f32 %v2228, 1e-07
        %v2261 = vadd.f32 %v2229, 1e-07
        %v2262 = vadd.f32 %v2230, 1e-07
        %v2263 = vadd.f32 %v2231, 1e-07
        %v2264 = vadd.f32 %v2232, 1e-07
        %v2265 = vadd.f32 %v2233, 1e-07
        %v2266 = vadd.f32 %v2234, 1e-07
        %v2267 = vadd.f32 %v2235, 1e-07
        %v2268 = vadd.f32 %v2236, 1e-07
        %v2269 = vadd.f32 %v2237, 1e-07
        %v2270 = vadd.f32 %v2238, 1e-07
        %v2271 = vadd.f32 %v2239, 1e-07
        %v2272 = vadd.f32 %v2240, 1e-07
        %v2273 = vadd.f32 %v2241, 1e-07
        %v2274 = vadd.f32 %v2242, 1e-07
        %v2275 = vadd.f32 %v2243, 1e-07
        %v2276 = vadd.f32 %v2244, 1e-07
        %v2277 = vld [vmem:[%s776] sm:$0x1]
        %v2279 = vlaneseq
        %v2280 = vshrl.u32 %v2279, 7
        %v2281 = vsub.s32 0, %v2280
        %v2282 = vrot.slane %v2277, %v2281
        %v2284 = vmul.f32 %v2282, %v2245
        %v2285 = vmul.f32 %v2282, %v2246
        %v2286 = vmul.f32 %v2282, %v2247
        %v2287 = vmul.f32 %v2282, %v2248
        %v2288 = vmul.f32 %v2282, %v2249
        %v2289 = vmul.f32 %v2282, %v2250
        %v2290 = vmul.f32 %v2282, %v2251
        %v2291 = vmul.f32 %v2282, %v2252
        %v2292 = vmul.f32 %v2282, %v2253
        %v2293 = vmul.f32 %v2282, %v2254
        %v2294 = vmul.f32 %v2282, %v2255
        %v2295 = vmul.f32 %v2282, %v2256
        %v2296 = vmul.f32 %v2282, %v2257
        %v2297 = vmul.f32 %v2282, %v2258
        %v2298 = vmul.f32 %v2282, %v2259
        %v2299 = vmul.f32 %v2282, %v2260
        %v2300 = vmul.f32 %v2282, %v2261
        %v2301 = vmul.f32 %v2282, %v2262
        %v2302 = vmul.f32 %v2282, %v2263
        %v2303 = vmul.f32 %v2282, %v2264
        %v2304 = vmul.f32 %v2282, %v2265
        %v2305 = vmul.f32 %v2282, %v2266
        %v2306 = vmul.f32 %v2282, %v2267
        %v2307 = vmul.f32 %v2282, %v2268
        %v2308 = vmul.f32 %v2282, %v2269
        %v2309 = vmul.f32 %v2282, %v2270
        %v2310 = vmul.f32 %v2282, %v2271
        %v2311 = vmul.f32 %v2282, %v2272
        %v2312 = vmul.f32 %v2282, %v2273
        %v2313 = vmul.f32 %v2282, %v2274
        %v2314 = vmul.f32 %v2282, %v2275
        %v2315 = vmul.f32 %v2282, %v2276
        %v2316 = vld [vmem:[#allocation6] sm:$0x1]
        %v2317 = vmax.f32 %v2284, %v2288
        %v2318 = vmax.f32 %v2285, %v2289
        %v2319 = vmax.f32 %v2286, %v2290
        %v2320 = vmax.f32 %v2287, %v2291
        %v2321 = vmax.f32 %v2317, %v2292
        %v2322 = vmax.f32 %v2318, %v2293
        %v2323 = vmax.f32 %v2319, %v2294
        %v2324 = vmax.f32 %v2320, %v2295
        %v2325 = vmax.f32 %v2321, %v2296
        %v2326 = vmax.f32 %v2322, %v2297
        %v2327 = vmax.f32 %v2323, %v2298
        %v2328 = vmax.f32 %v2324, %v2299
        %v2329 = vmax.f32 %v2325, %v2300
        %v2330 = vmax.f32 %v2326, %v2301
        %v2331 = vmax.f32 %v2327, %v2302
        %v2332 = vmax.f32 %v2328, %v2303
        %v2333 = vmax.f32 %v2329, %v2304
        %v2334 = vmax.f32 %v2330, %v2305
        %v2335 = vmax.f32 %v2331, %v2306
        %v2336 = vmax.f32 %v2332, %v2307
        %v2337 = vmax.f32 %v2333, %v2308
        %v2338 = vmax.f32 %v2334, %v2309
        %v2339 = vmax.f32 %v2335, %v2310
        %v2340 = vmax.f32 %v2336, %v2311
        %v2341 = vmax.f32 %v2337, %v2312
        %v2342 = vmax.f32 %v2338, %v2313
        %v2343 = vmax.f32 %v2339, %v2314
        %v2344 = vmax.f32 %v2340, %v2315
        %v2345 = vmax.f32 %v2341, %v2342
        %v2346 = vmax.f32 %v2343, %v2344
        %v2347 = vmax.f32 %v2345, %v2346
        %v2348 = vrot.slane %v2347, 4
        %v2349 = vmax.f32 %v2347, %v2348
        %v2350 = vrot.slane %v2349, 2
        %v2351 = vmax.f32 %v2349, %v2350
        %v2352 = vrot.slane %v2351, 1
        %v2353 = vmax.f32 %v2351, %v2352
        %v2354 = vmax.f32 %v2316, %v2353
        %v2355 = vsub.f32 %v2316, %v2354
        %v2356 = vmul.f32 %v2355, 1.442695
        %v2357 = vpow.pop %v2356
        %v2359 = vlaneseq
        %v2360 = vshrl.u32 %v2359, 7
        %v2361 = vsub.s32 0, %v2360
        %v2362 = vrot.slane %v2354, %v2361
        %v2364 = vsub.f32 %v2284, %v2362
        %v2365 = vsub.f32 %v2285, %v2362
        %v2366 = vsub.f32 %v2286, %v2362
        %v2367 = vsub.f32 %v2287, %v2362
        %v2368 = vsub.f32 %v2288, %v2362
        %v2369 = vsub.f32 %v2289, %v2362
        %v2370 = vsub.f32 %v2290, %v2362
        %v2371 = vsub.f32 %v2291, %v2362
        %v2372 = vsub.f32 %v2292, %v2362
        %v2373 = vsub.f32 %v2293, %v2362
        %v2374 = vsub.f32 %v2294, %v2362
        %v2375 = vsub.f32 %v2295, %v2362
        %v2376 = vsub.f32 %v2296, %v2362
        %v2377 = vsub.f32 %v2297, %v2362
        %v2378 = vsub.f32 %v2298, %v2362
        %v2379 = vsub.f32 %v2299, %v2362
        %v2380 = vsub.f32 %v2300, %v2362
        %v2381 = vsub.f32 %v2301, %v2362
        %v2382 = vsub.f32 %v2302, %v2362
        %v2383 = vsub.f32 %v2303, %v2362
        %v2384 = vsub.f32 %v2304, %v2362
        %v2385 = vsub.f32 %v2305, %v2362
        %v2386 = vsub.f32 %v2306, %v2362
        %v2387 = vsub.f32 %v2307, %v2362
        %v2388 = vsub.f32 %v2308, %v2362
        %v2389 = vsub.f32 %v2309, %v2362
        %v2390 = vsub.f32 %v2310, %v2362
        %v2391 = vsub.f32 %v2311, %v2362
        %v2392 = vsub.f32 %v2312, %v2362
        %v2393 = vsub.f32 %v2313, %v2362
        %v2394 = vsub.f32 %v2314, %v2362
        %v2395 = vsub.f32 %v2315, %v2362
        %v2396 = vmul.f32 %v2364, 1.442695
        %v2397 = vpow.pop %v2396
        %v2398 = vmul.f32 %v2365, 1.442695
        %v2399 = vpow.pop %v2398
        %v2400 = vmul.f32 %v2366, 1.442695
        %v2401 = vpow.pop %v2400
        %v2402 = vmul.f32 %v2367, 1.442695
        %v2403 = vpow.pop %v2402
        %v2404 = vmul.f32 %v2368, 1.442695
        %v2405 = vpow.pop %v2404
        %v2406 = vmul.f32 %v2369, 1.442695
        %v2407 = vpow.pop %v2406
        %v2408 = vmul.f32 %v2370, 1.442695
        %v2409 = vpow.pop %v2408
        %v2410 = vmul.f32 %v2371, 1.442695
        %v2411 = vpow.pop %v2410
        %v2412 = vmul.f32 %v2372, 1.442695
        %v2413 = vpow.pop %v2412
        %v2414 = vmul.f32 %v2373, 1.442695
        %v2415 = vpow.pop %v2414
        %v2416 = vmul.f32 %v2374, 1.442695
        %v2417 = vpow.pop %v2416
        %v2418 = vmul.f32 %v2375, 1.442695
        %v2419 = vpow.pop %v2418
        %v2420 = vmul.f32 %v2376, 1.442695
        %v2421 = vpow.pop %v2420
        %v2422 = vmul.f32 %v2377, 1.442695
        %v2423 = vpow.pop %v2422
        %v2424 = vmul.f32 %v2378, 1.442695
        %v2425 = vpow.pop %v2424
        %v2426 = vmul.f32 %v2379, 1.442695
        %v2427 = vpow.pop %v2426
        %v2428 = vmul.f32 %v2380, 1.442695
        %v2429 = vpow.pop %v2428
        %v2430 = vmul.f32 %v2381, 1.442695
        %v2431 = vpow.pop %v2430
        %v2432 = vmul.f32 %v2382, 1.442695
        %v2433 = vpow.pop %v2432
        %v2434 = vmul.f32 %v2383, 1.442695
        %v2435 = vpow.pop %v2434
        %v2436 = vmul.f32 %v2384, 1.442695
        %v2437 = vpow.pop %v2436
        %v2438 = vmul.f32 %v2385, 1.442695
        %v2439 = vpow.pop %v2438
        %v2440 = vmul.f32 %v2386, 1.442695
        %v2441 = vpow.pop %v2440
        %v2442 = vmul.f32 %v2387, 1.442695
        %v2443 = vpow.pop %v2442
        %v2444 = vmul.f32 %v2388, 1.442695
        %v2445 = vpow.pop %v2444
        %v2446 = vmul.f32 %v2389, 1.442695
        %v2447 = vpow.pop %v2446
        %v2448 = vmul.f32 %v2390, 1.442695
        %v2449 = vpow.pop %v2448
        %v2450 = vmul.f32 %v2391, 1.442695
        %v2451 = vpow.pop %v2450
        %v2452 = vmul.f32 %v2392, 1.442695
        %v2453 = vpow.pop %v2452
        %v2454 = vmul.f32 %v2393, 1.442695
        %v2455 = vpow.pop %v2454
        %v2456 = vmul.f32 %v2394, 1.442695
        %v2457 = vpow.pop %v2456
        %v2458 = vmul.f32 %v2395, 1.442695
        %v2459 = vpow.pop %v2458
        %v2460 = vpack.c.bf16 %v2399, %v2397
        %v2461 = vpack.c.bf16 %v2403, %v2401
        %v2462 = vpack.c.bf16 %v2407, %v2405
        %v2463 = vpack.c.bf16 %v2411, %v2409
        %v2464 = vpack.c.bf16 %v2415, %v2413
        %v2465 = vpack.c.bf16 %v2419, %v2417
        %v2466 = vpack.c.bf16 %v2423, %v2421
        %v2467 = vpack.c.bf16 %v2427, %v2425
        %v2468 = vpack.c.bf16 %v2431, %v2429
        %v2469 = vpack.c.bf16 %v2435, %v2433
        %v2470 = vpack.c.bf16 %v2439, %v2437
        %v2471 = vpack.c.bf16 %v2443, %v2441
        %v2472 = vpack.c.bf16 %v2447, %v2445
        %v2473 = vpack.c.bf16 %v2451, %v2449
        %v2474 = vpack.c.bf16 %v2455, %v2453
        %v2475 = vpack.c.bf16 %v2459, %v2457
        %v2476 = vmul.f32 %v2245, %v2397
        %v2477 = vmul.f32 %v2246, %v2399
        %v2478 = vmul.f32 %v2247, %v2401
        %v2479 = vmul.f32 %v2248, %v2403
        %v2480 = vmul.f32 %v2249, %v2405
        %v2481 = vmul.f32 %v2250, %v2407
        %v2482 = vmul.f32 %v2251, %v2409
        %v2483 = vmul.f32 %v2252, %v2411
        %v2484 = vmul.f32 %v2253, %v2413
        %v2485 = vmul.f32 %v2254, %v2415
        %v2486 = vmul.f32 %v2255, %v2417
        %v2487 = vmul.f32 %v2256, %v2419
        %v2488 = vmul.f32 %v2257, %v2421
        %v2489 = vmul.f32 %v2258, %v2423
        %v2490 = vmul.f32 %v2259, %v2425
        %v2491 = vmul.f32 %v2260, %v2427
        %v2492 = vmul.f32 %v2261, %v2429
        %v2493 = vmul.f32 %v2262, %v2431
        %v2494 = vmul.f32 %v2263, %v2433
        %v2495 = vmul.f32 %v2264, %v2435
        %v2496 = vmul.f32 %v2265, %v2437
        %v2497 = vmul.f32 %v2266, %v2439
        %v2498 = vmul.f32 %v2267, %v2441
        %v2499 = vmul.f32 %v2268, %v2443
        %v2500 = vmul.f32 %v2269, %v2445
        %v2501 = vmul.f32 %v2270, %v2447
        %v2502 = vmul.f32 %v2271, %v2449
        %v2503 = vmul.f32 %v2272, %v2451
        %v2504 = vmul.f32 %v2273, %v2453
        %v2505 = vmul.f32 %v2274, %v2455
        %v2506 = vmul.f32 %v2275, %v2457
        %v2507 = vmul.f32 %v2276, %v2459
        %v2508 = vpack.c.bf16 %v2477, %v2476
        %v2509 = vpack.c.bf16 %v2479, %v2478
        %v2510 = vpack.c.bf16 %v2481, %v2480
        %v2511 = vpack.c.bf16 %v2483, %v2482
        %v2512 = vpack.c.bf16 %v2485, %v2484
        %v2513 = vpack.c.bf16 %v2487, %v2486
        %v2514 = vpack.c.bf16 %v2489, %v2488
        %v2515 = vpack.c.bf16 %v2491, %v2490
        %v2516 = vpack.c.bf16 %v2493, %v2492
        %v2517 = vpack.c.bf16 %v2495, %v2494
        %v2518 = vpack.c.bf16 %v2497, %v2496
        %v2519 = vpack.c.bf16 %v2499, %v2498
        %v2520 = vpack.c.bf16 %v2501, %v2500
        %v2521 = vpack.c.bf16 %v2503, %v2502
        %v2522 = vpack.c.bf16 %v2505, %v2504
        %v2523 = vpack.c.bf16 %v2507, %v2506
        %2524 = vmatprep.subr.bf16.mxu0 %v2508
        %2525 = vmatpush1.bf16.msra.mxu0 %v2460
        %2526 = vmatprep.subr.bf16.mxu0 %v2509
        %2527 = vmatpush1.bf16.msra.mxu0 %v2461
        %2528 = vmatprep.subr.bf16.mxu0 %v2510
        %2529 = vmatpush1.bf16.msra.mxu0 %v2462
        %2530 = vmatprep.subr.bf16.mxu0 %v2511
        %2531 = vmatpush1.bf16.msra.mxu0 %v2463
        %2532 = vmatprep.subr.bf16.mxu0 %v2512
        %2533 = vmatpush1.bf16.msra.mxu0 %v2464
        %2534 = vmatprep.subr.bf16.mxu0 %v2513
        %2535 = vmatpush1.bf16.msra.mxu0 %v2465
        %2536 = vmatprep.subr.bf16.mxu0 %v2514
        %2537 = vmatpush1.bf16.msra.mxu0 %v2466
        %2538 = vmatprep.subr.bf16.mxu0 %v2515
        %2539 = vmatpush1.bf16.msra.mxu0 %v2467
        %2540 = vmatprep.subr.bf16.mxu0 %v2516
        %2541 = vmatpush1.bf16.msra.mxu0 %v2468
        %2542 = vmatprep.subr.bf16.mxu0 %v2517
        %2543 = vmatpush1.bf16.msra.mxu0 %v2469
        %2544 = vmatprep.subr.bf16.mxu0 %v2518
        %2545 = vmatpush1.bf16.msra.mxu0 %v2470
        %2546 = vmatprep.subr.bf16.mxu0 %v2519
        %2547 = vmatpush1.bf16.msra.mxu0 %v2471
        %2548 = vmatprep.subr.bf16.mxu0 %v2520
        %2549 = vmatpush1.bf16.msra.mxu0 %v2472
        %2550 = vmatprep.subr.bf16.mxu0 %v2521
        %2551 = vmatpush1.bf16.msra.mxu0 %v2473
        %2552 = vmatprep.subr.bf16.mxu0 %v2522
        %2553 = vmatpush1.bf16.msra.mxu0 %v2474
        %2554 = vmatprep.subr.bf16.mxu0 %v2523
        %2555 = vmatpush1.bf16.msra.mxu0 %v2475
        %2556 = vmatprep.mubr.bf16.mxu0 %v2029
        %2557 = vmatmul.mubr.bf16.gmra.mrb[0].mxu0 %v2028
        %v2558 = vpop.f32.mrb[0].mxu0
        %v2559 = vadd.f32 0.0, %v2558
        %v2560 = vpop.f32.mrb[0].mxu0
        %v2561 = vadd.f32 0.0, %v2560
        %v2562 = vpop.f32.mrb[0].mxu0
        %v2563 = vadd.f32 0.0, %v2562
        %v2564 = vpop.f32.mrb[0].mxu0
        %v2565 = vadd.f32 0.0, %v2564
        %2566 = vmatprep.mubr.bf16.mxu0 %v2031
        %2567 = vmatmul.mubr.bf16.gmra.mrb[0].mxu0 %v2030
        %v2568 = vpop.f32.mrb[0].mxu0
        %v2569 = vadd.f32 0.0, %v2568
        %v2570 = vpop.f32.mrb[0].mxu0
        %v2571 = vadd.f32 0.0, %v2570
        %v2572 = vpop.f32.mrb[0].mxu0
        %v2573 = vadd.f32 0.0, %v2572
        %v2574 = vpop.f32.mrb[0].mxu0
        %v2575 = vadd.f32 0.0, %v2574
        %2576 = vmatprep.mubr.bf16.mxu0 %v2033
        %2577 = vmatmul.mubr.bf16.gmra.mrb[0].mxu0 %v2032
        %v2578 = vpop.f32.mrb[0].mxu0
        %v2579 = vadd.f32 0.0, %v2578
        %v2580 = vpop.f32.mrb[0].mxu0
        %v2581 = vadd.f32 0.0, %v2580
        %v2582 = vpop.f32.mrb[0].mxu0
        %v2583 = vadd.f32 0.0, %v2582
        %v2584 = vpop.f32.mrb[0].mxu0
        %v2585 = vadd.f32 0.0, %v2584
        %2586 = vmatprep.mubr.bf16.mxu0 %v2035
        %2587 = vmatmul.mubr.bf16.gmra.mrb[0].mxu0 %v2034
        %v2588 = vpop.f32.mrb[0].mxu0
        %v2589 = vadd.f32 0.0, %v2588
        %v2590 = vpop.f32.mrb[0].mxu0
        %v2591 = vadd.f32 0.0, %v2590
        %v2592 = vpop.f32.mrb[0].mxu0
        %v2593 = vadd.f32 0.0, %v2592
        %v2594 = vpop.f32.mrb[0].mxu0
        %v2595 = vadd.f32 0.0, %v2594
        %2596 = vmatprep.mubr.bf16.mxu0 %v2037
        %2597 = vmatmul.mubr.bf16.gmra.mrb[0].mxu0 %v2036
        %v2598 = vpop.f32.mrb[0].mxu0
        %v2599 = vadd.f32 0.0, %v2598
        %v2600 = vpop.f32.mrb[0].mxu0
        %v2601 = vadd.f32 0.0, %v2600
        %v2602 = vpop.f32.mrb[0].mxu0
        %v2603 = vadd.f32 0.0, %v2602
        %v2604 = vpop.f32.mrb[0].mxu0
        %v2605 = vadd.f32 0.0, %v2604
        %2606 = vmatprep.mubr.bf16.mxu0 %v2039
        %2607 = vmatmul.mubr.bf16.gmra.mrb[0].mxu0 %v2038
        %v2608 = vpop.f32.mrb[0].mxu0
        %v2609 = vadd.f32 0.0, %v2608
        %v2610 = vpop.f32.mrb[0].mxu0
        %v2611 = vadd.f32 0.0, %v2610
        %v2612 = vpop.f32.mrb[0].mxu0
        %v2613 = vadd.f32 0.0, %v2612
        %v2614 = vpop.f32.mrb[0].mxu0
        %v2615 = vadd.f32 0.0, %v2614
        %2616 = vmatprep.mubr.bf16.mxu0 %v2041
        %2617 = vmatmul.mubr.bf16.gmra.mrb[0].mxu0 %v2040
        %v2618 = vpop.f32.mrb[0].mxu0
        %v2619 = vadd.f32 0.0, %v2618
        %v2620 = vpop.f32.mrb[0].mxu0
        %v2621 = vadd.f32 0.0, %v2620
        %v2622 = vpop.f32.mrb[0].mxu0
        %v2623 = vadd.f32 0.0, %v2622
        %v2624 = vpop.f32.mrb[0].mxu0
        %v2625 = vadd.f32 0.0, %v2624
        %2626 = vmatprep.mubr.bf16.mxu0 %v2043
        %2627 = vmatmul.mubr.bf16.gmra.mrb[0].mxu0 %v2042
        %v2628 = vpop.f32.mrb[0].mxu0
        %v2629 = vadd.f32 0.0, %v2628
        %v2630 = vpop.f32.mrb[0].mxu0
        %v2631 = vadd.f32 0.0, %v2630
        %v2632 = vpop.f32.mrb[0].mxu0
        %v2633 = vadd.f32 0.0, %v2632
        %v2634 = vpop.f32.mrb[0].mxu0
        %v2635 = vadd.f32 0.0, %v2634
        %2636 = vdwg.mxu0
        %v2637 = vld [vmem:[#allocation4] sm:$0xff]
        %v2638 = vld [vmem:[#allocation4 + $0x8] sm:$0xff]
        %v2639 = vld [vmem:[#allocation4 + $0x10] sm:$0xff]
        %v2640 = vld [vmem:[#allocation4 + $0x18] sm:$0xff]
        %v2641 = vld [vmem:[#allocation4 + $0x20] sm:$0xff]
        %v2642 = vld [vmem:[#allocation4 + $0x28] sm:$0xff]
        %v2643 = vld [vmem:[#allocation4 + $0x30] sm:$0xff]
        %v2644 = vld [vmem:[#allocation4 + $0x38] sm:$0xff]
        %v2645 = vld [vmem:[#allocation4 + $0x40] sm:$0xff]
        %v2646 = vld [vmem:[#allocation4 + $0x48] sm:$0xff]
        %v2647 = vld [vmem:[#allocation4 + $0x50] sm:$0xff]
        %v2648 = vld [vmem:[#allocation4 + $0x58] sm:$0xff]
        %v2649 = vld [vmem:[#allocation4 + $0x60] sm:$0xff]
        %v2650 = vld [vmem:[#allocation4 + $0x68] sm:$0xff]
        %v2651 = vld [vmem:[#allocation4 + $0x70] sm:$0xff]
        %v2652 = vld [vmem:[#allocation4 + $0x78] sm:$0xff]
        %v2654 = vlaneseq
        %v2655 = vshrl.u32 %v2654, 7
        %v2656 = vsub.s32 0, %v2655
        %v2657 = vrot.slane %v2357, %v2656
        %v2659 = vmul.f32 %v2657, %v2637
        %v2660 = vmul.f32 %v2657, %v2638
        %v2661 = vmul.f32 %v2657, %v2639
        %v2662 = vmul.f32 %v2657, %v2640
        %v2663 = vmul.f32 %v2657, %v2641
        %v2664 = vmul.f32 %v2657, %v2642
        %v2665 = vmul.f32 %v2657, %v2643
        %v2666 = vmul.f32 %v2657, %v2644
        %v2667 = vmul.f32 %v2657, %v2645
        %v2668 = vmul.f32 %v2657, %v2646
        %v2669 = vmul.f32 %v2657, %v2647
        %v2670 = vmul.f32 %v2657, %v2648
        %v2671 = vmul.f32 %v2657, %v2649
        %v2672 = vmul.f32 %v2657, %v2650
        %v2673 = vmul.f32 %v2657, %v2651
        %v2674 = vmul.f32 %v2657, %v2652
        %v2675 = vadd.f32 %v2659, %v2559
        %v2676 = vadd.f32 %v2660, %v2563
        %v2677 = vadd.f32 %v2661, %v2569
        %v2678 = vadd.f32 %v2662, %v2573
        %v2679 = vadd.f32 %v2663, %v2579
        %v2680 = vadd.f32 %v2664, %v2583
        %v2681 = vadd.f32 %v2665, %v2589
        %v2682 = vadd.f32 %v2666, %v2593
        %v2683 = vadd.f32 %v2667, %v2599
        %v2684 = vadd.f32 %v2668, %v2603
        %v2685 = vadd.f32 %v2669, %v2609
        %v2686 = vadd.f32 %v2670, %v2613
        %v2687 = vadd.f32 %v2671, %v2619
        %v2688 = vadd.f32 %v2672, %v2623
        %v2689 = vadd.f32 %v2673, %v2629
        %v2690 = vadd.f32 %v2674, %v2633
        %2691 = vst [vmem:[#allocation4] sm:$0xff] %v2675
        %2692 = vst [vmem:[#allocation4 + $0x8] sm:$0xff] %v2676
        %2693 = vst [vmem:[#allocation4 + $0x10] sm:$0xff] %v2677
        %2694 = vst [vmem:[#allocation4 + $0x18] sm:$0xff] %v2678
        %2695 = vst [vmem:[#allocation4 + $0x20] sm:$0xff] %v2679
        %2696 = vst [vmem:[#allocation4 + $0x28] sm:$0xff] %v2680
        %2697 = vst [vmem:[#allocation4 + $0x30] sm:$0xff] %v2681
        %2698 = vst [vmem:[#allocation4 + $0x38] sm:$0xff] %v2682
        %2699 = vst [vmem:[#allocation4 + $0x40] sm:$0xff] %v2683
        %2700 = vst [vmem:[#allocation4 + $0x48] sm:$0xff] %v2684
        %2701 = vst [vmem:[#allocation4 + $0x50] sm:$0xff] %v2685
        %2702 = vst [vmem:[#allocation4 + $0x58] sm:$0xff] %v2686
        %2703 = vst [vmem:[#allocation4 + $0x60] sm:$0xff] %v2687
        %2704 = vst [vmem:[#allocation4 + $0x68] sm:$0xff] %v2688
        %2705 = vst [vmem:[#allocation4 + $0x70] sm:$0xff] %v2689
        %2706 = vst [vmem:[#allocation4 + $0x78] sm:$0xff] %v2690
        %v2707 = vld [vmem:[#allocation5] sm:$0xff]
        %v2708 = vld [vmem:[#allocation5 + $0x8] sm:$0xff]
        %v2709 = vld [vmem:[#allocation5 + $0x10] sm:$0xff]
        %v2710 = vld [vmem:[#allocation5 + $0x18] sm:$0xff]
        %v2711 = vld [vmem:[#allocation5 + $0x20] sm:$0xff]
        %v2712 = vld [vmem:[#allocation5 + $0x28] sm:$0xff]
        %v2713 = vld [vmem:[#allocation5 + $0x30] sm:$0xff]
        %v2714 = vld [vmem:[#allocation5 + $0x38] sm:$0xff]
        %v2715 = vld [vmem:[#allocation5 + $0x40] sm:$0xff]
        %v2716 = vld [vmem:[#allocation5 + $0x48] sm:$0xff]
        %v2717 = vld [vmem:[#allocation5 + $0x50] sm:$0xff]
        %v2718 = vld [vmem:[#allocation5 + $0x58] sm:$0xff]
        %v2719 = vld [vmem:[#allocation5 + $0x60] sm:$0xff]
        %v2720 = vld [vmem:[#allocation5 + $0x68] sm:$0xff]
        %v2721 = vld [vmem:[#allocation5 + $0x70] sm:$0xff]
        %v2722 = vld [vmem:[#allocation5 + $0x78] sm:$0xff]
        %v2723 = vmul.f32 %v2657, %v2707
        %v2724 = vmul.f32 %v2657, %v2708
        %v2725 = vmul.f32 %v2657, %v2709
        %v2726 = vmul.f32 %v2657, %v2710
        %v2727 = vmul.f32 %v2657, %v2711
        %v2728 = vmul.f32 %v2657, %v2712
        %v2729 = vmul.f32 %v2657, %v2713
        %v2730 = vmul.f32 %v2657, %v2714
        %v2731 = vmul.f32 %v2657, %v2715
        %v2732 = vmul.f32 %v2657, %v2716
        %v2733 = vmul.f32 %v2657, %v2717
        %v2734 = vmul.f32 %v2657, %v2718
        %v2735 = vmul.f32 %v2657, %v2719
        %v2736 = vmul.f32 %v2657, %v2720
        %v2737 = vmul.f32 %v2657, %v2721
        %v2738 = vmul.f32 %v2657, %v2722
        %v2739 = vadd.f32 %v2723, %v2561
        %v2740 = vadd.f32 %v2724, %v2565
        %v2741 = vadd.f32 %v2725, %v2571
        %v2742 = vadd.f32 %v2726, %v2575
        %v2743 = vadd.f32 %v2727, %v2581
        %v2744 = vadd.f32 %v2728, %v2585
        %v2745 = vadd.f32 %v2729, %v2591
        %v2746 = vadd.f32 %v2730, %v2595
        %v2747 = vadd.f32 %v2731, %v2601
        %v2748 = vadd.f32 %v2732, %v2605
        %v2749 = vadd.f32 %v2733, %v2611
        %v2750 = vadd.f32 %v2734, %v2615
        %v2751 = vadd.f32 %v2735, %v2621
        %v2752 = vadd.f32 %v2736, %v2625
        %v2753 = vadd.f32 %v2737, %v2631
        %v2754 = vadd.f32 %v2738, %v2635
        %2755 = vst [vmem:[#allocation5] sm:$0xff] %v2739
        %2756 = vst [vmem:[#allocation5 + $0x8] sm:$0xff] %v2740
        %2757 = vst [vmem:[#allocation5 + $0x10] sm:$0xff] %v2741
        %2758 = vst [vmem:[#allocation5 + $0x18] sm:$0xff] %v2742
        %2759 = vst [vmem:[#allocation5 + $0x20] sm:$0xff] %v2743
        %2760 = vst [vmem:[#allocation5 + $0x28] sm:$0xff] %v2744
        %2761 = vst [vmem:[#allocation5 + $0x30] sm:$0xff] %v2745
        %2762 = vst [vmem:[#allocation5 + $0x38] sm:$0xff] %v2746
        %2763 = vst [vmem:[#allocation5 + $0x40] sm:$0xff] %v2747
        %2764 = vst [vmem:[#allocation5 + $0x48] sm:$0xff] %v2748
        %2765 = vst [vmem:[#allocation5 + $0x50] sm:$0xff] %v2749
        %2766 = vst [vmem:[#allocation5 + $0x58] sm:$0xff] %v2750
        %2767 = vst [vmem:[#allocation5 + $0x60] sm:$0xff] %v2751
        %2768 = vst [vmem:[#allocation5 + $0x68] sm:$0xff] %v2752
        %2769 = vst [vmem:[#allocation5 + $0x70] sm:$0xff] %v2753
        %2770 = vst [vmem:[#allocation5 + $0x78] sm:$0xff] %v2754
        %2771 = vst [vmem:[#allocation6] sm:$0x1] %v2354
        %p2772 = scmp.eq.s32.totalorder %s42, 1
        // Predicated region
        $region101: #{tpu_custom_call.1} parent=91 // pred_check
          %p2773 = pneg %p2772
        $region102: #{tpu_custom_call.1} parent=91 // pred_check_branch
          %2775 = sbr.rel (%p2773) target = $region104
        $region103: #{tpu_custom_call.1} parent=91 // pred_region
          %v2776 = vld [vmem:[#allocation4] sm:$0xff]
          %v2777 = vld [vmem:[#allocation4 + $0x8] sm:$0xff]
          %v2778 = vld [vmem:[#allocation4 + $0x10] sm:$0xff]
          %v2779 = vld [vmem:[#allocation4 + $0x18] sm:$0xff]
          %v2780 = vld [vmem:[#allocation4 + $0x20] sm:$0xff]
          %v2781 = vld [vmem:[#allocation4 + $0x28] sm:$0xff]
          %v2782 = vld [vmem:[#allocation4 + $0x30] sm:$0xff]
          %v2783 = vld [vmem:[#allocation4 + $0x38] sm:$0xff]
          %v2784 = vld [vmem:[#allocation4 + $0x40] sm:$0xff]
          %v2785 = vld [vmem:[#allocation4 + $0x48] sm:$0xff]
          %v2786 = vld [vmem:[#allocation4 + $0x50] sm:$0xff]
          %v2787 = vld [vmem:[#allocation4 + $0x58] sm:$0xff]
          %v2788 = vld [vmem:[#allocation4 + $0x60] sm:$0xff]
          %v2789 = vld [vmem:[#allocation4 + $0x68] sm:$0xff]
          %v2790 = vld [vmem:[#allocation4 + $0x70] sm:$0xff]
          %v2791 = vld [vmem:[#allocation4 + $0x78] sm:$0xff]
          %vm2792 = vcmp.gt.f32.partialorder %v2776, 0.0
          %vm2793 = vcmp.gt.f32.partialorder %v2777, 0.0
          %vm2794 = vcmp.gt.f32.partialorder %v2778, 0.0
          %vm2795 = vcmp.gt.f32.partialorder %v2779, 0.0
          %vm2796 = vcmp.gt.f32.partialorder %v2780, 0.0
          %vm2797 = vcmp.gt.f32.partialorder %v2781, 0.0
          %vm2798 = vcmp.gt.f32.partialorder %v2782, 0.0
          %vm2799 = vcmp.gt.f32.partialorder %v2783, 0.0
          %vm2800 = vcmp.gt.f32.partialorder %v2784, 0.0
          %vm2801 = vcmp.gt.f32.partialorder %v2785, 0.0
          %vm2802 = vcmp.gt.f32.partialorder %v2786, 0.0
          %vm2803 = vcmp.gt.f32.partialorder %v2787, 0.0
          %vm2804 = vcmp.gt.f32.partialorder %v2788, 0.0
          %vm2805 = vcmp.gt.f32.partialorder %v2789, 0.0
          %vm2806 = vcmp.gt.f32.partialorder %v2790, 0.0
          %vm2807 = vcmp.gt.f32.partialorder %v2791, 0.0
          %v2808 = vsel %vm2792, %v2776, 1.0
          %v2809 = vsel %vm2793, %v2777, 1.0
          %v2810 = vsel %vm2794, %v2778, 1.0
          %v2811 = vsel %vm2795, %v2779, 1.0
          %v2812 = vsel %vm2796, %v2780, 1.0
          %v2813 = vsel %vm2797, %v2781, 1.0
          %v2814 = vsel %vm2798, %v2782, 1.0
          %v2815 = vsel %vm2799, %v2783, 1.0
          %v2816 = vsel %vm2800, %v2784, 1.0
          %v2817 = vsel %vm2801, %v2785, 1.0
          %v2818 = vsel %vm2802, %v2786, 1.0
          %v2819 = vsel %vm2803, %v2787, 1.0
          %v2820 = vsel %vm2804, %v2788, 1.0
          %v2821 = vsel %vm2805, %v2789, 1.0
          %v2822 = vsel %vm2806, %v2790, 1.0
          %v2823 = vsel %vm2807, %v2791, 1.0
          %v2824 = vrcp.pop %v2808
          %v2825 = vrcp.pop %v2809
          %v2826 = vrcp.pop %v2810
          %v2827 = vrcp.pop %v2811
          %v2828 = vrcp.pop %v2812
          %v2829 = vrcp.pop %v2813
          %v2830 = vrcp.pop %v2814
          %v2831 = vrcp.pop %v2815
          %v2832 = vrcp.pop %v2816
          %v2833 = vrcp.pop %v2817
          %v2834 = vrcp.pop %v2818
          %v2835 = vrcp.pop %v2819
          %v2836 = vrcp.pop %v2820
          %v2837 = vrcp.pop %v2821
          %v2838 = vrcp.pop %v2822
          %v2839 = vrcp.pop %v2823
          %v2840 = vld [vmem:[#allocation5] sm:$0xff]
          %v2841 = vld [vmem:[#allocation5 + $0x8] sm:$0xff]
          %v2842 = vld [vmem:[#allocation5 + $0x10] sm:$0xff]
          %v2843 = vld [vmem:[#allocation5 + $0x18] sm:$0xff]
          %v2844 = vld [vmem:[#allocation5 + $0x20] sm:$0xff]
          %v2845 = vld [vmem:[#allocation5 + $0x28] sm:$0xff]
          %v2846 = vld [vmem:[#allocation5 + $0x30] sm:$0xff]
          %v2847 = vld [vmem:[#allocation5 + $0x38] sm:$0xff]
          %v2848 = vld [vmem:[#allocation5 + $0x40] sm:$0xff]
          %v2849 = vld [vmem:[#allocation5 + $0x48] sm:$0xff]
          %v2850 = vld [vmem:[#allocation5 + $0x50] sm:$0xff]
          %v2851 = vld [vmem:[#allocation5 + $0x58] sm:$0xff]
          %v2852 = vld [vmem:[#allocation5 + $0x60] sm:$0xff]
          %v2853 = vld [vmem:[#allocation5 + $0x68] sm:$0xff]
          %v2854 = vld [vmem:[#allocation5 + $0x70] sm:$0xff]
          %v2855 = vld [vmem:[#allocation5 + $0x78] sm:$0xff]
          %v2856 = vmul.f32 %v2840, %v2824
          %v2857 = vmul.f32 %v2841, %v2825
          %v2858 = vmul.f32 %v2842, %v2826
          %v2859 = vmul.f32 %v2843, %v2827
          %v2860 = vmul.f32 %v2844, %v2828
          %v2861 = vmul.f32 %v2845, %v2829
          %v2862 = vmul.f32 %v2846, %v2830
          %v2863 = vmul.f32 %v2847, %v2831
          %v2864 = vmul.f32 %v2848, %v2832
          %v2865 = vmul.f32 %v2849, %v2833
          %v2866 = vmul.f32 %v2850, %v2834
          %v2867 = vmul.f32 %v2851, %v2835
          %v2868 = vmul.f32 %v2852, %v2836
          %v2869 = vmul.f32 %v2853, %v2837
          %v2870 = vmul.f32 %v2854, %v2838
          %v2871 = vmul.f32 %v2855, %v2839
          %v2872 = vadd.f32 %v2856, %v1375
          %v2873 = vadd.f32 %v2857, %v1376
          %v2874 = vadd.f32 %v2858, %v1377
          %v2875 = vadd.f32 %v2859, %v1378
          %v2876 = vadd.f32 %v2860, %v1379
          %v2877 = vadd.f32 %v2861, %v1380
          %v2878 = vadd.f32 %v2862, %v1381
          %v2879 = vadd.f32 %v2863, %v1382
          %v2880 = vadd.f32 %v2864, %v1383
          %v2881 = vadd.f32 %v2865, %v1384
          %v2882 = vadd.f32 %v2866, %v1385
          %v2883 = vadd.f32 %v2867, %v1386
          %v2884 = vadd.f32 %v2868, %v1387
          %v2885 = vadd.f32 %v2869, %v1388
          %v2886 = vadd.f32 %v2870, %v1389
          %v2887 = vadd.f32 %v2871, %v1390
          %v2888 = vpack.c.bf16 %v2873, %v2872
          %v2889 = vpack.c.bf16 %v2875, %v2874
          %v2890 = vpack.c.bf16 %v2877, %v2876
          %v2891 = vpack.c.bf16 %v2879, %v2878
          %v2892 = vpack.c.bf16 %v2881, %v2880
          %v2893 = vpack.c.bf16 %v2883, %v2882
          %v2894 = vpack.c.bf16 %v2885, %v2884
          %v2895 = vpack.c.bf16 %v2887, %v2886
          %v2896 = vld [vmem:[%s787] sm:$0xf]
          %v2897 = vld [vmem:[%s787 + $0x4] sm:$0xf]
          %v2898 = vld [vmem:[%s787 + $0x8] sm:$0xf]
          %v2899 = vld [vmem:[%s787 + $0xc] sm:$0xf]
          %v2900 = vld [vmem:[%s787 + $0x10] sm:$0xf]
          %v2901 = vld [vmem:[%s787 + $0x14] sm:$0xf]
          %v2902 = vld [vmem:[%s787 + $0x18] sm:$0xf]
          %v2903 = vld [vmem:[%s787 + $0x1c] sm:$0xf]
          %v2904 = vld [vmem:[%s787 + $0x20] sm:$0xf]
          %v2905 = vld [vmem:[%s787 + $0x24] sm:$0xf]
          %v2906 = vld [vmem:[%s787 + $0x28] sm:$0xf]
          %v2907 = vld [vmem:[%s787 + $0x2c] sm:$0xf]
          %v2908 = vld [vmem:[%s787 + $0x30] sm:$0xf]
          %v2909 = vld [vmem:[%s787 + $0x34] sm:$0xf]
          %v2910 = vld [vmem:[%s787 + $0x38] sm:$0xf]
          %v2911 = vld [vmem:[%s787 + $0x3c] sm:$0xf]
          %v2912 = vld [vmem:[%s790] sm:$0x1]
          %v2914 = vlaneseq
          %v2915 = vshrl.u32 %v2914, 7
          %v2916 = vsub.s32 0, %v2915
          %v2917 = vrot.slane %v2912, %v2916
          %v2935 = vunpack.c.l.b16 %v2896
          %v2936 = vunpack.c.l.b16 %v2897
          %v2937 = vunpack.c.l.b16 %v2898
          %v2938 = vunpack.c.l.b16 %v2899
          %v2939 = vunpack.c.l.b16 %v2900
          %v2940 = vunpack.c.l.b16 %v2901
          %v2941 = vunpack.c.l.b16 %v2902
          %v2942 = vunpack.c.l.b16 %v2903
          %v2943 = vunpack.c.l.b16 %v2904
          %v2944 = vunpack.c.l.b16 %v2905
          %v2945 = vunpack.c.l.b16 %v2906
          %v2946 = vunpack.c.l.b16 %v2907
          %v2947 = vunpack.c.l.b16 %v2908
          %v2948 = vunpack.c.l.b16 %v2909
          %v2949 = vunpack.c.l.b16 %v2910
          %v2950 = vunpack.c.l.b16 %v2911
          %v2951 = vpack.c.b16 %v2936, %v2935
          %v2952 = vpack.c.b16 %v2938, %v2937
          %v2953 = vpack.c.b16 %v2940, %v2939
          %v2954 = vpack.c.b16 %v2942, %v2941
          %v2955 = vpack.c.b16 %v2944, %v2943
          %v2956 = vpack.c.b16 %v2946, %v2945
          %v2957 = vpack.c.b16 %v2948, %v2947
          %v2958 = vpack.c.b16 %v2950, %v2949
          %2967 = vmatprep.subr.bf16.mxu0 0
          %2968 = vmatpush1.bf16.msra.mxu0 %v2951
          %2969 = vmatprep.subr.bf16.mxu0 0
          %2970 = vmatpush1.bf16.msra.mxu0 %v2952
          %2971 = vmatprep.subr.bf16.mxu0 0
          %2972 = vmatpush1.bf16.msra.mxu0 %v2953
          %2973 = vmatprep.subr.bf16.mxu0 0
          %2974 = vmatpush1.bf16.msra.mxu0 %v2954
          %2975 = vmatprep.subr.bf16.mxu0 0
          %2976 = vmatpush1.bf16.msra.mxu0 %v2955
          %2977 = vmatprep.subr.bf16.mxu0 0
          %2978 = vmatpush1.bf16.msra.mxu0 %v2956
          %2979 = vmatprep.subr.bf16.mxu0 0
          %2980 = vmatpush1.bf16.msra.mxu0 %v2957
          %2981 = vmatprep.subr.bf16.mxu0 0
          %2982 = vmatpush1.bf16.msra.mxu0 %v2958
          %2983 = vmatprep.subr.bf16.mxu0 0
          %2984 = vmatpush1.bf16.msra.mxu0 0
          %2985 = vmatprep.subr.bf16.mxu0 0
          %2986 = vmatpush1.bf16.msra.mxu0 0
          %2987 = vmatprep.subr.bf16.mxu0 0
          %2988 = vmatpush1.bf16.msra.mxu0 0
          %2989 = vmatprep.subr.bf16.mxu0 0
          %2990 = vmatpush1.bf16.msra.mxu0 0
          %2991 = vmatprep.subr.bf16.mxu0 0
          %2992 = vmatpush1.bf16.msra.mxu0 0
          %2993 = vmatprep.subr.bf16.mxu0 0
          %2994 = vmatpush1.bf16.msra.mxu0 0
          %2995 = vmatprep.subr.bf16.mxu0 0
          %2996 = vmatpush1.bf16.msra.mxu0 0
          %2997 = vmatprep.subr.bf16.mxu0 0
          %2998 = vmatpush1.bf16.msra.mxu0 0
          %2999 = vmatprep.mubr.bf16.mxu0 0
          %3000 = vmatmul.mubr.bf16.gmra.mrb[0].mxu0 %v2888
          %v3001 = vpop.f32.mrb[0].mxu0
          %v3002 = vadd.f32 %v2917, %v3001
          %v3003 = vpop.f32.mrb[0].mxu0
          %v3004 = vpop.f32.mrb[0].mxu0
          %v3005 = vadd.f32 %v2917, %v3004
          %v3006 = vpop.f32.mrb[0].mxu0
          %3007 = vmatprep.mubr.bf16.mxu0 0
          %3008 = vmatmul.mubr.bf16.gmra.mrb[0].mxu0 %v2889
          %v3009 = vpop.f32.mrb[0].mxu0
          %v3010 = vadd.f32 %v2917, %v3009
          %v3011 = vpop.f32.mrb[0].mxu0
          %v3012 = vpop.f32.mrb[0].mxu0
          %v3013 = vadd.f32 %v2917, %v3012
          %v3014 = vpop.f32.mrb[0].mxu0
          %3015 = vmatprep.mubr.bf16.mxu0 0
          %3016 = vmatmul.mubr.bf16.gmra.mrb[0].mxu0 %v2890
          %v3017 = vpop.f32.mrb[0].mxu0
          %v3018 = vadd.f32 %v2917, %v3017
          %v3019 = vpop.f32.mrb[0].mxu0
          %v3020 = vpop.f32.mrb[0].mxu0
          %v3021 = vadd.f32 %v2917, %v3020
          %v3022 = vpop.f32.mrb[0].mxu0
          %3023 = vmatprep.mubr.bf16.mxu0 0
          %3024 = vmatmul.mubr.bf16.gmra.mrb[0].mxu0 %v2891
          %v3025 = vpop.f32.mrb[0].mxu0
          %v3026 = vadd.f32 %v2917, %v3025
          %v3027 = vpop.f32.mrb[0].mxu0
          %v3028 = vpop.f32.mrb[0].mxu0
          %v3029 = vadd.f32 %v2917, %v3028
          %v3030 = vpop.f32.mrb[0].mxu0
          %3031 = vmatprep.mubr.bf16.mxu0 0
          %3032 = vmatmul.mubr.bf16.gmra.mrb[0].mxu0 %v2892
          %v3033 = vpop.f32.mrb[0].mxu0
          %v3034 = vadd.f32 %v2917, %v3033
          %v3035 = vpop.f32.mrb[0].mxu0
          %v3036 = vpop.f32.mrb[0].mxu0
          %v3037 = vadd.f32 %v2917, %v3036
          %v3038 = vpop.f32.mrb[0].mxu0
          %3039 = vmatprep.mubr.bf16.mxu0 0
          %3040 = vmatmul.mubr.bf16.gmra.mrb[0].mxu0 %v2893
          %v3041 = vpop.f32.mrb[0].mxu0
          %v3042 = vadd.f32 %v2917, %v3041
          %v3043 = vpop.f32.mrb[0].mxu0
          %v3044 = vpop.f32.mrb[0].mxu0
          %v3045 = vadd.f32 %v2917, %v3044
          %v3046 = vpop.f32.mrb[0].mxu0
          %3047 = vmatprep.mubr.bf16.mxu0 0
          %3048 = vmatmul.mubr.bf16.gmra.mrb[0].mxu0 %v2894
          %v3049 = vpop.f32.mrb[0].mxu0
          %v3050 = vadd.f32 %v2917, %v3049
          %v3051 = vpop.f32.mrb[0].mxu0
          %v3052 = vpop.f32.mrb[0].mxu0
          %v3053 = vadd.f32 %v2917, %v3052
          %v3054 = vpop.f32.mrb[0].mxu0
          %3055 = vmatprep.mubr.bf16.mxu0 0
          %3056 = vmatmul.mubr.bf16.gmra.mrb[0].mxu0 %v2895
          %v3057 = vpop.f32.mrb[0].mxu0
          %v3058 = vadd.f32 %v2917, %v3057
          %v3059 = vpop.f32.mrb[0].mxu0
          %v3060 = vpop.f32.mrb[0].mxu0
          %v3061 = vadd.f32 %v2917, %v3060
          %v3062 = vpop.f32.mrb[0].mxu0
          %3063 = vdwg.mxu0
          %v3064 = vld [vmem:[%s793] sm:$0x1]
          %v3065 = vld [vmem:[%s796] sm:$0x1]
          %3066 = vadd.xlane.f32.xlu0 %v3002
          %v3067 = vpop.xlane.xlu0 %3066
          %3068 = vadd.xlane.f32.xlu0 %v3005
          %v3069 = vpop.xlane.xlu0 %3068
          %3070 = vadd.xlane.f32.xlu0 %v3010
          %v3071 = vpop.xlane.xlu0 %3070
          %3072 = vadd.xlane.f32.xlu0 %v3013
          %v3073 = vpop.xlane.xlu0 %3072
          %3074 = vadd.xlane.f32.xlu0 %v3018
          %v3075 = vpop.xlane.xlu0 %3074
          %3076 = vadd.xlane.f32.xlu0 %v3021
          %v3077 = vpop.xlane.xlu0 %3076
          %3078 = vadd.xlane.f32.xlu0 %v3026
          %v3079 = vpop.xlane.xlu0 %3078
          %3080 = vadd.xlane.f32.xlu0 %v3029
          %v3081 = vpop.xlane.xlu0 %3080
          %3082 = vadd.xlane.f32.xlu0 %v3034
          %v3083 = vpop.xlane.xlu0 %3082
          %3084 = vadd.xlane.f32.xlu0 %v3037
          %v3085 = vpop.xlane.xlu0 %3084
          %3086 = vadd.xlane.f32.xlu0 %v3042
          %v3087 = vpop.xlane.xlu0 %3086
          %3088 = vadd.xlane.f32.xlu0 %v3045
          %v3089 = vpop.xlane.xlu0 %3088
          %3090 = vadd.xlane.f32.xlu0 %v3050
          %v3091 = vpop.xlane.xlu0 %3090
          %3092 = vadd.xlane.f32.xlu0 %v3053
          %v3093 = vpop.xlane.xlu0 %3092
          %3094 = vadd.xlane.f32.xlu0 %v3058
          %v3095 = vpop.xlane.xlu0 %3094
          %3096 = vadd.xlane.f32.xlu0 %v3061
          %v3097 = vpop.xlane.xlu0 %3096
          %v3098 = vmul.f32 %v3067, 0.015625
          %v3099 = vmul.f32 %v3069, 0.015625
          %v3100 = vmul.f32 %v3071, 0.015625
          %v3101 = vmul.f32 %v3073, 0.015625
          %v3102 = vmul.f32 %v3075, 0.015625
          %v3103 = vmul.f32 %v3077, 0.015625
          %v3104 = vmul.f32 %v3079, 0.015625
          %v3105 = vmul.f32 %v3081, 0.015625
          %v3106 = vmul.f32 %v3083, 0.015625
          %v3107 = vmul.f32 %v3085, 0.015625
          %v3108 = vmul.f32 %v3087, 0.015625
          %v3109 = vmul.f32 %v3089, 0.015625
          %v3110 = vmul.f32 %v3091, 0.015625
          %v3111 = vmul.f32 %v3093, 0.015625
          %v3112 = vmul.f32 %v3095, 0.015625
          %v3113 = vmul.f32 %v3097, 0.015625
          %v3114 = vmul.f32 %v3002, %v3002
          %v3115 = vmul.f32 %v3005, %v3005
          %v3116 = vmul.f32 %v3010, %v3010
          %v3117 = vmul.f32 %v3013, %v3013
          %v3118 = vmul.f32 %v3018, %v3018
          %v3119 = vmul.f32 %v3021, %v3021
          %v3120 = vmul.f32 %v3026, %v3026
          %v3121 = vmul.f32 %v3029, %v3029
          %v3122 = vmul.f32 %v3034, %v3034
          %v3123 = vmul.f32 %v3037, %v3037
          %v3124 = vmul.f32 %v3042, %v3042
          %v3125 = vmul.f32 %v3045, %v3045
          %v3126 = vmul.f32 %v3050, %v3050
          %v3127 = vmul.f32 %v3053, %v3053
          %v3128 = vmul.f32 %v3058, %v3058
          %v3129 = vmul.f32 %v3061, %v3061
          %3130 = vadd.xlane.f32.xlu0 %v3114
          %v3131 = vpop.xlane.xlu0 %3130
          %3132 = vadd.xlane.f32.xlu0 %v3115
          %v3133 = vpop.xlane.xlu0 %3132
          %3134 = vadd.xlane.f32.xlu0 %v3116
          %v3135 = vpop.xlane.xlu0 %3134
          %3136 = vadd.xlane.f32.xlu0 %v3117
          %v3137 = vpop.xlane.xlu0 %3136
          %3138 = vadd.xlane.f32.xlu0 %v3118
          %v3139 = vpop.xlane.xlu0 %3138
          %3140 = vadd.xlane.f32.xlu0 %v3119
          %v3141 = vpop.xlane.xlu0 %3140
          %3142 = vadd.xlane.f32.xlu0 %v3120
          %v3143 = vpop.xlane.xlu0 %3142
          %3144 = vadd.xlane.f32.xlu0 %v3121
          %v3145 = vpop.xlane.xlu0 %3144
          %3146 = vadd.xlane.f32.xlu0 %v3122
          %v3147 = vpop.xlane.xlu0 %3146
          %3148 = vadd.xlane.f32.xlu0 %v3123
          %v3149 = vpop.xlane.xlu0 %3148
          %3150 = vadd.xlane.f32.xlu0 %v3124
          %v3151 = vpop.xlane.xlu0 %3150
          %3152 = vadd.xlane.f32.xlu0 %v3125
          %v3153 = vpop.xlane.xlu0 %3152
          %3154 = vadd.xlane.f32.xlu0 %v3126
          %v3155 = vpop.xlane.xlu0 %3154
          %3156 = vadd.xlane.f32.xlu0 %v3127
          %v3157 = vpop.xlane.xlu0 %3156
          %3158 = vadd.xlane.f32.xlu0 %v3128
          %v3159 = vpop.xlane.xlu0 %3158
          %3160 = vadd.xlane.f32.xlu0 %v3129
          %v3161 = vpop.xlane.xlu0 %3160
          %v3162 = vmul.f32 %v3131, 0.015625
          %v3163 = vmul.f32 %v3133, 0.015625
          %v3164 = vmul.f32 %v3135, 0.015625
          %v3165 = vmul.f32 %v3137, 0.015625
          %v3166 = vmul.f32 %v3139, 0.015625
          %v3167 = vmul.f32 %v3141, 0.015625
          %v3168 = vmul.f32 %v3143, 0.015625
          %v3169 = vmul.f32 %v3145, 0.015625
          %v3170 = vmul.f32 %v3147, 0.015625
          %v3171 = vmul.f32 %v3149, 0.015625
          %v3172 = vmul.f32 %v3151, 0.015625
          %v3173 = vmul.f32 %v3153, 0.015625
          %v3174 = vmul.f32 %v3155, 0.015625
          %v3175 = vmul.f32 %v3157, 0.015625
          %v3176 = vmul.f32 %v3159, 0.015625
          %v3177 = vmul.f32 %v3161, 0.015625
          %v3178 = vmul.f32 %v3098, %v3098
          %v3179 = vmul.f32 %v3099, %v3099
          %v3180 = vmul.f32 %v3100, %v3100
          %v3181 = vmul.f32 %v3101, %v3101
          %v3182 = vmul.f32 %v3102, %v3102
          %v3183 = vmul.f32 %v3103, %v3103
          %v3184 = vmul.f32 %v3104, %v3104
          %v3185 = vmul.f32 %v3105, %v3105
          %v3186 = vmul.f32 %v3106, %v3106
          %v3187 = vmul.f32 %v3107, %v3107
          %v3188 = vmul.f32 %v3108, %v3108
          %v3189 = vmul.f32 %v3109, %v3109
          %v3190 = vmul.f32 %v3110, %v3110
          %v3191 = vmul.f32 %v3111, %v3111
          %v3192 = vmul.f32 %v3112, %v3112
          %v3193 = vmul.f32 %v3113, %v3113
          %v3194 = vsub.f32 %v3162, %v3178
          %v3195 = vsub.f32 %v3163, %v3179
          %v3196 = vsub.f32 %v3164, %v3180
          %v3197 = vsub.f32 %v3165, %v3181
          %v3198 = vsub.f32 %v3166, %v3182
          %v3199 = vsub.f32 %v3167, %v3183
          %v3200 = vsub.f32 %v3168, %v3184
          %v3201 = vsub.f32 %v3169, %v3185
          %v3202 = vsub.f32 %v3170, %v3186
          %v3203 = vsub.f32 %v3171, %v3187
          %v3204 = vsub.f32 %v3172, %v3188
          %v3205 = vsub.f32 %v3173, %v3189
          %v3206 = vsub.f32 %v3174, %v3190
          %v3207 = vsub.f32 %v3175, %v3191
          %v3208 = vsub.f32 %v3176, %v3192
          %v3209 = vsub.f32 %v3177, %v3193
          %v3210 = vmax.f32 %v3194, 0.0
          %v3211 = vmax.f32 %v3195, 0.0
          %v3212 = vmax.f32 %v3196, 0.0
          %v3213 = vmax.f32 %v3197, 0.0
          %v3214 = vmax.f32 %v3198, 0.0
          %v3215 = vmax.f32 %v3199, 0.0
          %v3216 = vmax.f32 %v3200, 0.0
          %v3217 = vmax.f32 %v3201, 0.0
          %v3218 = vmax.f32 %v3202, 0.0
          %v3219 = vmax.f32 %v3203, 0.0
          %v3220 = vmax.f32 %v3204, 0.0
          %v3221 = vmax.f32 %v3205, 0.0
          %v3222 = vmax.f32 %v3206, 0.0
          %v3223 = vmax.f32 %v3207, 0.0
          %v3224 = vmax.f32 %v3208, 0.0
          %v3225 = vmax.f32 %v3209, 0.0
          %v3226 = vsub.f32 %v3002, %v3098
          %v3227 = vsub.f32 %v3005, %v3099
          %v3228 = vsub.f32 %v3010, %v3100
          %v3229 = vsub.f32 %v3013, %v3101
          %v3230 = vsub.f32 %v3018, %v3102
          %v3231 = vsub.f32 %v3021, %v3103
          %v3232 = vsub.f32 %v3026, %v3104
          %v3233 = vsub.f32 %v3029, %v3105
          %v3234 = vsub.f32 %v3034, %v3106
          %v3235 = vsub.f32 %v3037, %v3107
          %v3236 = vsub.f32 %v3042, %v3108
          %v3237 = vsub.f32 %v3045, %v3109
          %v3238 = vsub.f32 %v3050, %v3110
          %v3239 = vsub.f32 %v3053, %v3111
          %v3240 = vsub.f32 %v3058, %v3112
          %v3241 = vsub.f32 %v3061, %v3113
          %v3242 = vadd.f32 %v3210, 1e-05
          %v3243 = vadd.f32 %v3211, 1e-05
          %v3244 = vadd.f32 %v3212, 1e-05
          %v3245 = vadd.f32 %v3213, 1e-05
          %v3246 = vadd.f32 %v3214, 1e-05
          %v3247 = vadd.f32 %v3215, 1e-05
          %v3248 = vadd.f32 %v3216, 1e-05
          %v3249 = vadd.f32 %v3217, 1e-05
          %v3250 = vadd.f32 %v3218, 1e-05
          %v3251 = vadd.f32 %v3219, 1e-05
          %v3252 = vadd.f32 %v3220, 1e-05
          %v3253 = vadd.f32 %v3221, 1e-05
          %v3254 = vadd.f32 %v3222, 1e-05
          %v3255 = vadd.f32 %v3223, 1e-05
          %v3256 = vadd.f32 %v3224, 1e-05
          %v3257 = vadd.f32 %v3225, 1e-05
          %v3258 = vrsqrt.pop %v3242
          %v3259 = vrsqrt.pop %v3243
          %v3260 = vrsqrt.pop %v3244
          %v3261 = vrsqrt.pop %v3245
          %v3262 = vrsqrt.pop %v3246
          %v3263 = vrsqrt.pop %v3247
          %v3264 = vrsqrt.pop %v3248
          %v3265 = vrsqrt.pop %v3249
          %v3266 = vrsqrt.pop %v3250
          %v3267 = vrsqrt.pop %v3251
          %v3268 = vrsqrt.pop %v3252
          %v3269 = vrsqrt.pop %v3253
          %v3270 = vrsqrt.pop %v3254
          %v3271 = vrsqrt.pop %v3255
          %v3272 = vrsqrt.pop %v3256
          %v3273 = vrsqrt.pop %v3257
          %v3274 = vmul.f32 %v3226, %v3258
          %v3275 = vmul.f32 %v3227, %v3259
          %v3276 = vmul.f32 %v3228, %v3260
          %v3277 = vmul.f32 %v3229, %v3261
          %v3278 = vmul.f32 %v3230, %v3262
          %v3279 = vmul.f32 %v3231, %v3263
          %v3280 = vmul.f32 %v3232, %v3264
          %v3281 = vmul.f32 %v3233, %v3265
          %v3282 = vmul.f32 %v3234, %v3266
          %v3283 = vmul.f32 %v3235, %v3267
          %v3284 = vmul.f32 %v3236, %v3268
          %v3285 = vmul.f32 %v3237, %v3269
          %v3286 = vmul.f32 %v3238, %v3270
          %v3287 = vmul.f32 %v3239, %v3271
          %v3288 = vmul.f32 %v3240, %v3272
          %v3289 = vmul.f32 %v3241, %v3273
          %v3291 = vlaneseq
          %v3292 = vshrl.u32 %v3291, 7
          %v3293 = vsub.s32 0, %v3292
          %v3294 = vrot.slane %v3064, %v3293
          %v3296 = vmul.f32 %v3274, %v3294
          %v3297 = vmul.f32 %v3275, %v3294
          %v3298 = vmul.f32 %v3276, %v3294
          %v3299 = vmul.f32 %v3277, %v3294
          %v3300 = vmul.f32 %v3278, %v3294
          %v3301 = vmul.f32 %v3279, %v3294
          %v3302 = vmul.f32 %v3280, %v3294
          %v3303 = vmul.f32 %v3281, %v3294
          %v3304 = vmul.f32 %v3282, %v3294
          %v3305 = vmul.f32 %v3283, %v3294
          %v3306 = vmul.f32 %v3284, %v3294
          %v3307 = vmul.f32 %v3285, %v3294
          %v3308 = vmul.f32 %v3286, %v3294
          %v3309 = vmul.f32 %v3287, %v3294
          %v3310 = vmul.f32 %v3288, %v3294
          %v3311 = vmul.f32 %v3289, %v3294
          %v3313 = vlaneseq
          %v3314 = vshrl.u32 %v3313, 7
          %v3315 = vsub.s32 0, %v3314
          %v3316 = vrot.slane %v3065, %v3315
          %v3318 = vadd.f32 %v3296, %v3316
          %v3319 = vadd.f32 %v3297, %v3316
          %v3320 = vadd.f32 %v3298, %v3316
          %v3321 = vadd.f32 %v3299, %v3316
          %v3322 = vadd.f32 %v3300, %v3316
          %v3323 = vadd.f32 %v3301, %v3316
          %v3324 = vadd.f32 %v3302, %v3316
          %v3325 = vadd.f32 %v3303, %v3316
          %v3326 = vadd.f32 %v3304, %v3316
          %v3327 = vadd.f32 %v3305, %v3316
          %v3328 = vadd.f32 %v3306, %v3316
          %v3329 = vadd.f32 %v3307, %v3316
          %v3330 = vadd.f32 %v3308, %v3316
          %v3331 = vadd.f32 %v3309, %v3316
          %v3332 = vadd.f32 %v3310, %v3316
          %v3333 = vadd.f32 %v3311, %v3316
          %v3334 = vmax.f32 %v3318, 0.0
          %v3335 = vmax.f32 %v3319, 0.0
          %v3336 = vmax.f32 %v3320, 0.0
          %v3337 = vmax.f32 %v3321, 0.0
          %v3338 = vmax.f32 %v3322, 0.0
          %v3339 = vmax.f32 %v3323, 0.0
          %v3340 = vmax.f32 %v3324, 0.0
          %v3341 = vmax.f32 %v3325, 0.0
          %v3342 = vmax.f32 %v3326, 0.0
          %v3343 = vmax.f32 %v3327, 0.0
          %v3344 = vmax.f32 %v3328, 0.0
          %v3345 = vmax.f32 %v3329, 0.0
          %v3346 = vmax.f32 %v3330, 0.0
          %v3347 = vmax.f32 %v3331, 0.0
          %v3348 = vmax.f32 %v3332, 0.0
          %v3349 = vmax.f32 %v3333, 0.0
          %v3350 = vld [vmem:[#allocation2] sm:$0xff]
          %v3351 = vld [vmem:[#allocation2 + $0x8] sm:$0xff]
          %v3352 = vld [vmem:[#allocation2 + $0x10] sm:$0xff]
          %v3353 = vld [vmem:[#allocation2 + $0x18] sm:$0xff]
          %v3354 = vld [vmem:[#allocation2 + $0x20] sm:$0xff]
          %v3355 = vld [vmem:[#allocation2 + $0x28] sm:$0xff]
          %v3356 = vld [vmem:[#allocation2 + $0x30] sm:$0xff]
          %v3357 = vld [vmem:[#allocation2 + $0x38] sm:$0xff]
          %v3358 = vld [vmem:[#allocation2 + $0x40] sm:$0xff]
          %v3359 = vld [vmem:[#allocation2 + $0x48] sm:$0xff]
          %v3360 = vld [vmem:[#allocation2 + $0x50] sm:$0xff]
          %v3361 = vld [vmem:[#allocation2 + $0x58] sm:$0xff]
          %v3362 = vld [vmem:[#allocation2 + $0x60] sm:$0xff]
          %v3363 = vld [vmem:[#allocation2 + $0x68] sm:$0xff]
          %v3364 = vld [vmem:[#allocation2 + $0x70] sm:$0xff]
          %v3365 = vld [vmem:[#allocation2 + $0x78] sm:$0xff]
          %v3366 = vpack.c.bf16 %v3335, %v3334
          %v3367 = vpack.c.bf16 %v3337, %v3336
          %v3368 = vpack.c.bf16 %v3339, %v3338
          %v3369 = vpack.c.bf16 %v3341, %v3340
          %v3370 = vpack.c.bf16 %v3343, %v3342
          %v3371 = vpack.c.bf16 %v3345, %v3344
          %v3372 = vpack.c.bf16 %v3347, %v3346
          %v3373 = vpack.c.bf16 %v3349, %v3348
          %v3374 = vld [vmem:[%s801] sm:$0xf]
          %v3375 = vld [vmem:[%s801 + $0x4] sm:$0xf]
          %v3376 = vld [vmem:[%s801 + $0x8] sm:$0xf]
          %v3377 = vld [vmem:[%s801 + $0xc] sm:$0xf]
          %v3378 = vld [vmem:[%s801 + $0x10] sm:$0xf]
          %v3379 = vld [vmem:[%s801 + $0x14] sm:$0xf]
          %v3380 = vld [vmem:[%s801 + $0x18] sm:$0xf]
          %v3381 = vld [vmem:[%s801 + $0x1c] sm:$0xf]
          %v3382 = vld [vmem:[%s801 + $0x20] sm:$0xf]
          %v3383 = vld [vmem:[%s801 + $0x24] sm:$0xf]
          %v3384 = vld [vmem:[%s801 + $0x28] sm:$0xf]
          %v3385 = vld [vmem:[%s801 + $0x2c] sm:$0xf]
          %v3386 = vld [vmem:[%s801 + $0x30] sm:$0xf]
          %v3387 = vld [vmem:[%s801 + $0x34] sm:$0xf]
          %v3388 = vld [vmem:[%s801 + $0x38] sm:$0xf]
          %v3389 = vld [vmem:[%s801 + $0x3c] sm:$0xf]
          %v3406 = vunpack.c.l.b16 %v3374
          %v3407 = vunpack.c.l.b16 %v3375
          %v3408 = vunpack.c.l.b16 %v3376
          %v3409 = vunpack.c.l.b16 %v3377
          %v3410 = vunpack.c.l.b16 %v3378
          %v3411 = vunpack.c.l.b16 %v3379
          %v3412 = vunpack.c.l.b16 %v3380
          %v3413 = vunpack.c.l.b16 %v3381
          %v3414 = vunpack.c.l.b16 %v3382
          %v3415 = vunpack.c.l.b16 %v3383
          %v3416 = vunpack.c.l.b16 %v3384
          %v3417 = vunpack.c.l.b16 %v3385
          %v3418 = vunpack.c.l.b16 %v3386
          %v3419 = vunpack.c.l.b16 %v3387
          %v3420 = vunpack.c.l.b16 %v3388
          %v3421 = vunpack.c.l.b16 %v3389
          %v3422 = vpack.c.b16 %v3407, %v3406
          %v3423 = vpack.c.b16 %v3409, %v3408
          %v3424 = vpack.c.b16 %v3411, %v3410
          %v3425 = vpack.c.b16 %v3413, %v3412
          %v3426 = vpack.c.b16 %v3415, %v3414
          %v3427 = vpack.c.b16 %v3417, %v3416
          %v3428 = vpack.c.b16 %v3419, %v3418
          %v3429 = vpack.c.b16 %v3421, %v3420
          %3438 = vmatprep.subr.bf16.mxu0 0
          %3439 = vmatpush1.bf16.msra.mxu0 %v3422
          %3440 = vmatprep.subr.bf16.mxu0 0
          %3441 = vmatpush1.bf16.msra.mxu0 %v3423
          %3442 = vmatprep.subr.bf16.mxu0 0
          %3443 = vmatpush1.bf16.msra.mxu0 %v3424
          %3444 = vmatprep.subr.bf16.mxu0 0
          %3445 = vmatpush1.bf16.msra.mxu0 %v3425
          %3446 = vmatprep.subr.bf16.mxu0 0
          %3447 = vmatpush1.bf16.msra.mxu0 %v3426
          %3448 = vmatprep.subr.bf16.mxu0 0
          %3449 = vmatpush1.bf16.msra.mxu0 %v3427
          %3450 = vmatprep.subr.bf16.mxu0 0
          %3451 = vmatpush1.bf16.msra.mxu0 %v3428
          %3452 = vmatprep.subr.bf16.mxu0 0
          %3453 = vmatpush1.bf16.msra.mxu0 %v3429
          %3454 = vmatprep.subr.bf16.mxu0 0
          %3455 = vmatpush1.bf16.msra.mxu0 0
          %3456 = vmatprep.subr.bf16.mxu0 0
          %3457 = vmatpush1.bf16.msra.mxu0 0
          %3458 = vmatprep.subr.bf16.mxu0 0
          %3459 = vmatpush1.bf16.msra.mxu0 0
          %3460 = vmatprep.subr.bf16.mxu0 0
          %3461 = vmatpush1.bf16.msra.mxu0 0
          %3462 = vmatprep.subr.bf16.mxu0 0
          %3463 = vmatpush1.bf16.msra.mxu0 0
          %3464 = vmatprep.subr.bf16.mxu0 0
          %3465 = vmatpush1.bf16.msra.mxu0 0
          %3466 = vmatprep.subr.bf16.mxu0 0
          %3467 = vmatpush1.bf16.msra.mxu0 0
          %3468 = vmatprep.subr.bf16.mxu0 0
          %3469 = vmatpush1.bf16.msra.mxu0 0
          %3470 = vmatprep.mubr.bf16.mxu0 0
          %3471 = vmatmul.mubr.bf16.gmra.mrb[0].mxu0 %v3366
          %v3472 = vpop.f32.mrb[0].mxu0
          %v3473 = vadd.f32 0.0, %v3472
          %v3474 = vpop.f32.mrb[0].mxu0
          %v3475 = vpop.f32.mrb[0].mxu0
          %v3476 = vadd.f32 0.0, %v3475
          %v3477 = vpop.f32.mrb[0].mxu0
          %3478 = vmatprep.mubr.bf16.mxu0 0
          %3479 = vmatmul.mubr.bf16.gmra.mrb[0].mxu0 %v3367
          %v3480 = vpop.f32.mrb[0].mxu0
          %v3481 = vadd.f32 0.0, %v3480
          %v3482 = vpop.f32.mrb[0].mxu0
          %v3483 = vpop.f32.mrb[0].mxu0
          %v3484 = vadd.f32 0.0, %v3483
          %v3485 = vpop.f32.mrb[0].mxu0
          %3486 = vmatprep.mubr.bf16.mxu0 0
          %3487 = vmatmul.mubr.bf16.gmra.mrb[0].mxu0 %v3368
          %v3488 = vpop.f32.mrb[0].mxu0
          %v3489 = vadd.f32 0.0, %v3488
          %v3490 = vpop.f32.mrb[0].mxu0
          %v3491 = vpop.f32.mrb[0].mxu0
          %v3492 = vadd.f32 0.0, %v3491
          %v3493 = vpop.f32.mrb[0].mxu0
          %3494 = vmatprep.mubr.bf16.mxu0 0
          %3495 = vmatmul.mubr.bf16.gmra.mrb[0].mxu0 %v3369
          %v3496 = vpop.f32.mrb[0].mxu0
          %v3497 = vadd.f32 0.0, %v3496
          %v3498 = vpop.f32.mrb[0].mxu0
          %v3499 = vpop.f32.mrb[0].mxu0
          %v3500 = vadd.f32 0.0, %v3499
          %v3501 = vpop.f32.mrb[0].mxu0
          %3502 = vmatprep.mubr.bf16.mxu0 0
          %3503 = vmatmul.mubr.bf16.gmra.mrb[0].mxu0 %v3370
          %v3504 = vpop.f32.mrb[0].mxu0
          %v3505 = vadd.f32 0.0, %v3504
          %v3506 = vpop.f32.mrb[0].mxu0
          %v3507 = vpop.f32.mrb[0].mxu0
          %v3508 = vadd.f32 0.0, %v3507
          %v3509 = vpop.f32.mrb[0].mxu0
          %3510 = vmatprep.mubr.bf16.mxu0 0
          %3511 = vmatmul.mubr.bf16.gmra.mrb[0].mxu0 %v3371
          %v3512 = vpop.f32.mrb[0].mxu0
          %v3513 = vadd.f32 0.0, %v3512
          %v3514 = vpop.f32.mrb[0].mxu0
          %v3515 = vpop.f32.mrb[0].mxu0
          %v3516 = vadd.f32 0.0, %v3515
          %v3517 = vpop.f32.mrb[0].mxu0
          %3518 = vmatprep.mubr.bf16.mxu0 0
          %3519 = vmatmul.mubr.bf16.gmra.mrb[0].mxu0 %v3372
          %v3520 = vpop.f32.mrb[0].mxu0
          %v3521 = vadd.f32 0.0, %v3520
          %v3522 = vpop.f32.mrb[0].mxu0
          %v3523 = vpop.f32.mrb[0].mxu0
          %v3524 = vadd.f32 0.0, %v3523
          %v3525 = vpop.f32.mrb[0].mxu0
          %3526 = vmatprep.mubr.bf16.mxu0 0
          %3527 = vmatmul.mubr.bf16.gmra.mrb[0].mxu0 %v3373
          %v3528 = vpop.f32.mrb[0].mxu0
          %v3529 = vadd.f32 0.0, %v3528
          %v3530 = vpop.f32.mrb[0].mxu0
          %v3531 = vpop.f32.mrb[0].mxu0
          %v3532 = vadd.f32 0.0, %v3531
          %v3533 = vpop.f32.mrb[0].mxu0
          %3534 = vdwg.mxu0
          %v3535 = vadd.f32 %v3350, %v3473
          %v3536 = vadd.f32 %v3351, %v3476
          %v3537 = vadd.f32 %v3352, %v3481
          %v3538 = vadd.f32 %v3353, %v3484
          %v3539 = vadd.f32 %v3354, %v3489
          %v3540 = vadd.f32 %v3355, %v3492
          %v3541 = vadd.f32 %v3356, %v3497
          %v3542 = vadd.f32 %v3357, %v3500
          %v3543 = vadd.f32 %v3358, %v3505
          %v3544 = vadd.f32 %v3359, %v3508
          %v3545 = vadd.f32 %v3360, %v3513
          %v3546 = vadd.f32 %v3361, %v3516
          %v3547 = vadd.f32 %v3362, %v3521
          %v3548 = vadd.f32 %v3363, %v3524
          %v3549 = vadd.f32 %v3364, %v3529
          %v3550 = vadd.f32 %v3365, %v3532
          %v3551 = vld [vmem:[%s804] sm:$0x1]
          %v3553 = vlaneseq
          %v3554 = vshrl.u32 %v3553, 7
          %v3555 = vsub.s32 0, %v3554
          %v3556 = vrot.slane %v3551, %v3555
          %v3558 = vadd.f32 %v3535, %v3556
          %v3559 = vadd.f32 %v3536, %v3556
          %v3560 = vadd.f32 %v3537, %v3556
          %v3561 = vadd.f32 %v3538, %v3556
          %v3562 = vadd.f32 %v3539, %v3556
          %v3563 = vadd.f32 %v3540, %v3556
          %v3564 = vadd.f32 %v3541, %v3556
          %v3565 = vadd.f32 %v3542, %v3556
          %v3566 = vadd.f32 %v3543, %v3556
          %v3567 = vadd.f32 %v3544, %v3556
          %v3568 = vadd.f32 %v3545, %v3556
          %v3569 = vadd.f32 %v3546, %v3556
          %v3570 = vadd.f32 %v3547, %v3556
          %v3571 = vadd.f32 %v3548, %v3556
          %v3572 = vadd.f32 %v3549, %v3556
          %v3573 = vadd.f32 %v3550, %v3556
          %3574 = vst [vmem:[#allocation2] sm:$0xff] %v3558
          %3575 = vst [vmem:[#allocation2 + $0x8] sm:$0xff] %v3559
          %3576 = vst [vmem:[#allocation2 + $0x10] sm:$0xff] %v3560
          %3577 = vst [vmem:[#allocation2 + $0x18] sm:$0xff] %v3561
          %3578 = vst [vmem:[#allocation2 + $0x20] sm:$0xff] %v3562
          %3579 = vst [vmem:[#allocation2 + $0x28] sm:$0xff] %v3563
          %3580 = vst [vmem:[#allocation2 + $0x30] sm:$0xff] %v3564
          %3581 = vst [vmem:[#allocation2 + $0x38] sm:$0xff] %v3565
          %3582 = vst [vmem:[#allocation2 + $0x40] sm:$0xff] %v3566
          %3583 = vst [vmem:[#allocation2 + $0x48] sm:$0xff] %v3567
          %3584 = vst [vmem:[#allocation2 + $0x50] sm:$0xff] %v3568
          %3585 = vst [vmem:[#allocation2 + $0x58] sm:$0xff] %v3569
          %3586 = vst [vmem:[#allocation2 + $0x60] sm:$0xff] %v3570
          %3587 = vst [vmem:[#allocation2 + $0x68] sm:$0xff] %v3571
          %3588 = vst [vmem:[#allocation2 + $0x70] sm:$0xff] %v3572
          %3589 = vst [vmem:[#allocation2 + $0x78] sm:$0xff] %v3573
          %3590 = vst [vmem:[%s749] sm:$0xff] %v3558
          %3591 = vst [vmem:[%s749 + $0x8] sm:$0xff] %v3559
          %3592 = vst [vmem:[%s749 + $0x10] sm:$0xff] %v3560
          %3593 = vst [vmem:[%s749 + $0x18] sm:$0xff] %v3561
          %3594 = vst [vmem:[%s749 + $0x20] sm:$0xff] %v3562
          %3595 = vst [vmem:[%s749 + $0x28] sm:$0xff] %v3563
          %3596 = vst [vmem:[%s749 + $0x30] sm:$0xff] %v3564
          %3597 = vst [vmem:[%s749 + $0x38] sm:$0xff] %v3565
          %3598 = vst [vmem:[%s749 + $0x40] sm:$0xff] %v3566
          %3599 = vst [vmem:[%s749 + $0x48] sm:$0xff] %v3567
          %3600 = vst [vmem:[%s749 + $0x50] sm:$0xff] %v3568
          %3601 = vst [vmem:[%s749 + $0x58] sm:$0xff] %v3569
          %3602 = vst [vmem:[%s749 + $0x60] sm:$0xff] %v3570
          %3603 = vst [vmem:[%s749 + $0x68] sm:$0xff] %v3571
          %3604 = vst [vmem:[%s749 + $0x70] sm:$0xff] %v3572
          %3605 = vst [vmem:[%s749 + $0x78] sm:$0xff] %v3573
          %v3606 = vld [vmem:[%s4] sm:$0x3]
          %3607 = vmatprep.subr.mxu0 0.0
          %3608 = vmatpush1.msra.mxu0 %v3558
          %3609 = vmatprep.subr.mxu0 0.0
          %3610 = vmatpush1.msra.mxu0 %v3559
          %3611 = vmatprep.subr.mxu0 0.0
          %3612 = vmatpush1.msra.mxu0 %v3560
          %3613 = vmatprep.subr.mxu0 0.0
          %3614 = vmatpush1.msra.mxu0 %v3561
          %3615 = vmatprep.subr.mxu0 0.0
          %3616 = vmatpush1.msra.mxu0 %v3562
          %3617 = vmatprep.subr.mxu0 0.0
          %3618 = vmatpush1.msra.mxu0 %v3563
          %3619 = vmatprep.subr.mxu0 0.0
          %3620 = vmatpush1.msra.mxu0 %v3564
          %3621 = vmatprep.subr.mxu0 0.0
          %3622 = vmatpush1.msra.mxu0 %v3565
          %3623 = vmatprep.subr.mxu0 0.0
          %3624 = vmatpush1.msra.mxu0 %v3566
          %3625 = vmatprep.subr.mxu0 0.0
          %3626 = vmatpush1.msra.mxu0 %v3567
          %3627 = vmatprep.subr.mxu0 0.0
          %3628 = vmatpush1.msra.mxu0 %v3568
          %3629 = vmatprep.subr.mxu0 0.0
          %3630 = vmatpush1.msra.mxu0 %v3569
          %3631 = vmatprep.subr.mxu0 0.0
          %3632 = vmatpush1.msra.mxu0 %v3570
          %3633 = vmatprep.subr.mxu0 0.0
          %3634 = vmatpush1.msra.mxu0 %v3571
          %3635 = vmatprep.subr.mxu0 0.0
          %3636 = vmatpush1.msra.mxu0 %v3572
          %3637 = vmatprep.subr.mxu0 0.0
          %3638 = vmatpush1.msra.mxu0 %v3573
          %3639 = vmatprep.subr.mxu0 0.0
          %3640 = vmatpush1.msra.mxu0 0.0
          %3641 = vmatprep.subr.mxu0 0.0
          %3642 = vmatpush1.msra.mxu0 0.0
          %3643 = vmatprep.subr.mxu0 0.0
          %3644 = vmatpush1.msra.mxu0 0.0
          %3645 = vmatprep.subr.mxu0 0.0
          %3646 = vmatpush1.msra.mxu0 0.0
          %3647 = vmatprep.subr.mxu0 0.0
          %3648 = vmatpush1.msra.mxu0 0.0
          %3649 = vmatprep.subr.mxu0 0.0
          %3650 = vmatpush1.msra.mxu0 0.0
          %3651 = vmatprep.subr.mxu0 0.0
          %3652 = vmatpush1.msra.mxu0 0.0
          %3653 = vmatprep.subr.mxu0 0.0
          %3654 = vmatpush1.msra.mxu0 0.0
          %3655 = vmatprep.subr.mxu0 0.0
          %3656 = vmatpush1.msra.mxu0 0.0
          %3657 = vmatprep.subr.mxu0 0.0
          %3658 = vmatpush1.msra.mxu0 0.0
          %3659 = vmatprep.subr.mxu0 0.0
          %3660 = vmatpush1.msra.mxu0 0.0
          %3661 = vmatprep.subr.mxu0 0.0
          %3662 = vmatpush1.msra.mxu0 0.0
          %3663 = vmatprep.subr.mxu0 0.0
          %3664 = vmatpush1.msra.mxu0 0.0
          %3665 = vmatprep.subr.mxu0 0.0
          %3666 = vmatpush1.msra.mxu0 0.0
          %3667 = vmatprep.subr.mxu0 0.0
          %3668 = vmatpush1.msra.mxu0 0.0
          %3669 = vmatprep.subr.mxu0 0.0
          %3670 = vmatpush1.msra.mxu0 0.0
          %3671 = vmatprep.mubr.f32.mxu0 0.0
          %3672 = vmatmul.mubr.f32.gmra.mrb[0].mxu0 %v3606
          %v3673 = vpop.f32.mrb[0].mxu0
          %v3674 = vadd.f32 0.0, %v3673
          %v3675 = vpop.f32.mrb[0].mxu0
          %3676 = vdwg.mxu0
          %3677 = vst [vmem:[%s756] sm:$0x3] %v3674
        $region104: #{tpu_custom_call.1} parent=91 // pred_fallthru
          _
        %s3678 = sand.u32 %s495, 1
        %s3679 = scalar_lea.sflag [#allocation8], %s3678
        %s3680 = sand.u32 %s495, 1
        %s3681 = smul.addr %s3680, 128
        %s3682 = scalar_lea.vmem [#allocation7], %s3681
        %s3683 = sand.u32 %s521, 1
        %s3684 = scalar_lea.sflag [#allocation10], %s3683
        %s3685 = sand.u32 %s521, 1
        %s3686 = smul.addr %s3685, 2
        %s3687 = scalar_lea.vmem [#allocation9], %s3686
        // Predicated region
        $region105: #{tpu_custom_call.1} parent=91 // pred_check
          %p3688 = pneg %p505
        $region106: #{tpu_custom_call.1} parent=91 // pred_check_branch
          %3690 = sbr.rel (%p3688) target = $region108
        $region107: #{tpu_custom_call.1} parent=91 // pred_region
          %s3692 = ssub.s32 2048, 2048
          %3693 = vsyncadd %s3679, %s3692
          %s3694 = smul.addr %s41, 128
          %s3695 = scalar_lea.hbm %s18, %s3694
          %s3696 = sshll.u32 %s3682, 4
          %s3697 = int_to_ptr.vmem [resolvable:$true] %s3696
          %3702 = dma.vmem_to_hbm [thread:$0]  %s3697, 2048, %s3695, %s3679, 128, 256, 8
        $region108: #{tpu_custom_call.1} parent=91 // pred_fallthru
          _
        // Predicated region
        $region109: #{tpu_custom_call.1} parent=91 // pred_check
          %p3703 = pneg %p531
        $region110: #{tpu_custom_call.1} parent=91 // pred_check_branch
          %3705 = sbr.rel (%p3703) target = $region112
        $region111: #{tpu_custom_call.1} parent=91 // pred_region
          %s3707 = ssub.s32 32, 32
          %3708 = vsyncadd %s3684, %s3707
          %s3709 = smul.addr %s41, 32
          %s3710 = scalar_lea.hbm %s19, %s3709
          %s3712 = sshll.u32 %s3687, 4
          %s3713 = int_to_ptr.vmem [resolvable:$true] %s3712
          %3715 = dma.vmem_to_hbm [thread:$0]  %s3713, 32, %s3710, %s3684
        $region112: #{tpu_custom_call.1} parent=91 // pred_fallthru
          _
      $region92: #{tpu_custom_call.1} parent=5 // pred_fallthru
        _
      %p3716 = scmp.le.s32.totalorder 2, %s32
      // Predicated region
      $region113: #{tpu_custom_call.1} parent=5 // pred_check
        %p3717 = pneg %p3716
      $region114: #{tpu_custom_call.1} parent=5 // pred_check_branch
        %3719 = sbr.rel (%p3717) target = $region116
      $region115: #{tpu_custom_call.1} parent=5 // pred_region
        %s3720 = ssub.s32 %s32, 2
        // Predicated region
        $region117: #{tpu_custom_call.1} parent=115 // pred_check
          %p3721 = pneg %p511
        $region118: #{tpu_custom_call.1} parent=115 // pred_check_branch
          %3723 = sbr.rel (%p3721) target = $region120
        $region119: #{tpu_custom_call.1} parent=115 // pred_region
          %s3724 = sand.u32 %s496, 1
          %s3725 = scalar_lea.sflag [#allocation8], %s3724
          %s3726 = sand.u32 %s496, 1
          %s3727 = smul.addr %s3726, 128
          %s3728 = scalar_lea.vmem [#allocation7], %s3727
          %3729 = dma.done %s3725, 2048
        $region120: #{tpu_custom_call.1} parent=115 // pred_fallthru
          _
        // Predicated region
        $region121: #{tpu_custom_call.1} parent=115 // pred_check
          %p3730 = pneg %p537
        $region122: #{tpu_custom_call.1} parent=115 // pred_check_branch
          %3732 = sbr.rel (%p3730) target = $region124
        $region123: #{tpu_custom_call.1} parent=115 // pred_region
          %s3733 = sand.u32 %s522, 1
          %s3734 = scalar_lea.sflag [#allocation10], %s3733
          %s3735 = sand.u32 %s522, 1
          %s3736 = smul.addr %s3735, 2
          %s3737 = scalar_lea.vmem [#allocation9], %s3736
          %3738 = dma.done %s3734, 32
        $region124: #{tpu_custom_call.1} parent=115 // pred_fallthru
          _
      $region116: #{tpu_custom_call.1} parent=5 // pred_fallthru
        _
    $region6: #{tpu_custom_call.1} parent=1 // loop_footer
      %s36 = sadd.s32 1, %s32
    $region7: #{tpu_custom_call.1} parent=1 // loop_footer_branch
      %31 = sbr.rel target = $region3
    $region8: #{tpu_custom_call.1} parent=1 // loop_exit
      _
    %3739 = vsyncpa [#allocation8], 1
    %s3740 = scalar_lea.sflag [#allocation8], 1
    %3741 = vsyncpa %s3740, 1
    %3742 = vsyncpa [#allocation10], 1
    %s3743 = scalar_lea.sflag [#allocation10], 1
    %3744 = vsyncpa %s3743, 1

</llo_original>
